<compile_context>
chip_gen: v6e
topology: v6e:2x2x1
jax: 0.10.0
libtpu: 0.0.40
codegen_flags: <defaults>
</compile_context>

<pallas_src>
import functools
import math

import jax
import jax.numpy as jnp
import numpy as np
from jax.experimental import pallas as pl
from jax.experimental.pallas import tpu as pltpu


# ---------------------------------------------------------------------------
# Kernel
# ---------------------------------------------------------------------------
def _ln4dcf_kernel(x_ref, g_ref, b_ref, seg_ref, o_ref, *, eps, inv_n):
    # x_ref block: (1, C, L) with L = tile_t * F_pad, lane-dense.
    x = x_ref[0].astype(jnp.float32)            # (C, L)
    seg = seg_ref[...]                          # (L, tile_t) 0/1 lane->time map
    hi = jax.lax.Precision.HIGHEST              # f32 operands must NOT be
                                                # rounded to bf16 on the MXU.

    # ---- pass 1: per-t mean ------------------------------------------------
    s1 = jnp.sum(x, axis=0, keepdims=True)                       # (1, L)
    sum_t = jnp.dot(s1, seg, preferred_element_type=jnp.float32,
                    precision=hi)                                # (1, tile_t)
    mu_t = sum_t * inv_n
    # Broadcast back to lanes with a transposed contraction (mu_t @ seg^T);
    # no second indicator matrix needed.
    mu_l = jax.lax.dot_general(mu_t, seg, (((1,), (1,)), ((), ())),
                               precision=hi,
                               preferred_element_type=jnp.float32)  # (1, L)

    # ---- pass 2: shifted variance (d is reused for the normalize) ----------
    d = x - mu_l                                                 # (C, L)
    s2 = jnp.sum(d * d, axis=0, keepdims=True)                   # (1, L)
    var_t = jnp.dot(s2, seg, preferred_element_type=jnp.float32,
                    precision=hi) * inv_n                        # (1, tile_t)
    std_t = jnp.sqrt(var_t + eps)
    # Divide only over tile_t scalars; matches PyTorch's (std + eps) exactly.
    inv_t = 1.0 / (std_t + eps)
    inv_l = jax.lax.dot_general(inv_t, seg, (((1,), (1,)), ((), ())),
                                precision=hi,
                                preferred_element_type=jnp.float32)  # (1, L)

    # ---- normalize + affine -------------------------------------------------
    g = g_ref[...].astype(jnp.float32)                           # (C, L)
    b = b_ref[...].astype(jnp.float32)                           # (C, L)
    o_ref[0] = (d * inv_l * g + b).astype(o_ref.dtype)


# ---------------------------------------------------------------------------
# VMEM-aware tiling
# ---------------------------------------------------------------------------
_TARGET_X_BLOCK = 8 << 20      # aim for ~4-8 MiB x blocks
_HEADROOM_BYTES = 6 << 20      # compiler scratch / semaphores / slack


def _vmem_budget():
    """(usable_budget_bytes, vmem_limit_bytes) derived from the chip."""
    try:
        cap = int(pltpu.get_tpu_info().vmem_capacity_bytes)
    except Exception:
        cap = 64 << 20                       # conservative: v7x per-core VMEM
    # ~48 MiB on v7x (64 MiB physical), 64 MiB on v5e/v6e (128 MiB physical).
    vmem_limit = min((cap * 3) // 4, 64 << 20)
    return vmem_limit - _HEADROOM_BYTES, vmem_limit


def _block_footprint_bytes(C, tile_t, F_pad, x_isz, p_isz):
    """Everything that lives in VMEM for one grid step (double-buffered)."""
    L = tile_t * F_pad
    xio = 2 * 2 * C * L * x_isz          # x in + out blocks, double-buffered
    params = 2 * 2 * C * L * p_isz       # gamma + beta tiles, double-buffered
    seg = 2 * L * tile_t * 4             # indicator matrix, double-buffered
    staging = 3 * C * L * 4              # in-kernel f32 temporaries (x, d, y)
    return xio + params + seg + staging


def _padded_f(tile_t, F):
    """Smallest F_pad >= F such that tile_t * F_pad is a multiple of 128."""
    m = 128 // math.gcd(tile_t, 128)
    return ((F + m - 1) // m) * m


def _choose_tiling(T, C, F, x_isz, p_isz, budget):
    """Pick (tile_t, F_pad): lane-dense, VMEM-budgeted, minimal pad waste."""
    divisors = [d for d in range(1, T + 1) if T % d == 0]
    cands = []
    for tt in divisors:
        f_pad = _padded_f(tt, F)
        fp = _block_footprint_bytes(C, tt, f_pad, x_isz, p_isz)
        xblk = C * tt * f_pad * x_isz
        cands.append((tt, f_pad, fp, xblk))
    fitting = [c for c in cands if c[2] <= budget]
    if not fitting:
        # Nothing fits (huge C*F): smallest footprint; correct, may spill.
        best = min(cands, key=lambda c: c[2])
        return best[0], best[1]
    # Prefer minimal HBM padding waste, then the largest block <= target.
    min_pad = min(c[1] for c in fitting)
    best = [c for c in fitting if c[1] == min_pad]
    under = [c for c in best if c[3] <= _TARGET_X_BLOCK]
    choice = max(under, key=lambda c: c[3]) if under else min(best, key=lambda c: c[3])
    return choice[0], choice[1]


# ---------------------------------------------------------------------------
# Wrapper
# ---------------------------------------------------------------------------
def layer_norm_4d_cf(x_nchw, gamma, beta, eps=1e-5, tile_t=None):
    """x_nchw: [B, C, T, F]; gamma/beta: [1, C, 1, F]. Returns [B, C, T, F]."""
    B, C, T, F = x_nchw.shape
    x_isz = jnp.dtype(x_nchw.dtype).itemsize
    # Params in the input dtype for 16-bit models (halves their VMEM/HBM cost).
    param_dtype = x_nchw.dtype if x_isz < 4 else jnp.float32
    p_isz = jnp.dtype(param_dtype).itemsize

    budget, vmem_limit = _vmem_budget()
    if tile_t is None:
        tile_t, F_pad = _choose_tiling(T, C, F, x_isz, p_isz, budget)
    else:
        assert T % tile_t == 0, "tile_t must divide T"
        F_pad = _padded_f(tile_t, F)

    L = tile_t * F_pad
    t_blocks = T // tile_t

    # Free reshape when F_pad == F; otherwise one zero-pad pass to stay
    # lane-dense (pad lanes are excluded from the stats and sliced off below).
    if F_pad != F:
        x_in = jnp.pad(x_nchw, ((0, 0), (0, 0), (0, 0), (0, F_pad - F)))
    else:
        x_in = x_nchw
    x3 = x_in.reshape(B, C, T * F_pad)

    # Affine params, tiled once across the tile_t time steps of one block.
    g2 = gamma.reshape(C, F).astype(param_dtype)
    b2 = beta.reshape(C, F).astype(param_dtype)
    if F_pad != F:
        g2 = jnp.pad(g2, ((0, 0), (0, F_pad - F)))
        b2 = jnp.pad(b2, ((0, 0), (0, F_pad - F)))
    g_tiled = jnp.tile(g2, (1, tile_t))          # (C, L)
    b_tiled = jnp.tile(b2, (1, tile_t))          # (C, L)

    # 0/1 indicator: lane l belongs to local time step l // F_pad; pad lanes
    # (l % F_pad >= F) are excluded so the stats always use exactly C*F values.
    lane = np.arange(L)
    seg_np = (((lane // F_pad)[:, None] == np.arange(tile_t)[None, :])
              & ((lane % F_pad)[:, None] < F)).astype(np.float32)
    seg = jnp.asarray(seg_np)                    # (L, tile_t)

    kernel = functools.partial(_ln4dcf_kernel, eps=float(eps),
                               inv_n=1.0 / float(C * F))

    out3 = pl.pallas_call(
        kernel,
        out_shape=jax.ShapeDtypeStruct((B, C, T * F_pad), x_nchw.dtype),
        grid_spec=pltpu.PrefetchScalarGridSpec(
            num_scalar_prefetch=0,
            grid=(B, t_blocks),
            in_specs=[
                pl.BlockSpec((1, C, L), lambda b, t: (b, 0, t)),
                pl.BlockSpec((C, L), lambda b, t: (0, 0)),
                pl.BlockSpec((C, L), lambda b, t: (0, 0)),
                pl.BlockSpec((L, tile_t), lambda b, t: (0, 0)),
            ],
            out_specs=pl.BlockSpec((1, C, L), lambda b, t: (b, 0, t)),
        ),
        compiler_params=pltpu.CompilerParams(
            dimension_semantics=("parallel", "parallel"),
            vmem_limit_bytes=int(vmem_limit),
        ),
    )(x3, g_tiled, b_tiled, seg)

    out = out3.reshape(B, C, T, F_pad)
    if F_pad != F:
        out = out[..., :F]
    return out


# ---------------------------------------------------------------------------
# Reference + test
# ---------------------------------------------------------------------------
def _reference(x, gamma, beta, eps=1e-5):
    x = x.astype(jnp.float32)
    mu = jnp.mean(x, axis=(1, 3), keepdims=True)
    var = jnp.mean((x - mu) ** 2, axis=(1, 3), keepdims=True)
    std = jnp.sqrt(var + eps)
    return (x - mu) / (std + eps) * gamma.astype(jnp.float32) + beta.astype(jnp.float32)


if __name__ == "__main__":
    eps = 1e-5
    key = jax.random.PRNGKey(0)
    kx, kg, kb, kx2 = jax.random.split(key, 4)

    # Small shapes consistent with the module: [B, C, T, F].
    B, C, T, F = 2, 4, 16, 16
    x = jax.random.normal(kx, (B, C, T, F), dtype=jnp.float32)
    # Module init is ones/zeros; random params exercise the affine path.
    gamma = 1.0 + 0.1 * jax.random.normal(kg, (1, C, 1, F), dtype=jnp.float32)
    beta = 0.1 * jax.random.normal(kb, (1, C, 1, F), dtype=jnp.float32)

    y_ref = _reference(x, gamma, beta, eps=eps)

    # Auto tile size.
    y = jax.block_until_ready(layer_norm_4d_cf(x, gamma, beta, eps=eps))
    np.testing.assert_allclose(np.asarray(y), np.asarray(y_ref), rtol=2e-5, atol=2e-5)

    # Forced smaller tile to exercise the (B, T // tile_t) multi-block grid path.
    y2 = jax.block_until_ready(layer_norm_4d_cf(x, gamma, beta, eps=eps, tile_t=8))
    np.testing.assert_allclose(np.asarray(y2), np.asarray(y_ref), rtol=2e-5, atol=2e-5)

    # Odd / non-power-of-two F (like n_fft/2+1) to exercise the F-padding path.
    Fo = 10
    xo = jax.random.normal(kx2, (B, C, T, Fo), dtype=jnp.float32)
    go = gamma[..., :Fo]
    bo = beta[..., :Fo]
    yo_ref = _reference(xo, go, bo, eps=eps)
    yo = jax.block_until_ready(layer_norm_4d_cf(xo, go, bo, eps=eps))
    np.testing.assert_allclose(np.asarray(yo), np.asarray(yo_ref), rtol=2e-5, atol=2e-5)

    print("KERNEL_OK")
</pallas_src>

<mosaic_0001>
module attributes {stable_mosaic.version = 11 : i64} {
  func.func @_ln4dcf_kernel(%arg0: i32, %arg1: i32, %arg2: memref<1x4x256xf32, #tpu.memory_space<vmem>>, %arg3: memref<4x256xf32, #tpu.memory_space<vmem>>, %arg4: memref<4x256xf32, #tpu.memory_space<vmem>>, %arg5: memref<256x16xf32, #tpu.memory_space<vmem>>, %arg6: memref<1x4x256xf32, #tpu.memory_space<vmem>>) attributes {dimension_semantics = [#tpu.dimension_semantics<parallel>, #tpu.dimension_semantics<parallel>], iteration_bounds = array<i64: 2, 1>, scalar_prefetch = 0 : i64, scratch_operands = 0 : i64, tpu.core_type = #tpu.core_type<tc>, window_params = [{transform_indices = @transform_0, window_bounds = array<i64: 1, 4, 256>}, {pipeline_mode = #tpu.pipeline_mode<synchronous>, transform_indices = @transform_1, window_bounds = array<i64: 4, 256>}, {pipeline_mode = #tpu.pipeline_mode<synchronous>, transform_indices = @transform_2, window_bounds = array<i64: 4, 256>}, {pipeline_mode = #tpu.pipeline_mode<synchronous>, transform_indices = @transform_3, window_bounds = array<i64: 256, 16>}, {transform_indices = @transform_4, window_bounds = array<i64: 1, 4, 256>}]} {
    %c0 = arith.constant 0 : index
    %c0_0 = arith.constant 0 : index
    %c0_1 = arith.constant 0 : index
    %0 = vector.load %arg2[%c0, %c0_0, %c0_1] : memref<1x4x256xf32, #tpu.memory_space<vmem>>, vector<1x4x256xf32>
    %1 = vector.shape_cast %0 : vector<1x4x256xf32> to vector<4x256xf32>
    %c0_2 = arith.constant 0 : index
    %c0_3 = arith.constant 0 : index
    %2 = vector.load %arg5[%c0_2, %c0_3] : memref<256x16xf32, #tpu.memory_space<vmem>>, vector<256x16xf32>
    %cst = arith.constant dense<0.000000e+00> : vector<256xf32>
    %3 = vector.multi_reduction <add>, %1, %cst [0] : vector<4x256xf32> to vector<256xf32>
    %4 = vector.shape_cast %3 : vector<256xf32> to vector<1x256xf32>
    %cst_4 = arith.constant dense<0.000000e+00> : vector<1x16xf32>
    %5 = tpu.matmul %4, %2, %cst_4 {dimension_numbers = #tpu.dot_dimension_numbers<[1], [0], [0], [1], [0, 0, 1, 1], [], []>, precision = #tpu.contract_precision<fp32>} : vector<1x256xf32>, vector<256x16xf32>, vector<1x16xf32> -> vector<1x16xf32>
    %cst_5 = arith.constant 1.562500e-02 : f32
    %6 = vector.broadcast %cst_5 : f32 to vector<1x16xf32>
    %7 = arith.mulf %5, %6 : vector<1x16xf32>
    %cst_6 = arith.constant dense<0.000000e+00> : vector<1x256xf32>
    %8 = tpu.matmul %7, %2, %cst_6 {dimension_numbers = #tpu.dot_dimension_numbers<[1], [1], [0], [0], [0, 0, 1, 0], [], []>, precision = #tpu.contract_precision<fp32>} : vector<1x16xf32>, vector<256x16xf32>, vector<1x256xf32> -> vector<1x256xf32>
    %9 = vector.broadcast %8 : vector<1x256xf32> to vector<4x256xf32>
    %10 = arith.subf %1, %9 : vector<4x256xf32>
    %11 = arith.mulf %10, %10 : vector<4x256xf32>
    %cst_7 = arith.constant dense<0.000000e+00> : vector<256xf32>
    %12 = vector.multi_reduction <add>, %11, %cst_7 [0] : vector<4x256xf32> to vector<256xf32>
    %13 = vector.shape_cast %12 : vector<256xf32> to vector<1x256xf32>
    %cst_8 = arith.constant dense<0.000000e+00> : vector<1x16xf32>
    %14 = tpu.matmul %13, %2, %cst_8 {dimension_numbers = #tpu.dot_dimension_numbers<[1], [0], [0], [1], [0, 0, 1, 1], [], []>, precision = #tpu.contract_precision<fp32>} : vector<1x256xf32>, vector<256x16xf32>, vector<1x16xf32> -> vector<1x16xf32>
    %cst_9 = arith.constant 1.562500e-02 : f32
    %15 = vector.broadcast %cst_9 : f32 to vector<1x16xf32>
    %16 = arith.mulf %14, %15 : vector<1x16xf32>
    %cst_10 = arith.constant 9.99999974E-6 : f32
    %17 = vector.broadcast %cst_10 : f32 to vector<1x16xf32>
    %18 = arith.addf %16, %17 : vector<1x16xf32>
    %19 = math.sqrt %18 : vector<1x16xf32>
    %cst_11 = arith.constant 9.99999974E-6 : f32
    %20 = vector.broadcast %cst_11 : f32 to vector<1x16xf32>
    %21 = arith.addf %19, %20 : vector<1x16xf32>
    %cst_12 = arith.constant 1.000000e+00 : f32
    %22 = vector.broadcast %cst_12 : f32 to vector<1x16xf32>
    %23 = arith.divf %22, %21 : vector<1x16xf32>
    %cst_13 = arith.constant dense<0.000000e+00> : vector<1x256xf32>
    %24 = tpu.matmul %23, %2, %cst_13 {dimension_numbers = #tpu.dot_dimension_numbers<[1], [1], [0], [0], [0, 0, 1, 0], [], []>, precision = #tpu.contract_precision<fp32>} : vector<1x16xf32>, vector<256x16xf32>, vector<1x256xf32> -> vector<1x256xf32>
    %c0_14 = arith.constant 0 : index
    %c0_15 = arith.constant 0 : index
    %25 = vector.load %arg3[%c0_14, %c0_15] : memref<4x256xf32, #tpu.memory_space<vmem>>, vector<4x256xf32>
    %c0_16 = arith.constant 0 : index
    %c0_17 = arith.constant 0 : index
    %26 = vector.load %arg4[%c0_16, %c0_17] : memref<4x256xf32, #tpu.memory_space<vmem>>, vector<4x256xf32>
    %27 = vector.broadcast %24 : vector<1x256xf32> to vector<4x256xf32>
    %28 = arith.mulf %10, %27 : vector<4x256xf32>
    %29 = arith.mulf %28, %25 : vector<4x256xf32>
    %30 = arith.addf %29, %26 : vector<4x256xf32>
    %c0_18 = arith.constant 0 : index
    %c0_19 = arith.constant 0 : index
    %c0_20 = arith.constant 0 : index
    %31 = vector.load %arg6[%c0_18, %c0_19, %c0_20] : memref<1x4x256xf32, #tpu.memory_space<vmem>>, vector<1x4x256xf32>
    %32 = vector.shape_cast %31 : vector<1x4x256xf32> to vector<4x256xf32>
    %33 = vector.shape_cast %30 : vector<4x256xf32> to vector<1x4x256xf32>
    tpu.vector_store %arg6[%c0_18, %c0_19, %c0_20], %33 {strides = array<i32>} : memref<1x4x256xf32, #tpu.memory_space<vmem>>, vector<1x4x256xf32>,
    return
  }
  func.func @transform_0(%arg0: i32, %arg1: i32) -> (i32, i32, i32) {
    %c0_i32 = arith.constant 0 : i32
    %c0_i32_0 = arith.constant 0 : i32
    return %arg0, %c0_i32, %arg1 : i32, i32, i32
  }
  func.func @transform_1(%arg0: i32, %arg1: i32) -> (i32, i32) {
    %c0_i32 = arith.constant 0 : i32
    %c0_i32_0 = arith.constant 0 : i32
    %c0_i32_1 = arith.constant 0 : i32
    return %c0_i32, %c0_i32_0 : i32, i32
  }
  func.func @transform_2(%arg0: i32, %arg1: i32) -> (i32, i32) {
    %c0_i32 = arith.constant 0 : i32
    %c0_i32_0 = arith.constant 0 : i32
    %c0_i32_1 = arith.constant 0 : i32
    return %c0_i32, %c0_i32_0 : i32, i32
  }
  func.func @transform_3(%arg0: i32, %arg1: i32) -> (i32, i32) {
    %c0_i32 = arith.constant 0 : i32
    %c0_i32_0 = arith.constant 0 : i32
    %c0_i32_1 = arith.constant 0 : i32
    return %c0_i32, %c0_i32_0 : i32, i32
  }
  func.func @transform_4(%arg0: i32, %arg1: i32) -> (i32, i32, i32) {
    %c0_i32 = arith.constant 0 : i32
    %c0_i32_0 = arith.constant 0 : i32
    return %arg0, %c0_i32, %arg1 : i32, i32, i32
  }
}

</mosaic_0001>

<llo_original>
// kernel: tpu_custom_call.1
$region0: #{tpu_custom_call.1}
  #allocation0 [shape = 'u32[]', space=smem, size = 0x4, offset = 0x4, fixed_abs, tag = 'smem constant byte address 0x4 - core index']
  #allocation1 [shape = 'u32[144,128]{1,0:T(1,128)}', space=vmem, size = 0x12000, scoped, tag = 'internal scratch']
  %s0 = inlined_call_operand.vmem [shape: f32[2,4,256], index: 0, kind: input, shape index: {}]
  %s1 = inlined_call_operand.vmem [shape: f32[4,256], index: 1, kind: input, shape index: {}]
  %s2 = inlined_call_operand.vmem [shape: f32[4,256], index: 2, kind: input, shape index: {}]
  %s3 = inlined_call_operand.vmem [shape: f32[256,16], index: 3, kind: input, shape index: {}]
  %s4 = inlined_call_operand.hbm [shape: f32[2,4,256], index: 4, kind: output, shape index: {}]
  %s5 = sld [smem:[#allocation0]]
  $region49: #{tpu_custom_call.1} parent=0
    _
  %s7 = ssub.s32 1, %s5
  %s8 = scalar_select 0, %s7, %s5
  $region1: #{tpu_custom_call.1} parent=0
    #allocation2 [shape = 'u8[8192]{0}', space=vmem, size = 0x2000, scoped, tag = 'output window, operand 0']
    #allocation3 [shape = 's32[2]{0}', space=sflag, size = 0x8, scoped, tag = 'scoped memory for tpu_custom_call.1']
    %9 = vsyncpa [#allocation3], 0
    %s10 = scalar_lea.sflag [#allocation3], 1
    %11 = vsyncpa %s10, 0
    loop: start=0, step=1, limit=4
    $region2: #{tpu_custom_call.1} parent=1 // loop_pre_header
      _
    $region3: #{tpu_custom_call.1} parent=1 // loop_header
      %s13 = sphi 0, %s17
      %p14 = scmp.ge.s32.totalorder %s13, 4
      %s20 = sphi 0, %s32
      %s21 = sphi 0, %s28
      %s22 = sphi 0, %s20
      %s23 = sphi 0, %s21
      %s24 = sphi 0, %s22
      %s25 = sphi 0, %s23
      %s37 = sphi 0, %s39
      %s40 = sphi 0, %s37
      %s41 = sphi 0, %s40
      %s57 = sphi 0, %s41
      %s61 = sphi 0, %s61
      %s63 = sphi 0, %s61
      %s64 = sphi 0, %s63
      %s78 = sphi 0, %s64
      %s82 = sphi 0, %s82
      %s84 = sphi 0, %s82
      %s85 = sphi 0, %s84
      %s99 = sphi 0, %s85
      %s103 = sphi 0, %s103
      %s105 = sphi 0, %s103
      %s106 = sphi 0, %s105
      %s120 = sphi 0, %s106
      %s128 = sphi 0, %s130
      %s131 = sphi 0, %s128
      %s132 = sphi 0, %s131
      %s148 = sphi 0, %s132
    $region4: #{tpu_custom_call.1} parent=1 // loop_header_branch
      %16 = sbr.rel (%p14) target = $region8
    $region5: #{tpu_custom_call.1} parent=1 // loop_body
      %s18 = ssub.s32 %s13, 1
      %s19 = ssub.s32 %s13, 2
      %s26 = sadd.s32 1, %s21
      %p27 = scmp.ge.s32.totalorder %s26, 1
      %s28 = scalar_select %p27, 0, %s26
      %s29 = sadd.s32 1, %s20
      %s30 = scalar_select %p27, %s29, %s20
      %p31 = scmp.ge.s32.totalorder %s30, 2
      %s32 = scalar_select %p31, 0, %s30
      %s33 = ssub.s32 %s20, %s32
      %s34 = ssub.s32 %s21, %s28
      %s35 = sor.u32 %s33, %s34
      %p36 = scmp.eq.s32.totalorder %s35, 0
      %s38 = sadd.s32 %s37, 1
      %s39 = scalar_select %p36, %s37, %s38
      %p42 = pneg %p36
      %p43 = scmp.eq.s32.totalorder %s13, 1
      %p44 = por %p42, %p43
      %p45 = scmp.ne.s32.totalorder %s37, %s40
      %p46 = scmp.eq.s32.totalorder %s13, 0
      %p47 = por %p45, %p46
      %p48 = scmp.ne.s32.totalorder %s37, %s40
      %p49 = scmp.eq.s32.totalorder %s18, 1
      %p50 = por %p48, %p49
      %p51 = scmp.ne.s32.totalorder %s40, %s41
      %p52 = scmp.eq.s32.totalorder %s18, 0
      %p53 = por %p51, %p52
      %p54 = scmp.ne.s32.totalorder %s40, %s41
      %p55 = scmp.eq.s32.totalorder %s19, 1
      %p56 = por %p54, %p55
      %p58 = scmp.ne.s32.totalorder %s41, %s57
      %p59 = scmp.eq.s32.totalorder %s19, 0
      %p60 = por %p58, %p59
      %s62 = sadd.s32 %s61, 1
      %p65 = scmp.eq.s32.totalorder %s13, 1
      %p66 = scmp.ne.s32.totalorder %s61, %s63
      %p67 = scmp.eq.s32.totalorder %s13, 0
      %p68 = por %p66, %p67
      %p69 = scmp.ne.s32.totalorder %s61, %s63
      %p70 = scmp.eq.s32.totalorder %s18, 1
      %p71 = por %p69, %p70
      %p72 = scmp.ne.s32.totalorder %s63, %s64
      %p73 = scmp.eq.s32.totalorder %s18, 0
      %p74 = por %p72, %p73
      %p75 = scmp.ne.s32.totalorder %s63, %s64
      %p76 = scmp.eq.s32.totalorder %s19, 1
      %p77 = por %p75, %p76
      %p79 = scmp.ne.s32.totalorder %s64, %s78
      %p80 = scmp.eq.s32.totalorder %s19, 0
      %p81 = por %p79, %p80
      %s83 = sadd.s32 %s82, 1
      %p86 = scmp.eq.s32.totalorder %s13, 1
      %p87 = scmp.ne.s32.totalorder %s82, %s84
      %p88 = scmp.eq.s32.totalorder %s13, 0
      %p89 = por %p87, %p88
      %p90 = scmp.ne.s32.totalorder %s82, %s84
      %p91 = scmp.eq.s32.totalorder %s18, 1
      %p92 = por %p90, %p91
      %p93 = scmp.ne.s32.totalorder %s84, %s85
      %p94 = scmp.eq.s32.totalorder %s18, 0
      %p95 = por %p93, %p94
      %p96 = scmp.ne.s32.totalorder %s84, %s85
      %p97 = scmp.eq.s32.totalorder %s19, 1
      %p98 = por %p96, %p97
      %p100 = scmp.ne.s32.totalorder %s85, %s99
      %p101 = scmp.eq.s32.totalorder %s19, 0
      %p102 = por %p100, %p101
      %s104 = sadd.s32 %s103, 1
      %p107 = scmp.eq.s32.totalorder %s13, 1
      %p108 = scmp.ne.s32.totalorder %s103, %s105
      %p109 = scmp.eq.s32.totalorder %s13, 0
      %p110 = por %p108, %p109
      %p111 = scmp.ne.s32.totalorder %s103, %s105
      %p112 = scmp.eq.s32.totalorder %s18, 1
      %p113 = por %p111, %p112
      %p114 = scmp.ne.s32.totalorder %s105, %s106
      %p115 = scmp.eq.s32.totalorder %s18, 0
      %p116 = por %p114, %p115
      %p117 = scmp.ne.s32.totalorder %s105, %s106
      %p118 = scmp.eq.s32.totalorder %s19, 1
      %p119 = por %p117, %p118
      %p121 = scmp.ne.s32.totalorder %s106, %s120
      %p122 = scmp.eq.s32.totalorder %s19, 0
      %p123 = por %p121, %p122
      %s124 = ssub.s32 %s20, %s32
      %s125 = ssub.s32 %s21, %s28
      %s126 = sor.u32 %s124, %s125
      %p127 = scmp.eq.s32.totalorder %s126, 0
      %s129 = sadd.s32 %s128, 1
      %s130 = scalar_select %p127, %s128, %s129
      %p133 = pneg %p127
      %p134 = scmp.eq.s32.totalorder %s13, 1
      %p135 = por %p133, %p134
      %p136 = scmp.ne.s32.totalorder %s128, %s131
      %p137 = scmp.eq.s32.totalorder %s13, 0
      %p138 = por %p136, %p137
      %p139 = scmp.ne.s32.totalorder %s128, %s131
      %p140 = scmp.eq.s32.totalorder %s18, 1
      %p141 = por %p139, %p140
      %p142 = scmp.ne.s32.totalorder %s131, %s132
      %p143 = scmp.eq.s32.totalorder %s18, 0
      %p144 = por %p142, %p143
      %p145 = scmp.ne.s32.totalorder %s131, %s132
      %p146 = scmp.eq.s32.totalorder %s19, 1
      %p147 = por %p145, %p146
      %p149 = scmp.ne.s32.totalorder %s132, %s148
      %p150 = scmp.eq.s32.totalorder %s19, 0
      %p151 = por %p149, %p150
      %p152 = scmp.le.s32.totalorder 1, %s13
      %p153 = scmp.lt.s32.totalorder %s13, 3
      %p154 = pnand %p152, %p153
      %p155 = pneg %p154
      // Predicated region
      $region9: #{tpu_custom_call.1} parent=5 // pred_check
        _
      $region10: #{tpu_custom_call.1} parent=5 // pred_check_branch
        %157 = sbr.rel (%p154) target = $region12
      $region11: #{tpu_custom_call.1} parent=5 // pred_region
        %s158 = ssub.s32 %s13, 1
        // Predicated region
        $region13: #{tpu_custom_call.1} parent=11 // pred_check
          %p159 = pneg %p74
        $region14: #{tpu_custom_call.1} parent=11 // pred_check_branch
          %161 = sbr.rel (%p159) target = $region16
        $region15: #{tpu_custom_call.1} parent=11 // pred_region
          _
        $region16: #{tpu_custom_call.1} parent=11 // pred_fallthru
          _
        // Predicated region
        $region17: #{tpu_custom_call.1} parent=11 // pred_check
          %p162 = pneg %p95
        $region18: #{tpu_custom_call.1} parent=11 // pred_check_branch
          %164 = sbr.rel (%p162) target = $region20
        $region19: #{tpu_custom_call.1} parent=11 // pred_region
          _
        $region20: #{tpu_custom_call.1} parent=11 // pred_fallthru
          _
        // Predicated region
        $region21: #{tpu_custom_call.1} parent=11 // pred_check
          %p165 = pneg %p116
        $region22: #{tpu_custom_call.1} parent=11 // pred_check_branch
          %167 = sbr.rel (%p165) target = $region24
        $region23: #{tpu_custom_call.1} parent=11 // pred_region
          _
        $region24: #{tpu_custom_call.1} parent=11 // pred_fallthru
          _
      $region12: #{tpu_custom_call.1} parent=5 // pred_fallthru
        _
      %p168 = scmp.lt.s32.totalorder %s13, 2
      // Predicated region
      $region25: #{tpu_custom_call.1} parent=5 // pred_check
        %p169 = pneg %p168
      $region26: #{tpu_custom_call.1} parent=5 // pred_check_branch
        %171 = sbr.rel (%p169) target = $region28
      $region27: #{tpu_custom_call.1} parent=5 // pred_region
        // Predicated region
        $region29: #{tpu_custom_call.1} parent=27 // pred_check
          %p172 = pneg %p47
        $region30: #{tpu_custom_call.1} parent=27 // pred_check_branch
          %174 = sbr.rel (%p172) target = $region32
        $region31: #{tpu_custom_call.1} parent=27 // pred_region
          %s175 = smul.u32 2, %s21
          %p176 = scmp.lt.s32.totalorder %s20, 1
          %s177 = scalar_select %p176, %s20, 1
          %p178 = scmp.lt.s32.totalorder %s175, 1
          %s179 = scalar_select %p178, %s175, 1
          %s180 = smul.addr %s177, 2
          %s181 = sadd.s32 %s179, %s180
          %s182 = smul.addr %s181, 4
          %s183 = scalar_lea.vmem %s0, %s182
          %s184 = smul.u32 2, %s21
        $region32: #{tpu_custom_call.1} parent=27 // pred_fallthru
          _
      $region28: #{tpu_custom_call.1} parent=5 // pred_fallthru
        _
      %p185 = scmp.le.s32.totalorder 1, %s13
      %p186 = scmp.lt.s32.totalorder %s13, 3
      %p187 = pnand %p185, %p186
      %p188 = pneg %p187
      // Predicated region
      $region33: #{tpu_custom_call.1} parent=5 // pred_check
        _
      $region34: #{tpu_custom_call.1} parent=5 // pred_check_branch
        %190 = sbr.rel (%p187) target = $region36
      $region35: #{tpu_custom_call.1} parent=5 // pred_region
        %s191 = ssub.s32 %s13, 1
        %s192 = smul.u32 2, %s23
        %p193 = scmp.lt.s32.totalorder %s22, 1
        %s194 = scalar_select %p193, %s22, 1
        %p195 = scmp.lt.s32.totalorder %s192, 1
        %s196 = scalar_select %p195, %s192, 1
        %s197 = smul.addr %s194, 2
        %s198 = sadd.s32 %s196, %s197
        %s199 = smul.addr %s198, 4
        %s200 = scalar_lea.vmem %s0, %s199
        %p201 = pneg %p53
        %p202 = pneg %p50
        %p203 = pneg %p74
        %p204 = pneg %p71
        %p205 = pneg %p95
        %p206 = pneg %p92
        %p207 = pneg %p116
        %p208 = pneg %p113
        %p209 = pneg %p144
        %p210 = pneg %p141
        %s211 = sand.u32 %s131, 1
        %s212 = scalar_lea.sflag [#allocation3], %s211
        %s213 = sand.u32 %s131, 1
        %s214 = smul.addr %s213, 8
        %s215 = scalar_lea.vmem [#allocation2], %s214
        %s216 = smul.u32 2, %s23
        %p217 = scmp.lt.s32.totalorder %s22, 1
        %s218 = scalar_select %p217, %s22, 1
        %p219 = scmp.lt.s32.totalorder %s216, 1
        %s220 = scalar_select %p219, %s216, 1
        %s221 = smul.addr %s218, 2
        %s222 = sadd.s32 %s220, %s221
        %s223 = smul.addr %s222, 4
        %s224 = scalar_lea.vmem %s0, %s223
        %s225 = smul.u32 2, %s23
        %s226 = smul.u32 2, %s23
        %v227 = vld [vmem:[%s224] sm:$0xff]
        %v228 = vld [vmem:[%s3] sm:$0xff]
        %v229 = vld [vmem:[%s3 + $0x8] sm:$0xff]
        %v230 = vld [vmem:[%s3 + $0x10] sm:$0xff]
        %v231 = vld [vmem:[%s3 + $0x18] sm:$0xff]
        %v232 = vld [vmem:[%s3 + $0x20] sm:$0xff]
        %v233 = vld [vmem:[%s3 + $0x28] sm:$0xff]
        %v234 = vld [vmem:[%s3 + $0x30] sm:$0xff]
        %v235 = vld [vmem:[%s3 + $0x38] sm:$0xff]
        %v236 = vld [vmem:[%s3 + $0x40] sm:$0xff]
        %v237 = vld [vmem:[%s3 + $0x48] sm:$0xff]
        %v238 = vld [vmem:[%s3 + $0x50] sm:$0xff]
        %v239 = vld [vmem:[%s3 + $0x58] sm:$0xff]
        %v240 = vld [vmem:[%s3 + $0x60] sm:$0xff]
        %v241 = vld [vmem:[%s3 + $0x68] sm:$0xff]
        %v242 = vld [vmem:[%s3 + $0x70] sm:$0xff]
        %v243 = vld [vmem:[%s3 + $0x78] sm:$0xff]
        %v244 = vld [vmem:[%s3 + $0x80] sm:$0xff]
        %v245 = vld [vmem:[%s3 + $0x88] sm:$0xff]
        %v246 = vld [vmem:[%s3 + $0x90] sm:$0xff]
        %v247 = vld [vmem:[%s3 + $0x98] sm:$0xff]
        %v248 = vld [vmem:[%s3 + $0xa0] sm:$0xff]
        %v249 = vld [vmem:[%s3 + $0xa8] sm:$0xff]
        %v250 = vld [vmem:[%s3 + $0xb0] sm:$0xff]
        %v251 = vld [vmem:[%s3 + $0xb8] sm:$0xff]
        %v252 = vld [vmem:[%s3 + $0xc0] sm:$0xff]
        %v253 = vld [vmem:[%s3 + $0xc8] sm:$0xff]
        %v254 = vld [vmem:[%s3 + $0xd0] sm:$0xff]
        %v255 = vld [vmem:[%s3 + $0xd8] sm:$0xff]
        %v256 = vld [vmem:[%s3 + $0xe0] sm:$0xff]
        %v257 = vld [vmem:[%s3 + $0xe8] sm:$0xff]
        %v258 = vld [vmem:[%s3 + $0xf0] sm:$0xff]
        %v259 = vld [vmem:[%s3 + $0xf8] sm:$0xff]
        %v261 = vcombine.high %v227, %v227
        %vm263 = vcmask 1043456
        %v264 = vsel %vm263, %v227, 0.0
        %v265 = vrot.slane %v264, 4
        %v266 = vadd.f32 %v264, %v265
        %v267 = vrot.slane %v266, 2
        %v268 = vadd.f32 %v266, %v267
        %v269 = vrot.slane %v268, 1
        %v270 = vadd.f32 %v268, %v269
        %v271 = vsel %vm263, %v261, 0.0
        %v272 = vrot.slane %v271, 4
        %v273 = vadd.f32 %v271, %v272
        %v274 = vrot.slane %v273, 2
        %v275 = vadd.f32 %v273, %v274
        %v276 = vrot.slane %v275, 1
        %v277 = vadd.f32 %v275, %v276
        %278 = vmatprep.subr.mxu0 0.0
        %v279 = vand.u32 %v243, 4294901760
        %280 = vmatpush1.msra.mxu0 %v279
        %281 = vmatprep.subr.mxu0 0.0
        %v282 = vand.u32 %v242, 4294901760
        %283 = vmatpush1.msra.mxu0 %v282
        %284 = vmatprep.subr.mxu0 0.0
        %v285 = vand.u32 %v241, 4294901760
        %286 = vmatpush1.msra.mxu0 %v285
        %287 = vmatprep.subr.mxu0 0.0
        %v288 = vand.u32 %v240, 4294901760
        %289 = vmatpush1.msra.mxu0 %v288
        %290 = vmatprep.subr.mxu0 0.0
        %v291 = vand.u32 %v239, 4294901760
        %292 = vmatpush1.msra.mxu0 %v291
        %293 = vmatprep.subr.mxu0 0.0
        %v294 = vand.u32 %v238, 4294901760
        %295 = vmatpush1.msra.mxu0 %v294
        %296 = vmatprep.subr.mxu0 0.0
        %v297 = vand.u32 %v237, 4294901760
        %298 = vmatpush1.msra.mxu0 %v297
        %299 = vmatprep.subr.mxu0 0.0
        %v300 = vand.u32 %v236, 4294901760
        %301 = vmatpush1.msra.mxu0 %v300
        %302 = vmatprep.subr.mxu0 0.0
        %v303 = vand.u32 %v235, 4294901760
        %304 = vmatpush1.msra.mxu0 %v303
        %305 = vmatprep.subr.mxu0 0.0
        %v306 = vand.u32 %v234, 4294901760
        %307 = vmatpush1.msra.mxu0 %v306
        %308 = vmatprep.subr.mxu0 0.0
        %v309 = vand.u32 %v233, 4294901760
        %310 = vmatpush1.msra.mxu0 %v309
        %311 = vmatprep.subr.mxu0 0.0
        %v312 = vand.u32 %v232, 4294901760
        %313 = vmatpush1.msra.mxu0 %v312
        %314 = vmatprep.subr.mxu0 0.0
        %v315 = vand.u32 %v231, 4294901760
        %316 = vmatpush1.msra.mxu0 %v315
        %317 = vmatprep.subr.mxu0 0.0
        %v318 = vand.u32 %v230, 4294901760
        %319 = vmatpush1.msra.mxu0 %v318
        %320 = vmatprep.subr.mxu0 0.0
        %v321 = vand.u32 %v229, 4294901760
        %322 = vmatpush1.msra.mxu0 %v321
        %323 = vmatprep.subr.mxu0 0.0
        %v324 = vand.u32 %v228, 4294901760
        %325 = vmatpush1.msra.mxu0 %v324
        %326 = vmatprep.subr.mxu0 0.0
        %v327 = vand.u32 %v259, 4294901760
        %328 = vmatpush2.msra.mxu0 %v327
        %329 = vmatprep.subr.mxu0 0.0
        %v330 = vand.u32 %v258, 4294901760
        %331 = vmatpush2.msra.mxu0 %v330
        %332 = vmatprep.subr.mxu0 0.0
        %v333 = vand.u32 %v257, 4294901760
        %334 = vmatpush2.msra.mxu0 %v333
        %335 = vmatprep.subr.mxu0 0.0
        %v336 = vand.u32 %v256, 4294901760
        %337 = vmatpush2.msra.mxu0 %v336
        %338 = vmatprep.subr.mxu0 0.0
        %v339 = vand.u32 %v255, 4294901760
        %340 = vmatpush2.msra.mxu0 %v339
        %341 = vmatprep.subr.mxu0 0.0
        %v342 = vand.u32 %v254, 4294901760
        %343 = vmatpush2.msra.mxu0 %v342
        %344 = vmatprep.subr.mxu0 0.0
        %v345 = vand.u32 %v253, 4294901760
        %346 = vmatpush2.msra.mxu0 %v345
        %347 = vmatprep.subr.mxu0 0.0
        %v348 = vand.u32 %v252, 4294901760
        %349 = vmatpush2.msra.mxu0 %v348
        %350 = vmatprep.subr.mxu0 0.0
        %v351 = vand.u32 %v251, 4294901760
        %352 = vmatpush2.msra.mxu0 %v351
        %353 = vmatprep.subr.mxu0 0.0
        %v354 = vand.u32 %v250, 4294901760
        %355 = vmatpush2.msra.mxu0 %v354
        %356 = vmatprep.subr.mxu0 0.0
        %v357 = vand.u32 %v249, 4294901760
        %358 = vmatpush2.msra.mxu0 %v357
        %359 = vmatprep.subr.mxu0 0.0
        %v360 = vand.u32 %v248, 4294901760
        %361 = vmatpush2.msra.mxu0 %v360
        %362 = vmatprep.subr.mxu0 0.0
        %v363 = vand.u32 %v247, 4294901760
        %364 = vmatpush2.msra.mxu0 %v363
        %365 = vmatprep.subr.mxu0 0.0
        %v366 = vand.u32 %v246, 4294901760
        %367 = vmatpush2.msra.mxu0 %v366
        %368 = vmatprep.subr.mxu0 0.0
        %v369 = vand.u32 %v245, 4294901760
        %370 = vmatpush2.msra.mxu0 %v369
        %371 = vmatprep.subr.mxu0 0.0
        %v372 = vand.u32 %v244, 4294901760
        %373 = vmatpush2.msra.mxu0 %v372
        %v374 = vand.u32 %v277, 4294901760
        %v375 = vsub.f32 %v277, %v374
        %v376 = vand.u32 %v375, 4294901760
        %v377 = vsub.f32 %v375, %v376
        %v378 = vand.u32 %v377, 4294901760
        %379 = vmatprep.mubr.f32.mxu0 %v378
        %v380 = vand.u32 %v270, 4294901760
        %v381 = vsub.f32 %v270, %v380
        %v382 = vand.u32 %v381, 4294901760
        %v383 = vsub.f32 %v381, %v382
        %v384 = vand.u32 %v383, 4294901760
        %385 = vmatmul.mubr.f32.gmra.mxu0 %v384
        %v386 = vpop.f32.mrf.mxu0
        %v387 = vadd.f32 0.0, %v386
        %v388 = vpop.f32.mrf.mxu0
        %389 = vdwg.mxu0
        %390 = vmatprep.subr.mxu0 0.0
        %v391 = vand.u32 %v243, 4294901760
        %v392 = vsub.f32 %v243, %v391
        %v393 = vand.u32 %v392, 4294901760
        %v394 = vsub.f32 %v392, %v393
        %v395 = vand.u32 %v394, 4294901760
        %396 = vmatpush1.msra.mxu0 %v395
        %397 = vmatprep.subr.mxu0 0.0
        %v398 = vand.u32 %v242, 4294901760
        %v399 = vsub.f32 %v242, %v398
        %v400 = vand.u32 %v399, 4294901760
        %v401 = vsub.f32 %v399, %v400
        %v402 = vand.u32 %v401, 4294901760
        %403 = vmatpush1.msra.mxu0 %v402
        %404 = vmatprep.subr.mxu0 0.0
        %v405 = vand.u32 %v241, 4294901760
        %v406 = vsub.f32 %v241, %v405
        %v407 = vand.u32 %v406, 4294901760
        %v408 = vsub.f32 %v406, %v407
        %v409 = vand.u32 %v408, 4294901760
        %410 = vmatpush1.msra.mxu0 %v409
        %411 = vmatprep.subr.mxu0 0.0
        %v412 = vand.u32 %v240, 4294901760
        %v413 = vsub.f32 %v240, %v412
        %v414 = vand.u32 %v413, 4294901760
        %v415 = vsub.f32 %v413, %v414
        %v416 = vand.u32 %v415, 4294901760
        %417 = vmatpush1.msra.mxu0 %v416
        %418 = vmatprep.subr.mxu0 0.0
        %v419 = vand.u32 %v239, 4294901760
        %v420 = vsub.f32 %v239, %v419
        %v421 = vand.u32 %v420, 4294901760
        %v422 = vsub.f32 %v420, %v421
        %v423 = vand.u32 %v422, 4294901760
        %424 = vmatpush1.msra.mxu0 %v423
        %425 = vmatprep.subr.mxu0 0.0
        %v426 = vand.u32 %v238, 4294901760
        %v427 = vsub.f32 %v238, %v426
        %v428 = vand.u32 %v427, 4294901760
        %v429 = vsub.f32 %v427, %v428
        %v430 = vand.u32 %v429, 4294901760
        %431 = vmatpush1.msra.mxu0 %v430
        %432 = vmatprep.subr.mxu0 0.0
        %v433 = vand.u32 %v237, 4294901760
        %v434 = vsub.f32 %v237, %v433
        %v435 = vand.u32 %v434, 4294901760
        %v436 = vsub.f32 %v434, %v435
        %v437 = vand.u32 %v436, 4294901760
        %438 = vmatpush1.msra.mxu0 %v437
        %439 = vmatprep.subr.mxu0 0.0
        %v440 = vand.u32 %v236, 4294901760
        %v441 = vsub.f32 %v236, %v440
        %v442 = vand.u32 %v441, 4294901760
        %v443 = vsub.f32 %v441, %v442
        %v444 = vand.u32 %v443, 4294901760
        %445 = vmatpush1.msra.mxu0 %v444
        %446 = vmatprep.subr.mxu0 0.0
        %v447 = vand.u32 %v235, 4294901760
        %v448 = vsub.f32 %v235, %v447
        %v449 = vand.u32 %v448, 4294901760
        %v450 = vsub.f32 %v448, %v449
        %v451 = vand.u32 %v450, 4294901760
        %452 = vmatpush1.msra.mxu0 %v451
        %453 = vmatprep.subr.mxu0 0.0
        %v454 = vand.u32 %v234, 4294901760
        %v455 = vsub.f32 %v234, %v454
        %v456 = vand.u32 %v455, 4294901760
        %v457 = vsub.f32 %v455, %v456
        %v458 = vand.u32 %v457, 4294901760
        %459 = vmatpush1.msra.mxu0 %v458
        %460 = vmatprep.subr.mxu0 0.0
        %v461 = vand.u32 %v233, 4294901760
        %v462 = vsub.f32 %v233, %v461
        %v463 = vand.u32 %v462, 4294901760
        %v464 = vsub.f32 %v462, %v463
        %v465 = vand.u32 %v464, 4294901760
        %466 = vmatpush1.msra.mxu0 %v465
        %467 = vmatprep.subr.mxu0 0.0
        %v468 = vand.u32 %v232, 4294901760
        %v469 = vsub.f32 %v232, %v468
        %v470 = vand.u32 %v469, 4294901760
        %v471 = vsub.f32 %v469, %v470
        %v472 = vand.u32 %v471, 4294901760
        %473 = vmatpush1.msra.mxu0 %v472
        %474 = vmatprep.subr.mxu0 0.0
        %v475 = vand.u32 %v231, 4294901760
        %v476 = vsub.f32 %v231, %v475
        %v477 = vand.u32 %v476, 4294901760
        %v478 = vsub.f32 %v476, %v477
        %v479 = vand.u32 %v478, 4294901760
        %480 = vmatpush1.msra.mxu0 %v479
        %481 = vmatprep.subr.mxu0 0.0
        %v482 = vand.u32 %v230, 4294901760
        %v483 = vsub.f32 %v230, %v482
        %v484 = vand.u32 %v483, 4294901760
        %v485 = vsub.f32 %v483, %v484
        %v486 = vand.u32 %v485, 4294901760
        %487 = vmatpush1.msra.mxu0 %v486
        %488 = vmatprep.subr.mxu0 0.0
        %v489 = vand.u32 %v229, 4294901760
        %v490 = vsub.f32 %v229, %v489
        %v491 = vand.u32 %v490, 4294901760
        %v492 = vsub.f32 %v490, %v491
        %v493 = vand.u32 %v492, 4294901760
        %494 = vmatpush1.msra.mxu0 %v493
        %495 = vmatprep.subr.mxu0 0.0
        %v496 = vand.u32 %v228, 4294901760
        %v497 = vsub.f32 %v228, %v496
        %v498 = vand.u32 %v497, 4294901760
        %v499 = vsub.f32 %v497, %v498
        %v500 = vand.u32 %v499, 4294901760
        %501 = vmatpush1.msra.mxu0 %v500
        %502 = vmatprep.subr.mxu0 0.0
        %v503 = vand.u32 %v259, 4294901760
        %v504 = vsub.f32 %v259, %v503
        %v505 = vand.u32 %v504, 4294901760
        %v506 = vsub.f32 %v504, %v505
        %v507 = vand.u32 %v506, 4294901760
        %508 = vmatpush2.msra.mxu0 %v507
        %509 = vmatprep.subr.mxu0 0.0
        %v510 = vand.u32 %v258, 4294901760
        %v511 = vsub.f32 %v258, %v510
        %v512 = vand.u32 %v511, 4294901760
        %v513 = vsub.f32 %v511, %v512
        %v514 = vand.u32 %v513, 4294901760
        %515 = vmatpush2.msra.mxu0 %v514
        %516 = vmatprep.subr.mxu0 0.0
        %v517 = vand.u32 %v257, 4294901760
        %v518 = vsub.f32 %v257, %v517
        %v519 = vand.u32 %v518, 4294901760
        %v520 = vsub.f32 %v518, %v519
        %v521 = vand.u32 %v520, 4294901760
        %522 = vmatpush2.msra.mxu0 %v521
        %523 = vmatprep.subr.mxu0 0.0
        %v524 = vand.u32 %v256, 4294901760
        %v525 = vsub.f32 %v256, %v524
        %v526 = vand.u32 %v525, 4294901760
        %v527 = vsub.f32 %v525, %v526
        %v528 = vand.u32 %v527, 4294901760
        %529 = vmatpush2.msra.mxu0 %v528
        %530 = vmatprep.subr.mxu0 0.0
        %v531 = vand.u32 %v255, 4294901760
        %v532 = vsub.f32 %v255, %v531
        %v533 = vand.u32 %v532, 4294901760
        %v534 = vsub.f32 %v532, %v533
        %v535 = vand.u32 %v534, 4294901760
        %536 = vmatpush2.msra.mxu0 %v535
        %537 = vmatprep.subr.mxu0 0.0
        %v538 = vand.u32 %v254, 4294901760
        %v539 = vsub.f32 %v254, %v538
        %v540 = vand.u32 %v539, 4294901760
        %v541 = vsub.f32 %v539, %v540
        %v542 = vand.u32 %v541, 4294901760
        %543 = vmatpush2.msra.mxu0 %v542
        %544 = vmatprep.subr.mxu0 0.0
        %v545 = vand.u32 %v253, 4294901760
        %v546 = vsub.f32 %v253, %v545
        %v547 = vand.u32 %v546, 4294901760
        %v548 = vsub.f32 %v546, %v547
        %v549 = vand.u32 %v548, 4294901760
        %550 = vmatpush2.msra.mxu0 %v549
        %551 = vmatprep.subr.mxu0 0.0
        %v552 = vand.u32 %v252, 4294901760
        %v553 = vsub.f32 %v252, %v552
        %v554 = vand.u32 %v553, 4294901760
        %v555 = vsub.f32 %v553, %v554
        %v556 = vand.u32 %v555, 4294901760
        %557 = vmatpush2.msra.mxu0 %v556
        %558 = vmatprep.subr.mxu0 0.0
        %v559 = vand.u32 %v251, 4294901760
        %v560 = vsub.f32 %v251, %v559
        %v561 = vand.u32 %v560, 4294901760
        %v562 = vsub.f32 %v560, %v561
        %v563 = vand.u32 %v562, 4294901760
        %564 = vmatpush2.msra.mxu0 %v563
        %565 = vmatprep.subr.mxu0 0.0
        %v566 = vand.u32 %v250, 4294901760
        %v567 = vsub.f32 %v250, %v566
        %v568 = vand.u32 %v567, 4294901760
        %v569 = vsub.f32 %v567, %v568
        %v570 = vand.u32 %v569, 4294901760
        %571 = vmatpush2.msra.mxu0 %v570
        %572 = vmatprep.subr.mxu0 0.0
        %v573 = vand.u32 %v249, 4294901760
        %v574 = vsub.f32 %v249, %v573
        %v575 = vand.u32 %v574, 4294901760
        %v576 = vsub.f32 %v574, %v575
        %v577 = vand.u32 %v576, 4294901760
        %578 = vmatpush2.msra.mxu0 %v577
        %579 = vmatprep.subr.mxu0 0.0
        %v580 = vand.u32 %v248, 4294901760
        %v581 = vsub.f32 %v248, %v580
        %v582 = vand.u32 %v581, 4294901760
        %v583 = vsub.f32 %v581, %v582
        %v584 = vand.u32 %v583, 4294901760
        %585 = vmatpush2.msra.mxu0 %v584
        %586 = vmatprep.subr.mxu0 0.0
        %v587 = vand.u32 %v247, 4294901760
        %v588 = vsub.f32 %v247, %v587
        %v589 = vand.u32 %v588, 4294901760
        %v590 = vsub.f32 %v588, %v589
        %v591 = vand.u32 %v590, 4294901760
        %592 = vmatpush2.msra.mxu0 %v591
        %593 = vmatprep.subr.mxu0 0.0
        %v594 = vand.u32 %v246, 4294901760
        %v595 = vsub.f32 %v246, %v594
        %v596 = vand.u32 %v595, 4294901760
        %v597 = vsub.f32 %v595, %v596
        %v598 = vand.u32 %v597, 4294901760
        %599 = vmatpush2.msra.mxu0 %v598
        %600 = vmatprep.subr.mxu0 0.0
        %v601 = vand.u32 %v245, 4294901760
        %v602 = vsub.f32 %v245, %v601
        %v603 = vand.u32 %v602, 4294901760
        %v604 = vsub.f32 %v602, %v603
        %v605 = vand.u32 %v604, 4294901760
        %606 = vmatpush2.msra.mxu0 %v605
        %607 = vmatprep.subr.mxu0 0.0
        %v608 = vand.u32 %v244, 4294901760
        %v609 = vsub.f32 %v244, %v608
        %v610 = vand.u32 %v609, 4294901760
        %v611 = vsub.f32 %v609, %v610
        %v612 = vand.u32 %v611, 4294901760
        %613 = vmatpush2.msra.mxu0 %v612
        %v614 = vand.u32 %v277, 4294901760
        %615 = vmatprep.mubr.f32.mxu0 %v614
        %v616 = vand.u32 %v270, 4294901760
        %617 = vmatmul.mubr.f32.gmra.mxu0 %v616
        %v618 = vpop.f32.mrf.mxu0
        %v619 = vadd.f32 %v387, %v618
        %v620 = vpop.f32.mrf.mxu0
        %621 = vdwg.mxu0
        %622 = vmatprep.subr.mxu0 0.0
        %v623 = vand.u32 %v243, 4294901760
        %v624 = vsub.f32 %v243, %v623
        %625 = vmatpush1.msra.mxu0 %v624
        %626 = vmatprep.subr.mxu0 0.0
        %v627 = vand.u32 %v242, 4294901760
        %v628 = vsub.f32 %v242, %v627
        %629 = vmatpush1.msra.mxu0 %v628
        %630 = vmatprep.subr.mxu0 0.0
        %v631 = vand.u32 %v241, 4294901760
        %v632 = vsub.f32 %v241, %v631
        %633 = vmatpush1.msra.mxu0 %v632
        %634 = vmatprep.subr.mxu0 0.0
        %v635 = vand.u32 %v240, 4294901760
        %v636 = vsub.f32 %v240, %v635
        %637 = vmatpush1.msra.mxu0 %v636
        %638 = vmatprep.subr.mxu0 0.0
        %v639 = vand.u32 %v239, 4294901760
        %v640 = vsub.f32 %v239, %v639
        %641 = vmatpush1.msra.mxu0 %v640
        %642 = vmatprep.subr.mxu0 0.0
        %v643 = vand.u32 %v238, 4294901760
        %v644 = vsub.f32 %v238, %v643
        %645 = vmatpush1.msra.mxu0 %v644
        %646 = vmatprep.subr.mxu0 0.0
        %v647 = vand.u32 %v237, 4294901760
        %v648 = vsub.f32 %v237, %v647
        %649 = vmatpush1.msra.mxu0 %v648
        %650 = vmatprep.subr.mxu0 0.0
        %v651 = vand.u32 %v236, 4294901760
        %v652 = vsub.f32 %v236, %v651
        %653 = vmatpush1.msra.mxu0 %v652
        %654 = vmatprep.subr.mxu0 0.0
        %v655 = vand.u32 %v235, 4294901760
        %v656 = vsub.f32 %v235, %v655
        %657 = vmatpush1.msra.mxu0 %v656
        %658 = vmatprep.subr.mxu0 0.0
        %v659 = vand.u32 %v234, 4294901760
        %v660 = vsub.f32 %v234, %v659
        %661 = vmatpush1.msra.mxu0 %v660
        %662 = vmatprep.subr.mxu0 0.0
        %v663 = vand.u32 %v233, 4294901760
        %v664 = vsub.f32 %v233, %v663
        %665 = vmatpush1.msra.mxu0 %v664
        %666 = vmatprep.subr.mxu0 0.0
        %v667 = vand.u32 %v232, 4294901760
        %v668 = vsub.f32 %v232, %v667
        %669 = vmatpush1.msra.mxu0 %v668
        %670 = vmatprep.subr.mxu0 0.0
        %v671 = vand.u32 %v231, 4294901760
        %v672 = vsub.f32 %v231, %v671
        %673 = vmatpush1.msra.mxu0 %v672
        %674 = vmatprep.subr.mxu0 0.0
        %v675 = vand.u32 %v230, 4294901760
        %v676 = vsub.f32 %v230, %v675
        %677 = vmatpush1.msra.mxu0 %v676
        %678 = vmatprep.subr.mxu0 0.0
        %v679 = vand.u32 %v229, 4294901760
        %v680 = vsub.f32 %v229, %v679
        %681 = vmatpush1.msra.mxu0 %v680
        %682 = vmatprep.subr.mxu0 0.0
        %v683 = vand.u32 %v228, 4294901760
        %v684 = vsub.f32 %v228, %v683
        %685 = vmatpush1.msra.mxu0 %v684
        %686 = vmatprep.subr.mxu0 0.0
        %v687 = vand.u32 %v259, 4294901760
        %v688 = vsub.f32 %v259, %v687
        %689 = vmatpush2.msra.mxu0 %v688
        %690 = vmatprep.subr.mxu0 0.0
        %v691 = vand.u32 %v258, 4294901760
        %v692 = vsub.f32 %v258, %v691
        %693 = vmatpush2.msra.mxu0 %v692
        %694 = vmatprep.subr.mxu0 0.0
        %v695 = vand.u32 %v257, 4294901760
        %v696 = vsub.f32 %v257, %v695
        %697 = vmatpush2.msra.mxu0 %v696
        %698 = vmatprep.subr.mxu0 0.0
        %v699 = vand.u32 %v256, 4294901760
        %v700 = vsub.f32 %v256, %v699
        %701 = vmatpush2.msra.mxu0 %v700
        %702 = vmatprep.subr.mxu0 0.0
        %v703 = vand.u32 %v255, 4294901760
        %v704 = vsub.f32 %v255, %v703
        %705 = vmatpush2.msra.mxu0 %v704
        %706 = vmatprep.subr.mxu0 0.0
        %v707 = vand.u32 %v254, 4294901760
        %v708 = vsub.f32 %v254, %v707
        %709 = vmatpush2.msra.mxu0 %v708
        %710 = vmatprep.subr.mxu0 0.0
        %v711 = vand.u32 %v253, 4294901760
        %v712 = vsub.f32 %v253, %v711
        %713 = vmatpush2.msra.mxu0 %v712
        %714 = vmatprep.subr.mxu0 0.0
        %v715 = vand.u32 %v252, 4294901760
        %v716 = vsub.f32 %v252, %v715
        %717 = vmatpush2.msra.mxu0 %v716
        %718 = vmatprep.subr.mxu0 0.0
        %v719 = vand.u32 %v251, 4294901760
        %v720 = vsub.f32 %v251, %v719
        %721 = vmatpush2.msra.mxu0 %v720
        %722 = vmatprep.subr.mxu0 0.0
        %v723 = vand.u32 %v250, 4294901760
        %v724 = vsub.f32 %v250, %v723
        %725 = vmatpush2.msra.mxu0 %v724
        %726 = vmatprep.subr.mxu0 0.0
        %v727 = vand.u32 %v249, 4294901760
        %v728 = vsub.f32 %v249, %v727
        %729 = vmatpush2.msra.mxu0 %v728
        %730 = vmatprep.subr.mxu0 0.0
        %v731 = vand.u32 %v248, 4294901760
        %v732 = vsub.f32 %v248, %v731
        %733 = vmatpush2.msra.mxu0 %v732
        %734 = vmatprep.subr.mxu0 0.0
        %v735 = vand.u32 %v247, 4294901760
        %v736 = vsub.f32 %v247, %v735
        %737 = vmatpush2.msra.mxu0 %v736
        %738 = vmatprep.subr.mxu0 0.0
        %v739 = vand.u32 %v246, 4294901760
        %v740 = vsub.f32 %v246, %v739
        %741 = vmatpush2.msra.mxu0 %v740
        %742 = vmatprep.subr.mxu0 0.0
        %v743 = vand.u32 %v245, 4294901760
        %v744 = vsub.f32 %v245, %v743
        %745 = vmatpush2.msra.mxu0 %v744
        %746 = vmatprep.subr.mxu0 0.0
        %v747 = vand.u32 %v244, 4294901760
        %v748 = vsub.f32 %v244, %v747
        %749 = vmatpush2.msra.mxu0 %v748
        %v750 = vand.u32 %v277, 4294901760
        %v751 = vsub.f32 %v277, %v750
        %752 = vmatprep.mubr.f32.mxu0 %v751
        %v753 = vand.u32 %v270, 4294901760
        %v754 = vsub.f32 %v270, %v753
        %755 = vmatmul.mubr.f32.gmra.mxu0 %v754
        %v756 = vpop.f32.mrf.mxu0
        %v757 = vadd.f32 %v619, %v756
        %v758 = vpop.f32.mrf.mxu0
        %759 = vdwg.mxu0
        %760 = vmatprep.subr.mxu0 0.0
        %v761 = vand.u32 %v243, 4294901760
        %762 = vmatpush1.msra.mxu0 %v761
        %763 = vmatprep.subr.mxu0 0.0
        %v764 = vand.u32 %v242, 4294901760
        %765 = vmatpush1.msra.mxu0 %v764
        %766 = vmatprep.subr.mxu0 0.0
        %v767 = vand.u32 %v241, 4294901760
        %768 = vmatpush1.msra.mxu0 %v767
        %769 = vmatprep.subr.mxu0 0.0
        %v770 = vand.u32 %v240, 4294901760
        %771 = vmatpush1.msra.mxu0 %v770
        %772 = vmatprep.subr.mxu0 0.0
        %v773 = vand.u32 %v239, 4294901760
        %774 = vmatpush1.msra.mxu0 %v773
        %775 = vmatprep.subr.mxu0 0.0
        %v776 = vand.u32 %v238, 4294901760
        %777 = vmatpush1.msra.mxu0 %v776
        %778 = vmatprep.subr.mxu0 0.0
        %v779 = vand.u32 %v237, 4294901760
        %780 = vmatpush1.msra.mxu0 %v779
        %781 = vmatprep.subr.mxu0 0.0
        %v782 = vand.u32 %v236, 4294901760
        %783 = vmatpush1.msra.mxu0 %v782
        %784 = vmatprep.subr.mxu0 0.0
        %v785 = vand.u32 %v235, 4294901760
        %786 = vmatpush1.msra.mxu0 %v785
        %787 = vmatprep.subr.mxu0 0.0
        %v788 = vand.u32 %v234, 4294901760
        %789 = vmatpush1.msra.mxu0 %v788
        %790 = vmatprep.subr.mxu0 0.0
        %v791 = vand.u32 %v233, 4294901760
        %792 = vmatpush1.msra.mxu0 %v791
        %793 = vmatprep.subr.mxu0 0.0
        %v794 = vand.u32 %v232, 4294901760
        %795 = vmatpush1.msra.mxu0 %v794
        %796 = vmatprep.subr.mxu0 0.0
        %v797 = vand.u32 %v231, 4294901760
        %798 = vmatpush1.msra.mxu0 %v797
        %799 = vmatprep.subr.mxu0 0.0
        %v800 = vand.u32 %v230, 4294901760
        %801 = vmatpush1.msra.mxu0 %v800
        %802 = vmatprep.subr.mxu0 0.0
        %v803 = vand.u32 %v229, 4294901760
        %804 = vmatpush1.msra.mxu0 %v803
        %805 = vmatprep.subr.mxu0 0.0
        %v806 = vand.u32 %v228, 4294901760
        %807 = vmatpush1.msra.mxu0 %v806
        %808 = vmatprep.subr.mxu0 0.0
        %v809 = vand.u32 %v259, 4294901760
        %810 = vmatpush2.msra.mxu0 %v809
        %811 = vmatprep.subr.mxu0 0.0
        %v812 = vand.u32 %v258, 4294901760
        %813 = vmatpush2.msra.mxu0 %v812
        %814 = vmatprep.subr.mxu0 0.0
        %v815 = vand.u32 %v257, 4294901760
        %816 = vmatpush2.msra.mxu0 %v815
        %817 = vmatprep.subr.mxu0 0.0
        %v818 = vand.u32 %v256, 4294901760
        %819 = vmatpush2.msra.mxu0 %v818
        %820 = vmatprep.subr.mxu0 0.0
        %v821 = vand.u32 %v255, 4294901760
        %822 = vmatpush2.msra.mxu0 %v821
        %823 = vmatprep.subr.mxu0 0.0
        %v824 = vand.u32 %v254, 4294901760
        %825 = vmatpush2.msra.mxu0 %v824
        %826 = vmatprep.subr.mxu0 0.0
        %v827 = vand.u32 %v253, 4294901760
        %828 = vmatpush2.msra.mxu0 %v827
        %829 = vmatprep.subr.mxu0 0.0
        %v830 = vand.u32 %v252, 4294901760
        %831 = vmatpush2.msra.mxu0 %v830
        %832 = vmatprep.subr.mxu0 0.0
        %v833 = vand.u32 %v251, 4294901760
        %834 = vmatpush2.msra.mxu0 %v833
        %835 = vmatprep.subr.mxu0 0.0
        %v836 = vand.u32 %v250, 4294901760
        %837 = vmatpush2.msra.mxu0 %v836
        %838 = vmatprep.subr.mxu0 0.0
        %v839 = vand.u32 %v249, 4294901760
        %840 = vmatpush2.msra.mxu0 %v839
        %841 = vmatprep.subr.mxu0 0.0
        %v842 = vand.u32 %v248, 4294901760
        %843 = vmatpush2.msra.mxu0 %v842
        %844 = vmatprep.subr.mxu0 0.0
        %v845 = vand.u32 %v247, 4294901760
        %846 = vmatpush2.msra.mxu0 %v845
        %847 = vmatprep.subr.mxu0 0.0
        %v848 = vand.u32 %v246, 4294901760
        %849 = vmatpush2.msra.mxu0 %v848
        %850 = vmatprep.subr.mxu0 0.0
        %v851 = vand.u32 %v245, 4294901760
        %852 = vmatpush2.msra.mxu0 %v851
        %853 = vmatprep.subr.mxu0 0.0
        %v854 = vand.u32 %v244, 4294901760
        %855 = vmatpush2.msra.mxu0 %v854
        %v856 = vand.u32 %v277, 4294901760
        %v857 = vsub.f32 %v277, %v856
        %v858 = vand.u32 %v857, 4294901760
        %859 = vmatprep.mubr.f32.mxu0 %v858
        %v860 = vand.u32 %v270, 4294901760
        %v861 = vsub.f32 %v270, %v860
        %v862 = vand.u32 %v861, 4294901760
        %863 = vmatmul.mubr.f32.gmra.mxu0 %v862
        %v864 = vpop.f32.mrf.mxu0
        %v865 = vadd.f32 %v757, %v864
        %v866 = vpop.f32.mrf.mxu0
        %867 = vdwg.mxu0
        %868 = vmatprep.subr.mxu0 0.0
        %v869 = vand.u32 %v243, 4294901760
        %v870 = vsub.f32 %v243, %v869
        %v871 = vand.u32 %v870, 4294901760
        %872 = vmatpush1.msra.mxu0 %v871
        %873 = vmatprep.subr.mxu0 0.0
        %v874 = vand.u32 %v242, 4294901760
        %v875 = vsub.f32 %v242, %v874
        %v876 = vand.u32 %v875, 4294901760
        %877 = vmatpush1.msra.mxu0 %v876
        %878 = vmatprep.subr.mxu0 0.0
        %v879 = vand.u32 %v241, 4294901760
        %v880 = vsub.f32 %v241, %v879
        %v881 = vand.u32 %v880, 4294901760
        %882 = vmatpush1.msra.mxu0 %v881
        %883 = vmatprep.subr.mxu0 0.0
        %v884 = vand.u32 %v240, 4294901760
        %v885 = vsub.f32 %v240, %v884
        %v886 = vand.u32 %v885, 4294901760
        %887 = vmatpush1.msra.mxu0 %v886
        %888 = vmatprep.subr.mxu0 0.0
        %v889 = vand.u32 %v239, 4294901760
        %v890 = vsub.f32 %v239, %v889
        %v891 = vand.u32 %v890, 4294901760
        %892 = vmatpush1.msra.mxu0 %v891
        %893 = vmatprep.subr.mxu0 0.0
        %v894 = vand.u32 %v238, 4294901760
        %v895 = vsub.f32 %v238, %v894
        %v896 = vand.u32 %v895, 4294901760
        %897 = vmatpush1.msra.mxu0 %v896
        %898 = vmatprep.subr.mxu0 0.0
        %v899 = vand.u32 %v237, 4294901760
        %v900 = vsub.f32 %v237, %v899
        %v901 = vand.u32 %v900, 4294901760
        %902 = vmatpush1.msra.mxu0 %v901
        %903 = vmatprep.subr.mxu0 0.0
        %v904 = vand.u32 %v236, 4294901760
        %v905 = vsub.f32 %v236, %v904
        %v906 = vand.u32 %v905, 4294901760
        %907 = vmatpush1.msra.mxu0 %v906
        %908 = vmatprep.subr.mxu0 0.0
        %v909 = vand.u32 %v235, 4294901760
        %v910 = vsub.f32 %v235, %v909
        %v911 = vand.u32 %v910, 4294901760
        %912 = vmatpush1.msra.mxu0 %v911
        %913 = vmatprep.subr.mxu0 0.0
        %v914 = vand.u32 %v234, 4294901760
        %v915 = vsub.f32 %v234, %v914
        %v916 = vand.u32 %v915, 4294901760
        %917 = vmatpush1.msra.mxu0 %v916
        %918 = vmatprep.subr.mxu0 0.0
        %v919 = vand.u32 %v233, 4294901760
        %v920 = vsub.f32 %v233, %v919
        %v921 = vand.u32 %v920, 4294901760
        %922 = vmatpush1.msra.mxu0 %v921
        %923 = vmatprep.subr.mxu0 0.0
        %v924 = vand.u32 %v232, 4294901760
        %v925 = vsub.f32 %v232, %v924
        %v926 = vand.u32 %v925, 4294901760
        %927 = vmatpush1.msra.mxu0 %v926
        %928 = vmatprep.subr.mxu0 0.0
        %v929 = vand.u32 %v231, 4294901760
        %v930 = vsub.f32 %v231, %v929
        %v931 = vand.u32 %v930, 4294901760
        %932 = vmatpush1.msra.mxu0 %v931
        %933 = vmatprep.subr.mxu0 0.0
        %v934 = vand.u32 %v230, 4294901760
        %v935 = vsub.f32 %v230, %v934
        %v936 = vand.u32 %v935, 4294901760
        %937 = vmatpush1.msra.mxu0 %v936
        %938 = vmatprep.subr.mxu0 0.0
        %v939 = vand.u32 %v229, 4294901760
        %v940 = vsub.f32 %v229, %v939
        %v941 = vand.u32 %v940, 4294901760
        %942 = vmatpush1.msra.mxu0 %v941
        %943 = vmatprep.subr.mxu0 0.0
        %v944 = vand.u32 %v228, 4294901760
        %v945 = vsub.f32 %v228, %v944
        %v946 = vand.u32 %v945, 4294901760
        %947 = vmatpush1.msra.mxu0 %v946
        %948 = vmatprep.subr.mxu0 0.0
        %v949 = vand.u32 %v259, 4294901760
        %v950 = vsub.f32 %v259, %v949
        %v951 = vand.u32 %v950, 4294901760
        %952 = vmatpush2.msra.mxu0 %v951
        %953 = vmatprep.subr.mxu0 0.0
        %v954 = vand.u32 %v258, 4294901760
        %v955 = vsub.f32 %v258, %v954
        %v956 = vand.u32 %v955, 4294901760
        %957 = vmatpush2.msra.mxu0 %v956
        %958 = vmatprep.subr.mxu0 0.0
        %v959 = vand.u32 %v257, 4294901760
        %v960 = vsub.f32 %v257, %v959
        %v961 = vand.u32 %v960, 4294901760
        %962 = vmatpush2.msra.mxu0 %v961
        %963 = vmatprep.subr.mxu0 0.0
        %v964 = vand.u32 %v256, 4294901760
        %v965 = vsub.f32 %v256, %v964
        %v966 = vand.u32 %v965, 4294901760
        %967 = vmatpush2.msra.mxu0 %v966
        %968 = vmatprep.subr.mxu0 0.0
        %v969 = vand.u32 %v255, 4294901760
        %v970 = vsub.f32 %v255, %v969
        %v971 = vand.u32 %v970, 4294901760
        %972 = vmatpush2.msra.mxu0 %v971
        %973 = vmatprep.subr.mxu0 0.0
        %v974 = vand.u32 %v254, 4294901760
        %v975 = vsub.f32 %v254, %v974
        %v976 = vand.u32 %v975, 4294901760
        %977 = vmatpush2.msra.mxu0 %v976
        %978 = vmatprep.subr.mxu0 0.0
        %v979 = vand.u32 %v253, 4294901760
        %v980 = vsub.f32 %v253, %v979
        %v981 = vand.u32 %v980, 4294901760
        %982 = vmatpush2.msra.mxu0 %v981
        %983 = vmatprep.subr.mxu0 0.0
        %v984 = vand.u32 %v252, 4294901760
        %v985 = vsub.f32 %v252, %v984
        %v986 = vand.u32 %v985, 4294901760
        %987 = vmatpush2.msra.mxu0 %v986
        %988 = vmatprep.subr.mxu0 0.0
        %v989 = vand.u32 %v251, 4294901760
        %v990 = vsub.f32 %v251, %v989
        %v991 = vand.u32 %v990, 4294901760
        %992 = vmatpush2.msra.mxu0 %v991
        %993 = vmatprep.subr.mxu0 0.0
        %v994 = vand.u32 %v250, 4294901760
        %v995 = vsub.f32 %v250, %v994
        %v996 = vand.u32 %v995, 4294901760
        %997 = vmatpush2.msra.mxu0 %v996
        %998 = vmatprep.subr.mxu0 0.0
        %v999 = vand.u32 %v249, 4294901760
        %v1000 = vsub.f32 %v249, %v999
        %v1001 = vand.u32 %v1000, 4294901760
        %1002 = vmatpush2.msra.mxu0 %v1001
        %1003 = vmatprep.subr.mxu0 0.0
        %v1004 = vand.u32 %v248, 4294901760
        %v1005 = vsub.f32 %v248, %v1004
        %v1006 = vand.u32 %v1005, 4294901760
        %1007 = vmatpush2.msra.mxu0 %v1006
        %1008 = vmatprep.subr.mxu0 0.0
        %v1009 = vand.u32 %v247, 4294901760
        %v1010 = vsub.f32 %v247, %v1009
        %v1011 = vand.u32 %v1010, 4294901760
        %1012 = vmatpush2.msra.mxu0 %v1011
        %1013 = vmatprep.subr.mxu0 0.0
        %v1014 = vand.u32 %v246, 4294901760
        %v1015 = vsub.f32 %v246, %v1014
        %v1016 = vand.u32 %v1015, 4294901760
        %1017 = vmatpush2.msra.mxu0 %v1016
        %1018 = vmatprep.subr.mxu0 0.0
        %v1019 = vand.u32 %v245, 4294901760
        %v1020 = vsub.f32 %v245, %v1019
        %v1021 = vand.u32 %v1020, 4294901760
        %1022 = vmatpush2.msra.mxu0 %v1021
        %1023 = vmatprep.subr.mxu0 0.0
        %v1024 = vand.u32 %v244, 4294901760
        %v1025 = vsub.f32 %v244, %v1024
        %v1026 = vand.u32 %v1025, 4294901760
        %1027 = vmatpush2.msra.mxu0 %v1026
        %v1028 = vand.u32 %v277, 4294901760
        %1029 = vmatprep.mubr.f32.mxu0 %v1028
        %v1030 = vand.u32 %v270, 4294901760
        %1031 = vmatmul.mubr.f32.gmra.mxu0 %v1030
        %v1032 = vpop.f32.mrf.mxu0
        %v1033 = vadd.f32 %v865, %v1032
        %v1034 = vpop.f32.mrf.mxu0
        %1035 = vdwg.mxu0
        %1036 = vmatprep.subr.mxu0 0.0
        %v1037 = vand.u32 %v243, 4294901760
        %1038 = vmatpush1.msra.mxu0 %v1037
        %1039 = vmatprep.subr.mxu0 0.0
        %v1040 = vand.u32 %v242, 4294901760
        %1041 = vmatpush1.msra.mxu0 %v1040
        %1042 = vmatprep.subr.mxu0 0.0
        %v1043 = vand.u32 %v241, 4294901760
        %1044 = vmatpush1.msra.mxu0 %v1043
        %1045 = vmatprep.subr.mxu0 0.0
        %v1046 = vand.u32 %v240, 4294901760
        %1047 = vmatpush1.msra.mxu0 %v1046
        %1048 = vmatprep.subr.mxu0 0.0
        %v1049 = vand.u32 %v239, 4294901760
        %1050 = vmatpush1.msra.mxu0 %v1049
        %1051 = vmatprep.subr.mxu0 0.0
        %v1052 = vand.u32 %v238, 4294901760
        %1053 = vmatpush1.msra.mxu0 %v1052
        %1054 = vmatprep.subr.mxu0 0.0
        %v1055 = vand.u32 %v237, 4294901760
        %1056 = vmatpush1.msra.mxu0 %v1055
        %1057 = vmatprep.subr.mxu0 0.0
        %v1058 = vand.u32 %v236, 4294901760
        %1059 = vmatpush1.msra.mxu0 %v1058
        %1060 = vmatprep.subr.mxu0 0.0
        %v1061 = vand.u32 %v235, 4294901760
        %1062 = vmatpush1.msra.mxu0 %v1061
        %1063 = vmatprep.subr.mxu0 0.0
        %v1064 = vand.u32 %v234, 4294901760
        %1065 = vmatpush1.msra.mxu0 %v1064
        %1066 = vmatprep.subr.mxu0 0.0
        %v1067 = vand.u32 %v233, 4294901760
        %1068 = vmatpush1.msra.mxu0 %v1067
        %1069 = vmatprep.subr.mxu0 0.0
        %v1070 = vand.u32 %v232, 4294901760
        %1071 = vmatpush1.msra.mxu0 %v1070
        %1072 = vmatprep.subr.mxu0 0.0
        %v1073 = vand.u32 %v231, 4294901760
        %1074 = vmatpush1.msra.mxu0 %v1073
        %1075 = vmatprep.subr.mxu0 0.0
        %v1076 = vand.u32 %v230, 4294901760
        %1077 = vmatpush1.msra.mxu0 %v1076
        %1078 = vmatprep.subr.mxu0 0.0
        %v1079 = vand.u32 %v229, 4294901760
        %1080 = vmatpush1.msra.mxu0 %v1079
        %1081 = vmatprep.subr.mxu0 0.0
        %v1082 = vand.u32 %v228, 4294901760
        %1083 = vmatpush1.msra.mxu0 %v1082
        %1084 = vmatprep.subr.mxu0 0.0
        %v1085 = vand.u32 %v259, 4294901760
        %1086 = vmatpush2.msra.mxu0 %v1085
        %1087 = vmatprep.subr.mxu0 0.0
        %v1088 = vand.u32 %v258, 4294901760
        %1089 = vmatpush2.msra.mxu0 %v1088
        %1090 = vmatprep.subr.mxu0 0.0
        %v1091 = vand.u32 %v257, 4294901760
        %1092 = vmatpush2.msra.mxu0 %v1091
        %1093 = vmatprep.subr.mxu0 0.0
        %v1094 = vand.u32 %v256, 4294901760
        %1095 = vmatpush2.msra.mxu0 %v1094
        %1096 = vmatprep.subr.mxu0 0.0
        %v1097 = vand.u32 %v255, 4294901760
        %1098 = vmatpush2.msra.mxu0 %v1097
        %1099 = vmatprep.subr.mxu0 0.0
        %v1100 = vand.u32 %v254, 4294901760
        %1101 = vmatpush2.msra.mxu0 %v1100
        %1102 = vmatprep.subr.mxu0 0.0
        %v1103 = vand.u32 %v253, 4294901760
        %1104 = vmatpush2.msra.mxu0 %v1103
        %1105 = vmatprep.subr.mxu0 0.0
        %v1106 = vand.u32 %v252, 4294901760
        %1107 = vmatpush2.msra.mxu0 %v1106
        %1108 = vmatprep.subr.mxu0 0.0
        %v1109 = vand.u32 %v251, 4294901760
        %1110 = vmatpush2.msra.mxu0 %v1109
        %1111 = vmatprep.subr.mxu0 0.0
        %v1112 = vand.u32 %v250, 4294901760
        %1113 = vmatpush2.msra.mxu0 %v1112
        %1114 = vmatprep.subr.mxu0 0.0
        %v1115 = vand.u32 %v249, 4294901760
        %1116 = vmatpush2.msra.mxu0 %v1115
        %1117 = vmatprep.subr.mxu0 0.0
        %v1118 = vand.u32 %v248, 4294901760
        %1119 = vmatpush2.msra.mxu0 %v1118
        %1120 = vmatprep.subr.mxu0 0.0
        %v1121 = vand.u32 %v247, 4294901760
        %1122 = vmatpush2.msra.mxu0 %v1121
        %1123 = vmatprep.subr.mxu0 0.0
        %v1124 = vand.u32 %v246, 4294901760
        %1125 = vmatpush2.msra.mxu0 %v1124
        %1126 = vmatprep.subr.mxu0 0.0
        %v1127 = vand.u32 %v245, 4294901760
        %1128 = vmatpush2.msra.mxu0 %v1127
        %1129 = vmatprep.subr.mxu0 0.0
        %v1130 = vand.u32 %v244, 4294901760
        %1131 = vmatpush2.msra.mxu0 %v1130
        %v1132 = vand.u32 %v277, 4294901760
        %1133 = vmatprep.mubr.f32.mxu0 %v1132
        %v1134 = vand.u32 %v270, 4294901760
        %1135 = vmatmul.mubr.f32.gmra.mxu0 %v1134
        %v1136 = vpop.f32.mrf.mxu0
        %v1137 = vadd.f32 %v1033, %v1136
        %v1138 = vpop.f32.mrf.mxu0
        %1139 = vdwg.mxu0
        %v1140 = vmul.f32 %v1137, 0.015625
        %vm1141 = vcmask 130048
        %v1143 = vsel %vm1141, %v1140, 0
        %v1146 = vsel %vm1141, %v228, 0
        %v1149 = vsel %vm1141, %v229, 0
        %v1152 = vsel %vm1141, %v230, 0
        %v1155 = vsel %vm1141, %v231, 0
        %v1158 = vsel %vm1141, %v232, 0
        %v1161 = vsel %vm1141, %v233, 0
        %v1164 = vsel %vm1141, %v234, 0
        %v1167 = vsel %vm1141, %v235, 0
        %v1170 = vsel %vm1141, %v236, 0
        %v1173 = vsel %vm1141, %v237, 0
        %v1176 = vsel %vm1141, %v238, 0
        %v1179 = vsel %vm1141, %v239, 0
        %v1182 = vsel %vm1141, %v240, 0
        %v1185 = vsel %vm1141, %v241, 0
        %v1188 = vsel %vm1141, %v242, 0
        %v1191 = vsel %vm1141, %v243, 0
        %v1194 = vsel %vm1141, %v244, 0
        %v1197 = vsel %vm1141, %v245, 0
        %v1200 = vsel %vm1141, %v246, 0
        %v1203 = vsel %vm1141, %v247, 0
        %v1206 = vsel %vm1141, %v248, 0
        %v1209 = vsel %vm1141, %v249, 0
        %v1212 = vsel %vm1141, %v250, 0
        %v1215 = vsel %vm1141, %v251, 0
        %v1218 = vsel %vm1141, %v252, 0
        %v1221 = vsel %vm1141, %v253, 0
        %v1224 = vsel %vm1141, %v254, 0
        %v1227 = vsel %vm1141, %v255, 0
        %v1230 = vsel %vm1141, %v256, 0
        %v1233 = vsel %vm1141, %v257, 0
        %v1236 = vsel %vm1141, %v258, 0
        %v1239 = vsel %vm1141, %v259, 0
        %1241 = vmatprep.subr.mxu0 0.0
        %v1242 = vand.u32 %v1191, 4294901760
        %1243 = vmatpush1.xpose.msra.mxu0 %v1242
        %1244 = vmatprep.subr.mxu0 0.0
        %v1245 = vand.u32 %v1188, 4294901760
        %1246 = vmatpush1.xpose.msra.mxu0 %v1245
        %1247 = vmatprep.subr.mxu0 0.0
        %v1248 = vand.u32 %v1185, 4294901760
        %1249 = vmatpush1.xpose.msra.mxu0 %v1248
        %1250 = vmatprep.subr.mxu0 0.0
        %v1251 = vand.u32 %v1182, 4294901760
        %1252 = vmatpush1.xpose.msra.mxu0 %v1251
        %1253 = vmatprep.subr.mxu0 0.0
        %v1254 = vand.u32 %v1179, 4294901760
        %1255 = vmatpush1.xpose.msra.mxu0 %v1254
        %1256 = vmatprep.subr.mxu0 0.0
        %v1257 = vand.u32 %v1176, 4294901760
        %1258 = vmatpush1.xpose.msra.mxu0 %v1257
        %1259 = vmatprep.subr.mxu0 0.0
        %v1260 = vand.u32 %v1173, 4294901760
        %1261 = vmatpush1.xpose.msra.mxu0 %v1260
        %1262 = vmatprep.subr.mxu0 0.0
        %v1263 = vand.u32 %v1170, 4294901760
        %1264 = vmatpush1.xpose.msra.mxu0 %v1263
        %1265 = vmatprep.subr.mxu0 0.0
        %v1266 = vand.u32 %v1167, 4294901760
        %1267 = vmatpush1.xpose.msra.mxu0 %v1266
        %1268 = vmatprep.subr.mxu0 0.0
        %v1269 = vand.u32 %v1164, 4294901760
        %1270 = vmatpush1.xpose.msra.mxu0 %v1269
        %1271 = vmatprep.subr.mxu0 0.0
        %v1272 = vand.u32 %v1161, 4294901760
        %1273 = vmatpush1.xpose.msra.mxu0 %v1272
        %1274 = vmatprep.subr.mxu0 0.0
        %v1275 = vand.u32 %v1158, 4294901760
        %1276 = vmatpush1.xpose.msra.mxu0 %v1275
        %1277 = vmatprep.subr.mxu0 0.0
        %v1278 = vand.u32 %v1155, 4294901760
        %1279 = vmatpush1.xpose.msra.mxu0 %v1278
        %1280 = vmatprep.subr.mxu0 0.0
        %v1281 = vand.u32 %v1152, 4294901760
        %1282 = vmatpush1.xpose.msra.mxu0 %v1281
        %1283 = vmatprep.subr.mxu0 0.0
        %v1284 = vand.u32 %v1149, 4294901760
        %1285 = vmatpush1.xpose.msra.mxu0 %v1284
        %1286 = vmatprep.subr.mxu0 0.0
        %v1287 = vand.u32 %v1146, 4294901760
        %1288 = vmatpush1.xpose.msra.mxu0 %v1287
        %1289 = vmatprep.subr.mxu0 0.0
        %v1290 = vand.u32 %v1239, 4294901760
        %1291 = vmatpush2.xpose.msra.mxu0 %v1290
        %1292 = vmatprep.subr.mxu0 0.0
        %v1293 = vand.u32 %v1236, 4294901760
        %1294 = vmatpush2.xpose.msra.mxu0 %v1293
        %1295 = vmatprep.subr.mxu0 0.0
        %v1296 = vand.u32 %v1233, 4294901760
        %1297 = vmatpush2.xpose.msra.mxu0 %v1296
        %1298 = vmatprep.subr.mxu0 0.0
        %v1299 = vand.u32 %v1230, 4294901760
        %1300 = vmatpush2.xpose.msra.mxu0 %v1299
        %1301 = vmatprep.subr.mxu0 0.0
        %v1302 = vand.u32 %v1227, 4294901760
        %1303 = vmatpush2.xpose.msra.mxu0 %v1302
        %1304 = vmatprep.subr.mxu0 0.0
        %v1305 = vand.u32 %v1224, 4294901760
        %1306 = vmatpush2.xpose.msra.mxu0 %v1305
        %1307 = vmatprep.subr.mxu0 0.0
        %v1308 = vand.u32 %v1221, 4294901760
        %1309 = vmatpush2.xpose.msra.mxu0 %v1308
        %1310 = vmatprep.subr.mxu0 0.0
        %v1311 = vand.u32 %v1218, 4294901760
        %1312 = vmatpush2.xpose.msra.mxu0 %v1311
        %1313 = vmatprep.subr.mxu0 0.0
        %v1314 = vand.u32 %v1215, 4294901760
        %1315 = vmatpush2.xpose.msra.mxu0 %v1314
        %1316 = vmatprep.subr.mxu0 0.0
        %v1317 = vand.u32 %v1212, 4294901760
        %1318 = vmatpush2.xpose.msra.mxu0 %v1317
        %1319 = vmatprep.subr.mxu0 0.0
        %v1320 = vand.u32 %v1209, 4294901760
        %1321 = vmatpush2.xpose.msra.mxu0 %v1320
        %1322 = vmatprep.subr.mxu0 0.0
        %v1323 = vand.u32 %v1206, 4294901760
        %1324 = vmatpush2.xpose.msra.mxu0 %v1323
        %1325 = vmatprep.subr.mxu0 0.0
        %v1326 = vand.u32 %v1203, 4294901760
        %1327 = vmatpush2.xpose.msra.mxu0 %v1326
        %1328 = vmatprep.subr.mxu0 0.0
        %v1329 = vand.u32 %v1200, 4294901760
        %1330 = vmatpush2.xpose.msra.mxu0 %v1329
        %1331 = vmatprep.subr.mxu0 0.0
        %v1332 = vand.u32 %v1197, 4294901760
        %1333 = vmatpush2.xpose.msra.mxu0 %v1332
        %1334 = vmatprep.subr.mxu0 0.0
        %v1335 = vand.u32 %v1194, 4294901760
        %1336 = vmatpush2.xpose.msra.mxu0 %v1335
        %1337 = vmatprep.mubr.f32.mxu0 0.0
        %v1338 = vand.u32 %v1143, 4294901760
        %v1339 = vsub.f32 %v1143, %v1338
        %v1340 = vand.u32 %v1339, 4294901760
        %v1341 = vsub.f32 %v1339, %v1340
        %v1342 = vand.u32 %v1341, 4294901760
        %1343 = vmatmul.mubr.f32.gmra.mxu0 %v1342
        %v1344 = vpop.f32.mrf.mxu0
        %v1345 = vadd.f32 0.0, %v1344
        %v1346 = vpop.f32.mrf.mxu0
        %v1347 = vadd.f32 0.0, %v1346
        %1348 = vdwg.mxu0
        %1349 = vmatprep.subr.mxu0 0.0
        %v1350 = vand.u32 %v1191, 4294901760
        %v1351 = vsub.f32 %v1191, %v1350
        %v1352 = vand.u32 %v1351, 4294901760
        %v1353 = vsub.f32 %v1351, %v1352
        %v1354 = vand.u32 %v1353, 4294901760
        %1355 = vmatpush1.xpose.msra.mxu0 %v1354
        %1356 = vmatprep.subr.mxu0 0.0
        %v1357 = vand.u32 %v1188, 4294901760
        %v1358 = vsub.f32 %v1188, %v1357
        %v1359 = vand.u32 %v1358, 4294901760
        %v1360 = vsub.f32 %v1358, %v1359
        %v1361 = vand.u32 %v1360, 4294901760
        %1362 = vmatpush1.xpose.msra.mxu0 %v1361
        %1363 = vmatprep.subr.mxu0 0.0
        %v1364 = vand.u32 %v1185, 4294901760
        %v1365 = vsub.f32 %v1185, %v1364
        %v1366 = vand.u32 %v1365, 4294901760
        %v1367 = vsub.f32 %v1365, %v1366
        %v1368 = vand.u32 %v1367, 4294901760
        %1369 = vmatpush1.xpose.msra.mxu0 %v1368
        %1370 = vmatprep.subr.mxu0 0.0
        %v1371 = vand.u32 %v1182, 4294901760
        %v1372 = vsub.f32 %v1182, %v1371
        %v1373 = vand.u32 %v1372, 4294901760
        %v1374 = vsub.f32 %v1372, %v1373
        %v1375 = vand.u32 %v1374, 4294901760
        %1376 = vmatpush1.xpose.msra.mxu0 %v1375
        %1377 = vmatprep.subr.mxu0 0.0
        %v1378 = vand.u32 %v1179, 4294901760
        %v1379 = vsub.f32 %v1179, %v1378
        %v1380 = vand.u32 %v1379, 4294901760
        %v1381 = vsub.f32 %v1379, %v1380
        %v1382 = vand.u32 %v1381, 4294901760
        %1383 = vmatpush1.xpose.msra.mxu0 %v1382
        %1384 = vmatprep.subr.mxu0 0.0
        %v1385 = vand.u32 %v1176, 4294901760
        %v1386 = vsub.f32 %v1176, %v1385
        %v1387 = vand.u32 %v1386, 4294901760
        %v1388 = vsub.f32 %v1386, %v1387
        %v1389 = vand.u32 %v1388, 4294901760
        %1390 = vmatpush1.xpose.msra.mxu0 %v1389
        %1391 = vmatprep.subr.mxu0 0.0
        %v1392 = vand.u32 %v1173, 4294901760
        %v1393 = vsub.f32 %v1173, %v1392
        %v1394 = vand.u32 %v1393, 4294901760
        %v1395 = vsub.f32 %v1393, %v1394
        %v1396 = vand.u32 %v1395, 4294901760
        %1397 = vmatpush1.xpose.msra.mxu0 %v1396
        %1398 = vmatprep.subr.mxu0 0.0
        %v1399 = vand.u32 %v1170, 4294901760
        %v1400 = vsub.f32 %v1170, %v1399
        %v1401 = vand.u32 %v1400, 4294901760
        %v1402 = vsub.f32 %v1400, %v1401
        %v1403 = vand.u32 %v1402, 4294901760
        %1404 = vmatpush1.xpose.msra.mxu0 %v1403
        %1405 = vmatprep.subr.mxu0 0.0
        %v1406 = vand.u32 %v1167, 4294901760
        %v1407 = vsub.f32 %v1167, %v1406
        %v1408 = vand.u32 %v1407, 4294901760
        %v1409 = vsub.f32 %v1407, %v1408
        %v1410 = vand.u32 %v1409, 4294901760
        %1411 = vmatpush1.xpose.msra.mxu0 %v1410
        %1412 = vmatprep.subr.mxu0 0.0
        %v1413 = vand.u32 %v1164, 4294901760
        %v1414 = vsub.f32 %v1164, %v1413
        %v1415 = vand.u32 %v1414, 4294901760
        %v1416 = vsub.f32 %v1414, %v1415
        %v1417 = vand.u32 %v1416, 4294901760
        %1418 = vmatpush1.xpose.msra.mxu0 %v1417
        %1419 = vmatprep.subr.mxu0 0.0
        %v1420 = vand.u32 %v1161, 4294901760
        %v1421 = vsub.f32 %v1161, %v1420
        %v1422 = vand.u32 %v1421, 4294901760
        %v1423 = vsub.f32 %v1421, %v1422
        %v1424 = vand.u32 %v1423, 4294901760
        %1425 = vmatpush1.xpose.msra.mxu0 %v1424
        %1426 = vmatprep.subr.mxu0 0.0
        %v1427 = vand.u32 %v1158, 4294901760
        %v1428 = vsub.f32 %v1158, %v1427
        %v1429 = vand.u32 %v1428, 4294901760
        %v1430 = vsub.f32 %v1428, %v1429
        %v1431 = vand.u32 %v1430, 4294901760
        %1432 = vmatpush1.xpose.msra.mxu0 %v1431
        %1433 = vmatprep.subr.mxu0 0.0
        %v1434 = vand.u32 %v1155, 4294901760
        %v1435 = vsub.f32 %v1155, %v1434
        %v1436 = vand.u32 %v1435, 4294901760
        %v1437 = vsub.f32 %v1435, %v1436
        %v1438 = vand.u32 %v1437, 4294901760
        %1439 = vmatpush1.xpose.msra.mxu0 %v1438
        %1440 = vmatprep.subr.mxu0 0.0
        %v1441 = vand.u32 %v1152, 4294901760
        %v1442 = vsub.f32 %v1152, %v1441
        %v1443 = vand.u32 %v1442, 4294901760
        %v1444 = vsub.f32 %v1442, %v1443
        %v1445 = vand.u32 %v1444, 4294901760
        %1446 = vmatpush1.xpose.msra.mxu0 %v1445
        %1447 = vmatprep.subr.mxu0 0.0
        %v1448 = vand.u32 %v1149, 4294901760
        %v1449 = vsub.f32 %v1149, %v1448
        %v1450 = vand.u32 %v1449, 4294901760
        %v1451 = vsub.f32 %v1449, %v1450
        %v1452 = vand.u32 %v1451, 4294901760
        %1453 = vmatpush1.xpose.msra.mxu0 %v1452
        %1454 = vmatprep.subr.mxu0 0.0
        %v1455 = vand.u32 %v1146, 4294901760
        %v1456 = vsub.f32 %v1146, %v1455
        %v1457 = vand.u32 %v1456, 4294901760
        %v1458 = vsub.f32 %v1456, %v1457
        %v1459 = vand.u32 %v1458, 4294901760
        %1460 = vmatpush1.xpose.msra.mxu0 %v1459
        %1461 = vmatprep.subr.mxu0 0.0
        %v1462 = vand.u32 %v1239, 4294901760
        %v1463 = vsub.f32 %v1239, %v1462
        %v1464 = vand.u32 %v1463, 4294901760
        %v1465 = vsub.f32 %v1463, %v1464
        %v1466 = vand.u32 %v1465, 4294901760
        %1467 = vmatpush2.xpose.msra.mxu0 %v1466
        %1468 = vmatprep.subr.mxu0 0.0
        %v1469 = vand.u32 %v1236, 4294901760
        %v1470 = vsub.f32 %v1236, %v1469
        %v1471 = vand.u32 %v1470, 4294901760
        %v1472 = vsub.f32 %v1470, %v1471
        %v1473 = vand.u32 %v1472, 4294901760
        %1474 = vmatpush2.xpose.msra.mxu0 %v1473
        %1475 = vmatprep.subr.mxu0 0.0
        %v1476 = vand.u32 %v1233, 4294901760
        %v1477 = vsub.f32 %v1233, %v1476
        %v1478 = vand.u32 %v1477, 4294901760
        %v1479 = vsub.f32 %v1477, %v1478
        %v1480 = vand.u32 %v1479, 4294901760
        %1481 = vmatpush2.xpose.msra.mxu0 %v1480
        %1482 = vmatprep.subr.mxu0 0.0
        %v1483 = vand.u32 %v1230, 4294901760
        %v1484 = vsub.f32 %v1230, %v1483
        %v1485 = vand.u32 %v1484, 4294901760
        %v1486 = vsub.f32 %v1484, %v1485
        %v1487 = vand.u32 %v1486, 4294901760
        %1488 = vmatpush2.xpose.msra.mxu0 %v1487
        %1489 = vmatprep.subr.mxu0 0.0
        %v1490 = vand.u32 %v1227, 4294901760
        %v1491 = vsub.f32 %v1227, %v1490
        %v1492 = vand.u32 %v1491, 4294901760
        %v1493 = vsub.f32 %v1491, %v1492
        %v1494 = vand.u32 %v1493, 4294901760
        %1495 = vmatpush2.xpose.msra.mxu0 %v1494
        %1496 = vmatprep.subr.mxu0 0.0
        %v1497 = vand.u32 %v1224, 4294901760
        %v1498 = vsub.f32 %v1224, %v1497
        %v1499 = vand.u32 %v1498, 4294901760
        %v1500 = vsub.f32 %v1498, %v1499
        %v1501 = vand.u32 %v1500, 4294901760
        %1502 = vmatpush2.xpose.msra.mxu0 %v1501
        %1503 = vmatprep.subr.mxu0 0.0
        %v1504 = vand.u32 %v1221, 4294901760
        %v1505 = vsub.f32 %v1221, %v1504
        %v1506 = vand.u32 %v1505, 4294901760
        %v1507 = vsub.f32 %v1505, %v1506
        %v1508 = vand.u32 %v1507, 4294901760
        %1509 = vmatpush2.xpose.msra.mxu0 %v1508
        %1510 = vmatprep.subr.mxu0 0.0
        %v1511 = vand.u32 %v1218, 4294901760
        %v1512 = vsub.f32 %v1218, %v1511
        %v1513 = vand.u32 %v1512, 4294901760
        %v1514 = vsub.f32 %v1512, %v1513
        %v1515 = vand.u32 %v1514, 4294901760
        %1516 = vmatpush2.xpose.msra.mxu0 %v1515
        %1517 = vmatprep.subr.mxu0 0.0
        %v1518 = vand.u32 %v1215, 4294901760
        %v1519 = vsub.f32 %v1215, %v1518
        %v1520 = vand.u32 %v1519, 4294901760
        %v1521 = vsub.f32 %v1519, %v1520
        %v1522 = vand.u32 %v1521, 4294901760
        %1523 = vmatpush2.xpose.msra.mxu0 %v1522
        %1524 = vmatprep.subr.mxu0 0.0
        %v1525 = vand.u32 %v1212, 4294901760
        %v1526 = vsub.f32 %v1212, %v1525
        %v1527 = vand.u32 %v1526, 4294901760
        %v1528 = vsub.f32 %v1526, %v1527
        %v1529 = vand.u32 %v1528, 4294901760
        %1530 = vmatpush2.xpose.msra.mxu0 %v1529
        %1531 = vmatprep.subr.mxu0 0.0
        %v1532 = vand.u32 %v1209, 4294901760
        %v1533 = vsub.f32 %v1209, %v1532
        %v1534 = vand.u32 %v1533, 4294901760
        %v1535 = vsub.f32 %v1533, %v1534
        %v1536 = vand.u32 %v1535, 4294901760
        %1537 = vmatpush2.xpose.msra.mxu0 %v1536
        %1538 = vmatprep.subr.mxu0 0.0
        %v1539 = vand.u32 %v1206, 4294901760
        %v1540 = vsub.f32 %v1206, %v1539
        %v1541 = vand.u32 %v1540, 4294901760
        %v1542 = vsub.f32 %v1540, %v1541
        %v1543 = vand.u32 %v1542, 4294901760
        %1544 = vmatpush2.xpose.msra.mxu0 %v1543
        %1545 = vmatprep.subr.mxu0 0.0
        %v1546 = vand.u32 %v1203, 4294901760
        %v1547 = vsub.f32 %v1203, %v1546
        %v1548 = vand.u32 %v1547, 4294901760
        %v1549 = vsub.f32 %v1547, %v1548
        %v1550 = vand.u32 %v1549, 4294901760
        %1551 = vmatpush2.xpose.msra.mxu0 %v1550
        %1552 = vmatprep.subr.mxu0 0.0
        %v1553 = vand.u32 %v1200, 4294901760
        %v1554 = vsub.f32 %v1200, %v1553
        %v1555 = vand.u32 %v1554, 4294901760
        %v1556 = vsub.f32 %v1554, %v1555
        %v1557 = vand.u32 %v1556, 4294901760
        %1558 = vmatpush2.xpose.msra.mxu0 %v1557
        %1559 = vmatprep.subr.mxu0 0.0
        %v1560 = vand.u32 %v1197, 4294901760
        %v1561 = vsub.f32 %v1197, %v1560
        %v1562 = vand.u32 %v1561, 4294901760
        %v1563 = vsub.f32 %v1561, %v1562
        %v1564 = vand.u32 %v1563, 4294901760
        %1565 = vmatpush2.xpose.msra.mxu0 %v1564
        %1566 = vmatprep.subr.mxu0 0.0
        %v1567 = vand.u32 %v1194, 4294901760
        %v1568 = vsub.f32 %v1194, %v1567
        %v1569 = vand.u32 %v1568, 4294901760
        %v1570 = vsub.f32 %v1568, %v1569
        %v1571 = vand.u32 %v1570, 4294901760
        %1572 = vmatpush2.xpose.msra.mxu0 %v1571
        %1573 = vmatprep.mubr.f32.mxu0 0.0
        %v1574 = vand.u32 %v1143, 4294901760
        %1575 = vmatmul.mubr.f32.gmra.mxu0 %v1574
        %v1576 = vpop.f32.mrf.mxu0
        %v1577 = vadd.f32 %v1345, %v1576
        %v1578 = vpop.f32.mrf.mxu0
        %v1579 = vadd.f32 %v1347, %v1578
        %1580 = vdwg.mxu0
        %1581 = vmatprep.subr.mxu0 0.0
        %v1582 = vand.u32 %v1191, 4294901760
        %v1583 = vsub.f32 %v1191, %v1582
        %1584 = vmatpush1.xpose.msra.mxu0 %v1583
        %1585 = vmatprep.subr.mxu0 0.0
        %v1586 = vand.u32 %v1188, 4294901760
        %v1587 = vsub.f32 %v1188, %v1586
        %1588 = vmatpush1.xpose.msra.mxu0 %v1587
        %1589 = vmatprep.subr.mxu0 0.0
        %v1590 = vand.u32 %v1185, 4294901760
        %v1591 = vsub.f32 %v1185, %v1590
        %1592 = vmatpush1.xpose.msra.mxu0 %v1591
        %1593 = vmatprep.subr.mxu0 0.0
        %v1594 = vand.u32 %v1182, 4294901760
        %v1595 = vsub.f32 %v1182, %v1594
        %1596 = vmatpush1.xpose.msra.mxu0 %v1595
        %1597 = vmatprep.subr.mxu0 0.0
        %v1598 = vand.u32 %v1179, 4294901760
        %v1599 = vsub.f32 %v1179, %v1598
        %1600 = vmatpush1.xpose.msra.mxu0 %v1599
        %1601 = vmatprep.subr.mxu0 0.0
        %v1602 = vand.u32 %v1176, 4294901760
        %v1603 = vsub.f32 %v1176, %v1602
        %1604 = vmatpush1.xpose.msra.mxu0 %v1603
        %1605 = vmatprep.subr.mxu0 0.0
        %v1606 = vand.u32 %v1173, 4294901760
        %v1607 = vsub.f32 %v1173, %v1606
        %1608 = vmatpush1.xpose.msra.mxu0 %v1607
        %1609 = vmatprep.subr.mxu0 0.0
        %v1610 = vand.u32 %v1170, 4294901760
        %v1611 = vsub.f32 %v1170, %v1610
        %1612 = vmatpush1.xpose.msra.mxu0 %v1611
        %1613 = vmatprep.subr.mxu0 0.0
        %v1614 = vand.u32 %v1167, 4294901760
        %v1615 = vsub.f32 %v1167, %v1614
        %1616 = vmatpush1.xpose.msra.mxu0 %v1615
        %1617 = vmatprep.subr.mxu0 0.0
        %v1618 = vand.u32 %v1164, 4294901760
        %v1619 = vsub.f32 %v1164, %v1618
        %1620 = vmatpush1.xpose.msra.mxu0 %v1619
        %1621 = vmatprep.subr.mxu0 0.0
        %v1622 = vand.u32 %v1161, 4294901760
        %v1623 = vsub.f32 %v1161, %v1622
        %1624 = vmatpush1.xpose.msra.mxu0 %v1623
        %1625 = vmatprep.subr.mxu0 0.0
        %v1626 = vand.u32 %v1158, 4294901760
        %v1627 = vsub.f32 %v1158, %v1626
        %1628 = vmatpush1.xpose.msra.mxu0 %v1627
        %1629 = vmatprep.subr.mxu0 0.0
        %v1630 = vand.u32 %v1155, 4294901760
        %v1631 = vsub.f32 %v1155, %v1630
        %1632 = vmatpush1.xpose.msra.mxu0 %v1631
        %1633 = vmatprep.subr.mxu0 0.0
        %v1634 = vand.u32 %v1152, 4294901760
        %v1635 = vsub.f32 %v1152, %v1634
        %1636 = vmatpush1.xpose.msra.mxu0 %v1635
        %1637 = vmatprep.subr.mxu0 0.0
        %v1638 = vand.u32 %v1149, 4294901760
        %v1639 = vsub.f32 %v1149, %v1638
        %1640 = vmatpush1.xpose.msra.mxu0 %v1639
        %1641 = vmatprep.subr.mxu0 0.0
        %v1642 = vand.u32 %v1146, 4294901760
        %v1643 = vsub.f32 %v1146, %v1642
        %1644 = vmatpush1.xpose.msra.mxu0 %v1643
        %1645 = vmatprep.subr.mxu0 0.0
        %v1646 = vand.u32 %v1239, 4294901760
        %v1647 = vsub.f32 %v1239, %v1646
        %1648 = vmatpush2.xpose.msra.mxu0 %v1647
        %1649 = vmatprep.subr.mxu0 0.0
        %v1650 = vand.u32 %v1236, 4294901760
        %v1651 = vsub.f32 %v1236, %v1650
        %1652 = vmatpush2.xpose.msra.mxu0 %v1651
        %1653 = vmatprep.subr.mxu0 0.0
        %v1654 = vand.u32 %v1233, 4294901760
        %v1655 = vsub.f32 %v1233, %v1654
        %1656 = vmatpush2.xpose.msra.mxu0 %v1655
        %1657 = vmatprep.subr.mxu0 0.0
        %v1658 = vand.u32 %v1230, 4294901760
        %v1659 = vsub.f32 %v1230, %v1658
        %1660 = vmatpush2.xpose.msra.mxu0 %v1659
        %1661 = vmatprep.subr.mxu0 0.0
        %v1662 = vand.u32 %v1227, 4294901760
        %v1663 = vsub.f32 %v1227, %v1662
        %1664 = vmatpush2.xpose.msra.mxu0 %v1663
        %1665 = vmatprep.subr.mxu0 0.0
        %v1666 = vand.u32 %v1224, 4294901760
        %v1667 = vsub.f32 %v1224, %v1666
        %1668 = vmatpush2.xpose.msra.mxu0 %v1667
        %1669 = vmatprep.subr.mxu0 0.0
        %v1670 = vand.u32 %v1221, 4294901760
        %v1671 = vsub.f32 %v1221, %v1670
        %1672 = vmatpush2.xpose.msra.mxu0 %v1671
        %1673 = vmatprep.subr.mxu0 0.0
        %v1674 = vand.u32 %v1218, 4294901760
        %v1675 = vsub.f32 %v1218, %v1674
        %1676 = vmatpush2.xpose.msra.mxu0 %v1675
        %1677 = vmatprep.subr.mxu0 0.0
        %v1678 = vand.u32 %v1215, 4294901760
        %v1679 = vsub.f32 %v1215, %v1678
        %1680 = vmatpush2.xpose.msra.mxu0 %v1679
        %1681 = vmatprep.subr.mxu0 0.0
        %v1682 = vand.u32 %v1212, 4294901760
        %v1683 = vsub.f32 %v1212, %v1682
        %1684 = vmatpush2.xpose.msra.mxu0 %v1683
        %1685 = vmatprep.subr.mxu0 0.0
        %v1686 = vand.u32 %v1209, 4294901760
        %v1687 = vsub.f32 %v1209, %v1686
        %1688 = vmatpush2.xpose.msra.mxu0 %v1687
        %1689 = vmatprep.subr.mxu0 0.0
        %v1690 = vand.u32 %v1206, 4294901760
        %v1691 = vsub.f32 %v1206, %v1690
        %1692 = vmatpush2.xpose.msra.mxu0 %v1691
        %1693 = vmatprep.subr.mxu0 0.0
        %v1694 = vand.u32 %v1203, 4294901760
        %v1695 = vsub.f32 %v1203, %v1694
        %1696 = vmatpush2.xpose.msra.mxu0 %v1695
        %1697 = vmatprep.subr.mxu0 0.0
        %v1698 = vand.u32 %v1200, 4294901760
        %v1699 = vsub.f32 %v1200, %v1698
        %1700 = vmatpush2.xpose.msra.mxu0 %v1699
        %1701 = vmatprep.subr.mxu0 0.0
        %v1702 = vand.u32 %v1197, 4294901760
        %v1703 = vsub.f32 %v1197, %v1702
        %1704 = vmatpush2.xpose.msra.mxu0 %v1703
        %1705 = vmatprep.subr.mxu0 0.0
        %v1706 = vand.u32 %v1194, 4294901760
        %v1707 = vsub.f32 %v1194, %v1706
        %1708 = vmatpush2.xpose.msra.mxu0 %v1707
        %1709 = vmatprep.mubr.f32.mxu0 0.0
        %v1710 = vand.u32 %v1143, 4294901760
        %v1711 = vsub.f32 %v1143, %v1710
        %1712 = vmatmul.mubr.f32.gmra.mxu0 %v1711
        %v1713 = vpop.f32.mrf.mxu0
        %v1714 = vadd.f32 %v1577, %v1713
        %v1715 = vpop.f32.mrf.mxu0
        %v1716 = vadd.f32 %v1579, %v1715
        %1717 = vdwg.mxu0
        %1718 = vmatprep.subr.mxu0 0.0
        %v1719 = vand.u32 %v1191, 4294901760
        %1720 = vmatpush1.xpose.msra.mxu0 %v1719
        %1721 = vmatprep.subr.mxu0 0.0
        %v1722 = vand.u32 %v1188, 4294901760
        %1723 = vmatpush1.xpose.msra.mxu0 %v1722
        %1724 = vmatprep.subr.mxu0 0.0
        %v1725 = vand.u32 %v1185, 4294901760
        %1726 = vmatpush1.xpose.msra.mxu0 %v1725
        %1727 = vmatprep.subr.mxu0 0.0
        %v1728 = vand.u32 %v1182, 4294901760
        %1729 = vmatpush1.xpose.msra.mxu0 %v1728
        %1730 = vmatprep.subr.mxu0 0.0
        %v1731 = vand.u32 %v1179, 4294901760
        %1732 = vmatpush1.xpose.msra.mxu0 %v1731
        %1733 = vmatprep.subr.mxu0 0.0
        %v1734 = vand.u32 %v1176, 4294901760
        %1735 = vmatpush1.xpose.msra.mxu0 %v1734
        %1736 = vmatprep.subr.mxu0 0.0
        %v1737 = vand.u32 %v1173, 4294901760
        %1738 = vmatpush1.xpose.msra.mxu0 %v1737
        %1739 = vmatprep.subr.mxu0 0.0
        %v1740 = vand.u32 %v1170, 4294901760
        %1741 = vmatpush1.xpose.msra.mxu0 %v1740
        %1742 = vmatprep.subr.mxu0 0.0
        %v1743 = vand.u32 %v1167, 4294901760
        %1744 = vmatpush1.xpose.msra.mxu0 %v1743
        %1745 = vmatprep.subr.mxu0 0.0
        %v1746 = vand.u32 %v1164, 4294901760
        %1747 = vmatpush1.xpose.msra.mxu0 %v1746
        %1748 = vmatprep.subr.mxu0 0.0
        %v1749 = vand.u32 %v1161, 4294901760
        %1750 = vmatpush1.xpose.msra.mxu0 %v1749
        %1751 = vmatprep.subr.mxu0 0.0
        %v1752 = vand.u32 %v1158, 4294901760
        %1753 = vmatpush1.xpose.msra.mxu0 %v1752
        %1754 = vmatprep.subr.mxu0 0.0
        %v1755 = vand.u32 %v1155, 4294901760
        %1756 = vmatpush1.xpose.msra.mxu0 %v1755
        %1757 = vmatprep.subr.mxu0 0.0
        %v1758 = vand.u32 %v1152, 4294901760
        %1759 = vmatpush1.xpose.msra.mxu0 %v1758
        %1760 = vmatprep.subr.mxu0 0.0
        %v1761 = vand.u32 %v1149, 4294901760
        %1762 = vmatpush1.xpose.msra.mxu0 %v1761
        %1763 = vmatprep.subr.mxu0 0.0
        %v1764 = vand.u32 %v1146, 4294901760
        %1765 = vmatpush1.xpose.msra.mxu0 %v1764
        %1766 = vmatprep.subr.mxu0 0.0
        %v1767 = vand.u32 %v1239, 4294901760
        %1768 = vmatpush2.xpose.msra.mxu0 %v1767
        %1769 = vmatprep.subr.mxu0 0.0
        %v1770 = vand.u32 %v1236, 4294901760
        %1771 = vmatpush2.xpose.msra.mxu0 %v1770
        %1772 = vmatprep.subr.mxu0 0.0
        %v1773 = vand.u32 %v1233, 4294901760
        %1774 = vmatpush2.xpose.msra.mxu0 %v1773
        %1775 = vmatprep.subr.mxu0 0.0
        %v1776 = vand.u32 %v1230, 4294901760
        %1777 = vmatpush2.xpose.msra.mxu0 %v1776
        %1778 = vmatprep.subr.mxu0 0.0
        %v1779 = vand.u32 %v1227, 4294901760
        %1780 = vmatpush2.xpose.msra.mxu0 %v1779
        %1781 = vmatprep.subr.mxu0 0.0
        %v1782 = vand.u32 %v1224, 4294901760
        %1783 = vmatpush2.xpose.msra.mxu0 %v1782
        %1784 = vmatprep.subr.mxu0 0.0
        %v1785 = vand.u32 %v1221, 4294901760
        %1786 = vmatpush2.xpose.msra.mxu0 %v1785
        %1787 = vmatprep.subr.mxu0 0.0
        %v1788 = vand.u32 %v1218, 4294901760
        %1789 = vmatpush2.xpose.msra.mxu0 %v1788
        %1790 = vmatprep.subr.mxu0 0.0
        %v1791 = vand.u32 %v1215, 4294901760
        %1792 = vmatpush2.xpose.msra.mxu0 %v1791
        %1793 = vmatprep.subr.mxu0 0.0
        %v1794 = vand.u32 %v1212, 4294901760
        %1795 = vmatpush2.xpose.msra.mxu0 %v1794
        %1796 = vmatprep.subr.mxu0 0.0
        %v1797 = vand.u32 %v1209, 4294901760
        %1798 = vmatpush2.xpose.msra.mxu0 %v1797
        %1799 = vmatprep.subr.mxu0 0.0
        %v1800 = vand.u32 %v1206, 4294901760
        %1801 = vmatpush2.xpose.msra.mxu0 %v1800
        %1802 = vmatprep.subr.mxu0 0.0
        %v1803 = vand.u32 %v1203, 4294901760
        %1804 = vmatpush2.xpose.msra.mxu0 %v1803
        %1805 = vmatprep.subr.mxu0 0.0
        %v1806 = vand.u32 %v1200, 4294901760
        %1807 = vmatpush2.xpose.msra.mxu0 %v1806
        %1808 = vmatprep.subr.mxu0 0.0
        %v1809 = vand.u32 %v1197, 4294901760
        %1810 = vmatpush2.xpose.msra.mxu0 %v1809
        %1811 = vmatprep.subr.mxu0 0.0
        %v1812 = vand.u32 %v1194, 4294901760
        %1813 = vmatpush2.xpose.msra.mxu0 %v1812
        %1814 = vmatprep.mubr.f32.mxu0 0.0
        %v1815 = vand.u32 %v1143, 4294901760
        %v1816 = vsub.f32 %v1143, %v1815
        %v1817 = vand.u32 %v1816, 4294901760
        %1818 = vmatmul.mubr.f32.gmra.mxu0 %v1817
        %v1819 = vpop.f32.mrf.mxu0
        %v1820 = vadd.f32 %v1714, %v1819
        %v1821 = vpop.f32.mrf.mxu0
        %v1822 = vadd.f32 %v1716, %v1821
        %1823 = vdwg.mxu0
        %1824 = vmatprep.subr.mxu0 0.0
        %v1825 = vand.u32 %v1191, 4294901760
        %v1826 = vsub.f32 %v1191, %v1825
        %v1827 = vand.u32 %v1826, 4294901760
        %1828 = vmatpush1.xpose.msra.mxu0 %v1827
        %1829 = vmatprep.subr.mxu0 0.0
        %v1830 = vand.u32 %v1188, 4294901760
        %v1831 = vsub.f32 %v1188, %v1830
        %v1832 = vand.u32 %v1831, 4294901760
        %1833 = vmatpush1.xpose.msra.mxu0 %v1832
        %1834 = vmatprep.subr.mxu0 0.0
        %v1835 = vand.u32 %v1185, 4294901760
        %v1836 = vsub.f32 %v1185, %v1835
        %v1837 = vand.u32 %v1836, 4294901760
        %1838 = vmatpush1.xpose.msra.mxu0 %v1837
        %1839 = vmatprep.subr.mxu0 0.0
        %v1840 = vand.u32 %v1182, 4294901760
        %v1841 = vsub.f32 %v1182, %v1840
        %v1842 = vand.u32 %v1841, 4294901760
        %1843 = vmatpush1.xpose.msra.mxu0 %v1842
        %1844 = vmatprep.subr.mxu0 0.0
        %v1845 = vand.u32 %v1179, 4294901760
        %v1846 = vsub.f32 %v1179, %v1845
        %v1847 = vand.u32 %v1846, 4294901760
        %1848 = vmatpush1.xpose.msra.mxu0 %v1847
        %1849 = vmatprep.subr.mxu0 0.0
        %v1850 = vand.u32 %v1176, 4294901760
        %v1851 = vsub.f32 %v1176, %v1850
        %v1852 = vand.u32 %v1851, 4294901760
        %1853 = vmatpush1.xpose.msra.mxu0 %v1852
        %1854 = vmatprep.subr.mxu0 0.0
        %v1855 = vand.u32 %v1173, 4294901760
        %v1856 = vsub.f32 %v1173, %v1855
        %v1857 = vand.u32 %v1856, 4294901760
        %1858 = vmatpush1.xpose.msra.mxu0 %v1857
        %1859 = vmatprep.subr.mxu0 0.0
        %v1860 = vand.u32 %v1170, 4294901760
        %v1861 = vsub.f32 %v1170, %v1860
        %v1862 = vand.u32 %v1861, 4294901760
        %1863 = vmatpush1.xpose.msra.mxu0 %v1862
        %1864 = vmatprep.subr.mxu0 0.0
        %v1865 = vand.u32 %v1167, 4294901760
        %v1866 = vsub.f32 %v1167, %v1865
        %v1867 = vand.u32 %v1866, 4294901760
        %1868 = vmatpush1.xpose.msra.mxu0 %v1867
        %1869 = vmatprep.subr.mxu0 0.0
        %v1870 = vand.u32 %v1164, 4294901760
        %v1871 = vsub.f32 %v1164, %v1870
        %v1872 = vand.u32 %v1871, 4294901760
        %1873 = vmatpush1.xpose.msra.mxu0 %v1872
        %1874 = vmatprep.subr.mxu0 0.0
        %v1875 = vand.u32 %v1161, 4294901760
        %v1876 = vsub.f32 %v1161, %v1875
        %v1877 = vand.u32 %v1876, 4294901760
        %1878 = vmatpush1.xpose.msra.mxu0 %v1877
        %1879 = vmatprep.subr.mxu0 0.0
        %v1880 = vand.u32 %v1158, 4294901760
        %v1881 = vsub.f32 %v1158, %v1880
        %v1882 = vand.u32 %v1881, 4294901760
        %1883 = vmatpush1.xpose.msra.mxu0 %v1882
        %1884 = vmatprep.subr.mxu0 0.0
        %v1885 = vand.u32 %v1155, 4294901760
        %v1886 = vsub.f32 %v1155, %v1885
        %v1887 = vand.u32 %v1886, 4294901760
        %1888 = vmatpush1.xpose.msra.mxu0 %v1887
        %1889 = vmatprep.subr.mxu0 0.0
        %v1890 = vand.u32 %v1152, 4294901760
        %v1891 = vsub.f32 %v1152, %v1890
        %v1892 = vand.u32 %v1891, 4294901760
        %1893 = vmatpush1.xpose.msra.mxu0 %v1892
        %1894 = vmatprep.subr.mxu0 0.0
        %v1895 = vand.u32 %v1149, 4294901760
        %v1896 = vsub.f32 %v1149, %v1895
        %v1897 = vand.u32 %v1896, 4294901760
        %1898 = vmatpush1.xpose.msra.mxu0 %v1897
        %1899 = vmatprep.subr.mxu0 0.0
        %v1900 = vand.u32 %v1146, 4294901760
        %v1901 = vsub.f32 %v1146, %v1900
        %v1902 = vand.u32 %v1901, 4294901760
        %1903 = vmatpush1.xpose.msra.mxu0 %v1902
        %1904 = vmatprep.subr.mxu0 0.0
        %v1905 = vand.u32 %v1239, 4294901760
        %v1906 = vsub.f32 %v1239, %v1905
        %v1907 = vand.u32 %v1906, 4294901760
        %1908 = vmatpush2.xpose.msra.mxu0 %v1907
        %1909 = vmatprep.subr.mxu0 0.0
        %v1910 = vand.u32 %v1236, 4294901760
        %v1911 = vsub.f32 %v1236, %v1910
        %v1912 = vand.u32 %v1911, 4294901760
        %1913 = vmatpush2.xpose.msra.mxu0 %v1912
        %1914 = vmatprep.subr.mxu0 0.0
        %v1915 = vand.u32 %v1233, 4294901760
        %v1916 = vsub.f32 %v1233, %v1915
        %v1917 = vand.u32 %v1916, 4294901760
        %1918 = vmatpush2.xpose.msra.mxu0 %v1917
        %1919 = vmatprep.subr.mxu0 0.0
        %v1920 = vand.u32 %v1230, 4294901760
        %v1921 = vsub.f32 %v1230, %v1920
        %v1922 = vand.u32 %v1921, 4294901760
        %1923 = vmatpush2.xpose.msra.mxu0 %v1922
        %1924 = vmatprep.subr.mxu0 0.0
        %v1925 = vand.u32 %v1227, 4294901760
        %v1926 = vsub.f32 %v1227, %v1925
        %v1927 = vand.u32 %v1926, 4294901760
        %1928 = vmatpush2.xpose.msra.mxu0 %v1927
        %1929 = vmatprep.subr.mxu0 0.0
        %v1930 = vand.u32 %v1224, 4294901760
        %v1931 = vsub.f32 %v1224, %v1930
        %v1932 = vand.u32 %v1931, 4294901760
        %1933 = vmatpush2.xpose.msra.mxu0 %v1932
        %1934 = vmatprep.subr.mxu0 0.0
        %v1935 = vand.u32 %v1221, 4294901760
        %v1936 = vsub.f32 %v1221, %v1935
        %v1937 = vand.u32 %v1936, 4294901760
        %1938 = vmatpush2.xpose.msra.mxu0 %v1937
        %1939 = vmatprep.subr.mxu0 0.0
        %v1940 = vand.u32 %v1218, 4294901760
        %v1941 = vsub.f32 %v1218, %v1940
        %v1942 = vand.u32 %v1941, 4294901760
        %1943 = vmatpush2.xpose.msra.mxu0 %v1942
        %1944 = vmatprep.subr.mxu0 0.0
        %v1945 = vand.u32 %v1215, 4294901760
        %v1946 = vsub.f32 %v1215, %v1945
        %v1947 = vand.u32 %v1946, 4294901760
        %1948 = vmatpush2.xpose.msra.mxu0 %v1947
        %1949 = vmatprep.subr.mxu0 0.0
        %v1950 = vand.u32 %v1212, 4294901760
        %v1951 = vsub.f32 %v1212, %v1950
        %v1952 = vand.u32 %v1951, 4294901760
        %1953 = vmatpush2.xpose.msra.mxu0 %v1952
        %1954 = vmatprep.subr.mxu0 0.0
        %v1955 = vand.u32 %v1209, 4294901760
        %v1956 = vsub.f32 %v1209, %v1955
        %v1957 = vand.u32 %v1956, 4294901760
        %1958 = vmatpush2.xpose.msra.mxu0 %v1957
        %1959 = vmatprep.subr.mxu0 0.0
        %v1960 = vand.u32 %v1206, 4294901760
        %v1961 = vsub.f32 %v1206, %v1960
        %v1962 = vand.u32 %v1961, 4294901760
        %1963 = vmatpush2.xpose.msra.mxu0 %v1962
        %1964 = vmatprep.subr.mxu0 0.0
        %v1965 = vand.u32 %v1203, 4294901760
        %v1966 = vsub.f32 %v1203, %v1965
        %v1967 = vand.u32 %v1966, 4294901760
        %1968 = vmatpush2.xpose.msra.mxu0 %v1967
        %1969 = vmatprep.subr.mxu0 0.0
        %v1970 = vand.u32 %v1200, 4294901760
        %v1971 = vsub.f32 %v1200, %v1970
        %v1972 = vand.u32 %v1971, 4294901760
        %1973 = vmatpush2.xpose.msra.mxu0 %v1972
        %1974 = vmatprep.subr.mxu0 0.0
        %v1975 = vand.u32 %v1197, 4294901760
        %v1976 = vsub.f32 %v1197, %v1975
        %v1977 = vand.u32 %v1976, 4294901760
        %1978 = vmatpush2.xpose.msra.mxu0 %v1977
        %1979 = vmatprep.subr.mxu0 0.0
        %v1980 = vand.u32 %v1194, 4294901760
        %v1981 = vsub.f32 %v1194, %v1980
        %v1982 = vand.u32 %v1981, 4294901760
        %1983 = vmatpush2.xpose.msra.mxu0 %v1982
        %1984 = vmatprep.mubr.f32.mxu0 0.0
        %v1985 = vand.u32 %v1143, 4294901760
        %1986 = vmatmul.mubr.f32.gmra.mxu0 %v1985
        %v1987 = vpop.f32.mrf.mxu0
        %v1988 = vadd.f32 %v1820, %v1987
        %v1989 = vpop.f32.mrf.mxu0
        %v1990 = vadd.f32 %v1822, %v1989
        %1991 = vdwg.mxu0
        %1992 = vmatprep.subr.mxu0 0.0
        %v1993 = vand.u32 %v1191, 4294901760
        %1994 = vmatpush1.xpose.msra.mxu0 %v1993
        %1995 = vmatprep.subr.mxu0 0.0
        %v1996 = vand.u32 %v1188, 4294901760
        %1997 = vmatpush1.xpose.msra.mxu0 %v1996
        %1998 = vmatprep.subr.mxu0 0.0
        %v1999 = vand.u32 %v1185, 4294901760
        %2000 = vmatpush1.xpose.msra.mxu0 %v1999
        %2001 = vmatprep.subr.mxu0 0.0
        %v2002 = vand.u32 %v1182, 4294901760
        %2003 = vmatpush1.xpose.msra.mxu0 %v2002
        %2004 = vmatprep.subr.mxu0 0.0
        %v2005 = vand.u32 %v1179, 4294901760
        %2006 = vmatpush1.xpose.msra.mxu0 %v2005
        %2007 = vmatprep.subr.mxu0 0.0
        %v2008 = vand.u32 %v1176, 4294901760
        %2009 = vmatpush1.xpose.msra.mxu0 %v2008
        %2010 = vmatprep.subr.mxu0 0.0
        %v2011 = vand.u32 %v1173, 4294901760
        %2012 = vmatpush1.xpose.msra.mxu0 %v2011
        %2013 = vmatprep.subr.mxu0 0.0
        %v2014 = vand.u32 %v1170, 4294901760
        %2015 = vmatpush1.xpose.msra.mxu0 %v2014
        %2016 = vmatprep.subr.mxu0 0.0
        %v2017 = vand.u32 %v1167, 4294901760
        %2018 = vmatpush1.xpose.msra.mxu0 %v2017
        %2019 = vmatprep.subr.mxu0 0.0
        %v2020 = vand.u32 %v1164, 4294901760
        %2021 = vmatpush1.xpose.msra.mxu0 %v2020
        %2022 = vmatprep.subr.mxu0 0.0
        %v2023 = vand.u32 %v1161, 4294901760
        %2024 = vmatpush1.xpose.msra.mxu0 %v2023
        %2025 = vmatprep.subr.mxu0 0.0
        %v2026 = vand.u32 %v1158, 4294901760
        %2027 = vmatpush1.xpose.msra.mxu0 %v2026
        %2028 = vmatprep.subr.mxu0 0.0
        %v2029 = vand.u32 %v1155, 4294901760
        %2030 = vmatpush1.xpose.msra.mxu0 %v2029
        %2031 = vmatprep.subr.mxu0 0.0
        %v2032 = vand.u32 %v1152, 4294901760
        %2033 = vmatpush1.xpose.msra.mxu0 %v2032
        %2034 = vmatprep.subr.mxu0 0.0
        %v2035 = vand.u32 %v1149, 4294901760
        %2036 = vmatpush1.xpose.msra.mxu0 %v2035
        %2037 = vmatprep.subr.mxu0 0.0
        %v2038 = vand.u32 %v1146, 4294901760
        %2039 = vmatpush1.xpose.msra.mxu0 %v2038
        %2040 = vmatprep.subr.mxu0 0.0
        %v2041 = vand.u32 %v1239, 4294901760
        %2042 = vmatpush2.xpose.msra.mxu0 %v2041
        %2043 = vmatprep.subr.mxu0 0.0
        %v2044 = vand.u32 %v1236, 4294901760
        %2045 = vmatpush2.xpose.msra.mxu0 %v2044
        %2046 = vmatprep.subr.mxu0 0.0
        %v2047 = vand.u32 %v1233, 4294901760
        %2048 = vmatpush2.xpose.msra.mxu0 %v2047
        %2049 = vmatprep.subr.mxu0 0.0
        %v2050 = vand.u32 %v1230, 4294901760
        %2051 = vmatpush2.xpose.msra.mxu0 %v2050
        %2052 = vmatprep.subr.mxu0 0.0
        %v2053 = vand.u32 %v1227, 4294901760
        %2054 = vmatpush2.xpose.msra.mxu0 %v2053
        %2055 = vmatprep.subr.mxu0 0.0
        %v2056 = vand.u32 %v1224, 4294901760
        %2057 = vmatpush2.xpose.msra.mxu0 %v2056
        %2058 = vmatprep.subr.mxu0 0.0
        %v2059 = vand.u32 %v1221, 4294901760
        %2060 = vmatpush2.xpose.msra.mxu0 %v2059
        %2061 = vmatprep.subr.mxu0 0.0
        %v2062 = vand.u32 %v1218, 4294901760
        %2063 = vmatpush2.xpose.msra.mxu0 %v2062
        %2064 = vmatprep.subr.mxu0 0.0
        %v2065 = vand.u32 %v1215, 4294901760
        %2066 = vmatpush2.xpose.msra.mxu0 %v2065
        %2067 = vmatprep.subr.mxu0 0.0
        %v2068 = vand.u32 %v1212, 4294901760
        %2069 = vmatpush2.xpose.msra.mxu0 %v2068
        %2070 = vmatprep.subr.mxu0 0.0
        %v2071 = vand.u32 %v1209, 4294901760
        %2072 = vmatpush2.xpose.msra.mxu0 %v2071
        %2073 = vmatprep.subr.mxu0 0.0
        %v2074 = vand.u32 %v1206, 4294901760
        %2075 = vmatpush2.xpose.msra.mxu0 %v2074
        %2076 = vmatprep.subr.mxu0 0.0
        %v2077 = vand.u32 %v1203, 4294901760
        %2078 = vmatpush2.xpose.msra.mxu0 %v2077
        %2079 = vmatprep.subr.mxu0 0.0
        %v2080 = vand.u32 %v1200, 4294901760
        %2081 = vmatpush2.xpose.msra.mxu0 %v2080
        %2082 = vmatprep.subr.mxu0 0.0
        %v2083 = vand.u32 %v1197, 4294901760
        %2084 = vmatpush2.xpose.msra.mxu0 %v2083
        %2085 = vmatprep.subr.mxu0 0.0
        %v2086 = vand.u32 %v1194, 4294901760
        %2087 = vmatpush2.xpose.msra.mxu0 %v2086
        %2088 = vmatprep.mubr.f32.mxu0 0.0
        %v2089 = vand.u32 %v1143, 4294901760
        %2090 = vmatmul.mubr.f32.gmra.mxu0 %v2089
        %v2091 = vpop.f32.mrf.mxu0
        %v2092 = vadd.f32 %v1988, %v2091
        %v2093 = vpop.f32.mrf.mxu0
        %v2094 = vadd.f32 %v1990, %v2093
        %2095 = vdwg.mxu0
        %v2096 = vlaneseq
        %v2097 = vshrl.u32 %v2096, 7
        %v2098 = vsub.s32 0, %v2097
        %v2099 = vrot.slane %v2092, %v2098
        %v2100 = vlaneseq
        %v2101 = vshrl.u32 %v2100, 7
        %v2102 = vsub.s32 0, %v2101
        %v2103 = vrot.slane %v2094, %v2102
        %v2106 = vcombine.low %v2099, %v2103
        %v2108 = vsub.f32 %v227, %v2106
        %v2109 = vmul.f32 %v2108, %v2108
        %v2111 = vcombine.high %v2109, %v2109
        %v2113 = vsel %vm263, %v2109, 0.0
        %v2114 = vrot.slane %v2113, 4
        %v2115 = vadd.f32 %v2113, %v2114
        %v2116 = vrot.slane %v2115, 2
        %v2117 = vadd.f32 %v2115, %v2116
        %v2118 = vrot.slane %v2117, 1
        %v2119 = vadd.f32 %v2117, %v2118
        %v2120 = vsel %vm263, %v2111, 0.0
        %v2121 = vrot.slane %v2120, 4
        %v2122 = vadd.f32 %v2120, %v2121
        %v2123 = vrot.slane %v2122, 2
        %v2124 = vadd.f32 %v2122, %v2123
        %v2125 = vrot.slane %v2124, 1
        %v2126 = vadd.f32 %v2124, %v2125
        %2127 = vmatprep.subr.mxu0 0.0
        %v2128 = vand.u32 %v243, 4294901760
        %2129 = vmatpush1.msra.mxu0 %v2128
        %2130 = vmatprep.subr.mxu0 0.0
        %v2131 = vand.u32 %v242, 4294901760
        %2132 = vmatpush1.msra.mxu0 %v2131
        %2133 = vmatprep.subr.mxu0 0.0
        %v2134 = vand.u32 %v241, 4294901760
        %2135 = vmatpush1.msra.mxu0 %v2134
        %2136 = vmatprep.subr.mxu0 0.0
        %v2137 = vand.u32 %v240, 4294901760
        %2138 = vmatpush1.msra.mxu0 %v2137
        %2139 = vmatprep.subr.mxu0 0.0
        %v2140 = vand.u32 %v239, 4294901760
        %2141 = vmatpush1.msra.mxu0 %v2140
        %2142 = vmatprep.subr.mxu0 0.0
        %v2143 = vand.u32 %v238, 4294901760
        %2144 = vmatpush1.msra.mxu0 %v2143
        %2145 = vmatprep.subr.mxu0 0.0
        %v2146 = vand.u32 %v237, 4294901760
        %2147 = vmatpush1.msra.mxu0 %v2146
        %2148 = vmatprep.subr.mxu0 0.0
        %v2149 = vand.u32 %v236, 4294901760
        %2150 = vmatpush1.msra.mxu0 %v2149
        %2151 = vmatprep.subr.mxu0 0.0
        %v2152 = vand.u32 %v235, 4294901760
        %2153 = vmatpush1.msra.mxu0 %v2152
        %2154 = vmatprep.subr.mxu0 0.0
        %v2155 = vand.u32 %v234, 4294901760
        %2156 = vmatpush1.msra.mxu0 %v2155
        %2157 = vmatprep.subr.mxu0 0.0
        %v2158 = vand.u32 %v233, 4294901760
        %2159 = vmatpush1.msra.mxu0 %v2158
        %2160 = vmatprep.subr.mxu0 0.0
        %v2161 = vand.u32 %v232, 4294901760
        %2162 = vmatpush1.msra.mxu0 %v2161
        %2163 = vmatprep.subr.mxu0 0.0
        %v2164 = vand.u32 %v231, 4294901760
        %2165 = vmatpush1.msra.mxu0 %v2164
        %2166 = vmatprep.subr.mxu0 0.0
        %v2167 = vand.u32 %v230, 4294901760
        %2168 = vmatpush1.msra.mxu0 %v2167
        %2169 = vmatprep.subr.mxu0 0.0
        %v2170 = vand.u32 %v229, 4294901760
        %2171 = vmatpush1.msra.mxu0 %v2170
        %2172 = vmatprep.subr.mxu0 0.0
        %v2173 = vand.u32 %v228, 4294901760
        %2174 = vmatpush1.msra.mxu0 %v2173
        %2175 = vmatprep.subr.mxu0 0.0
        %v2176 = vand.u32 %v259, 4294901760
        %2177 = vmatpush2.msra.mxu0 %v2176
        %2178 = vmatprep.subr.mxu0 0.0
        %v2179 = vand.u32 %v258, 4294901760
        %2180 = vmatpush2.msra.mxu0 %v2179
        %2181 = vmatprep.subr.mxu0 0.0
        %v2182 = vand.u32 %v257, 4294901760
        %2183 = vmatpush2.msra.mxu0 %v2182
        %2184 = vmatprep.subr.mxu0 0.0
        %v2185 = vand.u32 %v256, 4294901760
        %2186 = vmatpush2.msra.mxu0 %v2185
        %2187 = vmatprep.subr.mxu0 0.0
        %v2188 = vand.u32 %v255, 4294901760
        %2189 = vmatpush2.msra.mxu0 %v2188
        %2190 = vmatprep.subr.mxu0 0.0
        %v2191 = vand.u32 %v254, 4294901760
        %2192 = vmatpush2.msra.mxu0 %v2191
        %2193 = vmatprep.subr.mxu0 0.0
        %v2194 = vand.u32 %v253, 4294901760
        %2195 = vmatpush2.msra.mxu0 %v2194
        %2196 = vmatprep.subr.mxu0 0.0
        %v2197 = vand.u32 %v252, 4294901760
        %2198 = vmatpush2.msra.mxu0 %v2197
        %2199 = vmatprep.subr.mxu0 0.0
        %v2200 = vand.u32 %v251, 4294901760
        %2201 = vmatpush2.msra.mxu0 %v2200
        %2202 = vmatprep.subr.mxu0 0.0
        %v2203 = vand.u32 %v250, 4294901760
        %2204 = vmatpush2.msra.mxu0 %v2203
        %2205 = vmatprep.subr.mxu0 0.0
        %v2206 = vand.u32 %v249, 4294901760
        %2207 = vmatpush2.msra.mxu0 %v2206
        %2208 = vmatprep.subr.mxu0 0.0
        %v2209 = vand.u32 %v248, 4294901760
        %2210 = vmatpush2.msra.mxu0 %v2209
        %2211 = vmatprep.subr.mxu0 0.0
        %v2212 = vand.u32 %v247, 4294901760
        %2213 = vmatpush2.msra.mxu0 %v2212
        %2214 = vmatprep.subr.mxu0 0.0
        %v2215 = vand.u32 %v246, 4294901760
        %2216 = vmatpush2.msra.mxu0 %v2215
        %2217 = vmatprep.subr.mxu0 0.0
        %v2218 = vand.u32 %v245, 4294901760
        %2219 = vmatpush2.msra.mxu0 %v2218
        %2220 = vmatprep.subr.mxu0 0.0
        %v2221 = vand.u32 %v244, 4294901760
        %2222 = vmatpush2.msra.mxu0 %v2221
        %v2223 = vand.u32 %v2126, 4294901760
        %v2224 = vsub.f32 %v2126, %v2223
        %v2225 = vand.u32 %v2224, 4294901760
        %v2226 = vsub.f32 %v2224, %v2225
        %v2227 = vand.u32 %v2226, 4294901760
        %2228 = vmatprep.mubr.f32.mxu0 %v2227
        %v2229 = vand.u32 %v2119, 4294901760
        %v2230 = vsub.f32 %v2119, %v2229
        %v2231 = vand.u32 %v2230, 4294901760
        %v2232 = vsub.f32 %v2230, %v2231
        %v2233 = vand.u32 %v2232, 4294901760
        %2234 = vmatmul.mubr.f32.gmra.mxu0 %v2233
        %v2235 = vpop.f32.mrf.mxu0
        %v2236 = vadd.f32 0.0, %v2235
        %v2237 = vpop.f32.mrf.mxu0
        %2238 = vdwg.mxu0
        %2239 = vmatprep.subr.mxu0 0.0
        %v2240 = vand.u32 %v243, 4294901760
        %v2241 = vsub.f32 %v243, %v2240
        %v2242 = vand.u32 %v2241, 4294901760
        %v2243 = vsub.f32 %v2241, %v2242
        %v2244 = vand.u32 %v2243, 4294901760
        %2245 = vmatpush1.msra.mxu0 %v2244
        %2246 = vmatprep.subr.mxu0 0.0
        %v2247 = vand.u32 %v242, 4294901760
        %v2248 = vsub.f32 %v242, %v2247
        %v2249 = vand.u32 %v2248, 4294901760
        %v2250 = vsub.f32 %v2248, %v2249
        %v2251 = vand.u32 %v2250, 4294901760
        %2252 = vmatpush1.msra.mxu0 %v2251
        %2253 = vmatprep.subr.mxu0 0.0
        %v2254 = vand.u32 %v241, 4294901760
        %v2255 = vsub.f32 %v241, %v2254
        %v2256 = vand.u32 %v2255, 4294901760
        %v2257 = vsub.f32 %v2255, %v2256
        %v2258 = vand.u32 %v2257, 4294901760
        %2259 = vmatpush1.msra.mxu0 %v2258
        %2260 = vmatprep.subr.mxu0 0.0
        %v2261 = vand.u32 %v240, 4294901760
        %v2262 = vsub.f32 %v240, %v2261
        %v2263 = vand.u32 %v2262, 4294901760
        %v2264 = vsub.f32 %v2262, %v2263
        %v2265 = vand.u32 %v2264, 4294901760
        %2266 = vmatpush1.msra.mxu0 %v2265
        %2267 = vmatprep.subr.mxu0 0.0
        %v2268 = vand.u32 %v239, 4294901760
        %v2269 = vsub.f32 %v239, %v2268
        %v2270 = vand.u32 %v2269, 4294901760
        %v2271 = vsub.f32 %v2269, %v2270
        %v2272 = vand.u32 %v2271, 4294901760
        %2273 = vmatpush1.msra.mxu0 %v2272
        %2274 = vmatprep.subr.mxu0 0.0
        %v2275 = vand.u32 %v238, 4294901760
        %v2276 = vsub.f32 %v238, %v2275
        %v2277 = vand.u32 %v2276, 4294901760
        %v2278 = vsub.f32 %v2276, %v2277
        %v2279 = vand.u32 %v2278, 4294901760
        %2280 = vmatpush1.msra.mxu0 %v2279
        %2281 = vmatprep.subr.mxu0 0.0
        %v2282 = vand.u32 %v237, 4294901760
        %v2283 = vsub.f32 %v237, %v2282
        %v2284 = vand.u32 %v2283, 4294901760
        %v2285 = vsub.f32 %v2283, %v2284
        %v2286 = vand.u32 %v2285, 4294901760
        %2287 = vmatpush1.msra.mxu0 %v2286
        %2288 = vmatprep.subr.mxu0 0.0
        %v2289 = vand.u32 %v236, 4294901760
        %v2290 = vsub.f32 %v236, %v2289
        %v2291 = vand.u32 %v2290, 4294901760
        %v2292 = vsub.f32 %v2290, %v2291
        %v2293 = vand.u32 %v2292, 4294901760
        %2294 = vmatpush1.msra.mxu0 %v2293
        %2295 = vmatprep.subr.mxu0 0.0
        %v2296 = vand.u32 %v235, 4294901760
        %v2297 = vsub.f32 %v235, %v2296
        %v2298 = vand.u32 %v2297, 4294901760
        %v2299 = vsub.f32 %v2297, %v2298
        %v2300 = vand.u32 %v2299, 4294901760
        %2301 = vmatpush1.msra.mxu0 %v2300
        %2302 = vmatprep.subr.mxu0 0.0
        %v2303 = vand.u32 %v234, 4294901760
        %v2304 = vsub.f32 %v234, %v2303
        %v2305 = vand.u32 %v2304, 4294901760
        %v2306 = vsub.f32 %v2304, %v2305
        %v2307 = vand.u32 %v2306, 4294901760
        %2308 = vmatpush1.msra.mxu0 %v2307
        %2309 = vmatprep.subr.mxu0 0.0
        %v2310 = vand.u32 %v233, 4294901760
        %v2311 = vsub.f32 %v233, %v2310
        %v2312 = vand.u32 %v2311, 4294901760
        %v2313 = vsub.f32 %v2311, %v2312
        %v2314 = vand.u32 %v2313, 4294901760
        %2315 = vmatpush1.msra.mxu0 %v2314
        %2316 = vmatprep.subr.mxu0 0.0
        %v2317 = vand.u32 %v232, 4294901760
        %v2318 = vsub.f32 %v232, %v2317
        %v2319 = vand.u32 %v2318, 4294901760
        %v2320 = vsub.f32 %v2318, %v2319
        %v2321 = vand.u32 %v2320, 4294901760
        %2322 = vmatpush1.msra.mxu0 %v2321
        %2323 = vmatprep.subr.mxu0 0.0
        %v2324 = vand.u32 %v231, 4294901760
        %v2325 = vsub.f32 %v231, %v2324
        %v2326 = vand.u32 %v2325, 4294901760
        %v2327 = vsub.f32 %v2325, %v2326
        %v2328 = vand.u32 %v2327, 4294901760
        %2329 = vmatpush1.msra.mxu0 %v2328
        %2330 = vmatprep.subr.mxu0 0.0
        %v2331 = vand.u32 %v230, 4294901760
        %v2332 = vsub.f32 %v230, %v2331
        %v2333 = vand.u32 %v2332, 4294901760
        %v2334 = vsub.f32 %v2332, %v2333
        %v2335 = vand.u32 %v2334, 4294901760
        %2336 = vmatpush1.msra.mxu0 %v2335
        %2337 = vmatprep.subr.mxu0 0.0
        %v2338 = vand.u32 %v229, 4294901760
        %v2339 = vsub.f32 %v229, %v2338
        %v2340 = vand.u32 %v2339, 4294901760
        %v2341 = vsub.f32 %v2339, %v2340
        %v2342 = vand.u32 %v2341, 4294901760
        %2343 = vmatpush1.msra.mxu0 %v2342
        %2344 = vmatprep.subr.mxu0 0.0
        %v2345 = vand.u32 %v228, 4294901760
        %v2346 = vsub.f32 %v228, %v2345
        %v2347 = vand.u32 %v2346, 4294901760
        %v2348 = vsub.f32 %v2346, %v2347
        %v2349 = vand.u32 %v2348, 4294901760
        %2350 = vmatpush1.msra.mxu0 %v2349
        %2351 = vmatprep.subr.mxu0 0.0
        %v2352 = vand.u32 %v259, 4294901760
        %v2353 = vsub.f32 %v259, %v2352
        %v2354 = vand.u32 %v2353, 4294901760
        %v2355 = vsub.f32 %v2353, %v2354
        %v2356 = vand.u32 %v2355, 4294901760
        %2357 = vmatpush2.msra.mxu0 %v2356
        %2358 = vmatprep.subr.mxu0 0.0
        %v2359 = vand.u32 %v258, 4294901760
        %v2360 = vsub.f32 %v258, %v2359
        %v2361 = vand.u32 %v2360, 4294901760
        %v2362 = vsub.f32 %v2360, %v2361
        %v2363 = vand.u32 %v2362, 4294901760
        %2364 = vmatpush2.msra.mxu0 %v2363
        %2365 = vmatprep.subr.mxu0 0.0
        %v2366 = vand.u32 %v257, 4294901760
        %v2367 = vsub.f32 %v257, %v2366
        %v2368 = vand.u32 %v2367, 4294901760
        %v2369 = vsub.f32 %v2367, %v2368
        %v2370 = vand.u32 %v2369, 4294901760
        %2371 = vmatpush2.msra.mxu0 %v2370
        %2372 = vmatprep.subr.mxu0 0.0
        %v2373 = vand.u32 %v256, 4294901760
        %v2374 = vsub.f32 %v256, %v2373
        %v2375 = vand.u32 %v2374, 4294901760
        %v2376 = vsub.f32 %v2374, %v2375
        %v2377 = vand.u32 %v2376, 4294901760
        %2378 = vmatpush2.msra.mxu0 %v2377
        %2379 = vmatprep.subr.mxu0 0.0
        %v2380 = vand.u32 %v255, 4294901760
        %v2381 = vsub.f32 %v255, %v2380
        %v2382 = vand.u32 %v2381, 4294901760
        %v2383 = vsub.f32 %v2381, %v2382
        %v2384 = vand.u32 %v2383, 4294901760
        %2385 = vmatpush2.msra.mxu0 %v2384
        %2386 = vmatprep.subr.mxu0 0.0
        %v2387 = vand.u32 %v254, 4294901760
        %v2388 = vsub.f32 %v254, %v2387
        %v2389 = vand.u32 %v2388, 4294901760
        %v2390 = vsub.f32 %v2388, %v2389
        %v2391 = vand.u32 %v2390, 4294901760
        %2392 = vmatpush2.msra.mxu0 %v2391
        %2393 = vmatprep.subr.mxu0 0.0
        %v2394 = vand.u32 %v253, 4294901760
        %v2395 = vsub.f32 %v253, %v2394
        %v2396 = vand.u32 %v2395, 4294901760
        %v2397 = vsub.f32 %v2395, %v2396
        %v2398 = vand.u32 %v2397, 4294901760
        %2399 = vmatpush2.msra.mxu0 %v2398
        %2400 = vmatprep.subr.mxu0 0.0
        %v2401 = vand.u32 %v252, 4294901760
        %v2402 = vsub.f32 %v252, %v2401
        %v2403 = vand.u32 %v2402, 4294901760
        %v2404 = vsub.f32 %v2402, %v2403
        %v2405 = vand.u32 %v2404, 4294901760
        %2406 = vmatpush2.msra.mxu0 %v2405
        %2407 = vmatprep.subr.mxu0 0.0
        %v2408 = vand.u32 %v251, 4294901760
        %v2409 = vsub.f32 %v251, %v2408
        %v2410 = vand.u32 %v2409, 4294901760
        %v2411 = vsub.f32 %v2409, %v2410
        %v2412 = vand.u32 %v2411, 4294901760
        %2413 = vmatpush2.msra.mxu0 %v2412
        %2414 = vmatprep.subr.mxu0 0.0
        %v2415 = vand.u32 %v250, 4294901760
        %v2416 = vsub.f32 %v250, %v2415
        %v2417 = vand.u32 %v2416, 4294901760
        %v2418 = vsub.f32 %v2416, %v2417
        %v2419 = vand.u32 %v2418, 4294901760
        %2420 = vmatpush2.msra.mxu0 %v2419
        %2421 = vmatprep.subr.mxu0 0.0
        %v2422 = vand.u32 %v249, 4294901760
        %v2423 = vsub.f32 %v249, %v2422
        %v2424 = vand.u32 %v2423, 4294901760
        %v2425 = vsub.f32 %v2423, %v2424
        %v2426 = vand.u32 %v2425, 4294901760
        %2427 = vmatpush2.msra.mxu0 %v2426
        %2428 = vmatprep.subr.mxu0 0.0
        %v2429 = vand.u32 %v248, 4294901760
        %v2430 = vsub.f32 %v248, %v2429
        %v2431 = vand.u32 %v2430, 4294901760
        %v2432 = vsub.f32 %v2430, %v2431
        %v2433 = vand.u32 %v2432, 4294901760
        %2434 = vmatpush2.msra.mxu0 %v2433
        %2435 = vmatprep.subr.mxu0 0.0
        %v2436 = vand.u32 %v247, 4294901760
        %v2437 = vsub.f32 %v247, %v2436
        %v2438 = vand.u32 %v2437, 4294901760
        %v2439 = vsub.f32 %v2437, %v2438
        %v2440 = vand.u32 %v2439, 4294901760
        %2441 = vmatpush2.msra.mxu0 %v2440
        %2442 = vmatprep.subr.mxu0 0.0
        %v2443 = vand.u32 %v246, 4294901760
        %v2444 = vsub.f32 %v246, %v2443
        %v2445 = vand.u32 %v2444, 4294901760
        %v2446 = vsub.f32 %v2444, %v2445
        %v2447 = vand.u32 %v2446, 4294901760
        %2448 = vmatpush2.msra.mxu0 %v2447
        %2449 = vmatprep.subr.mxu0 0.0
        %v2450 = vand.u32 %v245, 4294901760
        %v2451 = vsub.f32 %v245, %v2450
        %v2452 = vand.u32 %v2451, 4294901760
        %v2453 = vsub.f32 %v2451, %v2452
        %v2454 = vand.u32 %v2453, 4294901760
        %2455 = vmatpush2.msra.mxu0 %v2454
        %2456 = vmatprep.subr.mxu0 0.0
        %v2457 = vand.u32 %v244, 4294901760
        %v2458 = vsub.f32 %v244, %v2457
        %v2459 = vand.u32 %v2458, 4294901760
        %v2460 = vsub.f32 %v2458, %v2459
        %v2461 = vand.u32 %v2460, 4294901760
        %2462 = vmatpush2.msra.mxu0 %v2461
        %v2463 = vand.u32 %v2126, 4294901760
        %2464 = vmatprep.mubr.f32.mxu0 %v2463
        %v2465 = vand.u32 %v2119, 4294901760
        %2466 = vmatmul.mubr.f32.gmra.mxu0 %v2465
        %v2467 = vpop.f32.mrf.mxu0
        %v2468 = vadd.f32 %v2236, %v2467
        %v2469 = vpop.f32.mrf.mxu0
        %2470 = vdwg.mxu0
        %2471 = vmatprep.subr.mxu0 0.0
        %v2472 = vand.u32 %v243, 4294901760
        %v2473 = vsub.f32 %v243, %v2472
        %2474 = vmatpush1.msra.mxu0 %v2473
        %2475 = vmatprep.subr.mxu0 0.0
        %v2476 = vand.u32 %v242, 4294901760
        %v2477 = vsub.f32 %v242, %v2476
        %2478 = vmatpush1.msra.mxu0 %v2477
        %2479 = vmatprep.subr.mxu0 0.0
        %v2480 = vand.u32 %v241, 4294901760
        %v2481 = vsub.f32 %v241, %v2480
        %2482 = vmatpush1.msra.mxu0 %v2481
        %2483 = vmatprep.subr.mxu0 0.0
        %v2484 = vand.u32 %v240, 4294901760
        %v2485 = vsub.f32 %v240, %v2484
        %2486 = vmatpush1.msra.mxu0 %v2485
        %2487 = vmatprep.subr.mxu0 0.0
        %v2488 = vand.u32 %v239, 4294901760
        %v2489 = vsub.f32 %v239, %v2488
        %2490 = vmatpush1.msra.mxu0 %v2489
        %2491 = vmatprep.subr.mxu0 0.0
        %v2492 = vand.u32 %v238, 4294901760
        %v2493 = vsub.f32 %v238, %v2492
        %2494 = vmatpush1.msra.mxu0 %v2493
        %2495 = vmatprep.subr.mxu0 0.0
        %v2496 = vand.u32 %v237, 4294901760
        %v2497 = vsub.f32 %v237, %v2496
        %2498 = vmatpush1.msra.mxu0 %v2497
        %2499 = vmatprep.subr.mxu0 0.0
        %v2500 = vand.u32 %v236, 4294901760
        %v2501 = vsub.f32 %v236, %v2500
        %2502 = vmatpush1.msra.mxu0 %v2501
        %2503 = vmatprep.subr.mxu0 0.0
        %v2504 = vand.u32 %v235, 4294901760
        %v2505 = vsub.f32 %v235, %v2504
        %2506 = vmatpush1.msra.mxu0 %v2505
        %2507 = vmatprep.subr.mxu0 0.0
        %v2508 = vand.u32 %v234, 4294901760
        %v2509 = vsub.f32 %v234, %v2508
        %2510 = vmatpush1.msra.mxu0 %v2509
        %2511 = vmatprep.subr.mxu0 0.0
        %v2512 = vand.u32 %v233, 4294901760
        %v2513 = vsub.f32 %v233, %v2512
        %2514 = vmatpush1.msra.mxu0 %v2513
        %2515 = vmatprep.subr.mxu0 0.0
        %v2516 = vand.u32 %v232, 4294901760
        %v2517 = vsub.f32 %v232, %v2516
        %2518 = vmatpush1.msra.mxu0 %v2517
        %2519 = vmatprep.subr.mxu0 0.0
        %v2520 = vand.u32 %v231, 4294901760
        %v2521 = vsub.f32 %v231, %v2520
        %2522 = vmatpush1.msra.mxu0 %v2521
        %2523 = vmatprep.subr.mxu0 0.0
        %v2524 = vand.u32 %v230, 4294901760
        %v2525 = vsub.f32 %v230, %v2524
        %2526 = vmatpush1.msra.mxu0 %v2525
        %2527 = vmatprep.subr.mxu0 0.0
        %v2528 = vand.u32 %v229, 4294901760
        %v2529 = vsub.f32 %v229, %v2528
        %2530 = vmatpush1.msra.mxu0 %v2529
        %2531 = vmatprep.subr.mxu0 0.0
        %v2532 = vand.u32 %v228, 4294901760
        %v2533 = vsub.f32 %v228, %v2532
        %2534 = vmatpush1.msra.mxu0 %v2533
        %2535 = vmatprep.subr.mxu0 0.0
        %v2536 = vand.u32 %v259, 4294901760
        %v2537 = vsub.f32 %v259, %v2536
        %2538 = vmatpush2.msra.mxu0 %v2537
        %2539 = vmatprep.subr.mxu0 0.0
        %v2540 = vand.u32 %v258, 4294901760
        %v2541 = vsub.f32 %v258, %v2540
        %2542 = vmatpush2.msra.mxu0 %v2541
        %2543 = vmatprep.subr.mxu0 0.0
        %v2544 = vand.u32 %v257, 4294901760
        %v2545 = vsub.f32 %v257, %v2544
        %2546 = vmatpush2.msra.mxu0 %v2545
        %2547 = vmatprep.subr.mxu0 0.0
        %v2548 = vand.u32 %v256, 4294901760
        %v2549 = vsub.f32 %v256, %v2548
        %2550 = vmatpush2.msra.mxu0 %v2549
        %2551 = vmatprep.subr.mxu0 0.0
        %v2552 = vand.u32 %v255, 4294901760
        %v2553 = vsub.f32 %v255, %v2552
        %2554 = vmatpush2.msra.mxu0 %v2553
        %2555 = vmatprep.subr.mxu0 0.0
        %v2556 = vand.u32 %v254, 4294901760
        %v2557 = vsub.f32 %v254, %v2556
        %2558 = vmatpush2.msra.mxu0 %v2557
        %2559 = vmatprep.subr.mxu0 0.0
        %v2560 = vand.u32 %v253, 4294901760
        %v2561 = vsub.f32 %v253, %v2560
        %2562 = vmatpush2.msra.mxu0 %v2561
        %2563 = vmatprep.subr.mxu0 0.0
        %v2564 = vand.u32 %v252, 4294901760
        %v2565 = vsub.f32 %v252, %v2564
        %2566 = vmatpush2.msra.mxu0 %v2565
        %2567 = vmatprep.subr.mxu0 0.0
        %v2568 = vand.u32 %v251, 4294901760
        %v2569 = vsub.f32 %v251, %v2568
        %2570 = vmatpush2.msra.mxu0 %v2569
        %2571 = vmatprep.subr.mxu0 0.0
        %v2572 = vand.u32 %v250, 4294901760
        %v2573 = vsub.f32 %v250, %v2572
        %2574 = vmatpush2.msra.mxu0 %v2573
        %2575 = vmatprep.subr.mxu0 0.0
        %v2576 = vand.u32 %v249, 4294901760
        %v2577 = vsub.f32 %v249, %v2576
        %2578 = vmatpush2.msra.mxu0 %v2577
        %2579 = vmatprep.subr.mxu0 0.0
        %v2580 = vand.u32 %v248, 4294901760
        %v2581 = vsub.f32 %v248, %v2580
        %2582 = vmatpush2.msra.mxu0 %v2581
        %2583 = vmatprep.subr.mxu0 0.0
        %v2584 = vand.u32 %v247, 4294901760
        %v2585 = vsub.f32 %v247, %v2584
        %2586 = vmatpush2.msra.mxu0 %v2585
        %2587 = vmatprep.subr.mxu0 0.0
        %v2588 = vand.u32 %v246, 4294901760
        %v2589 = vsub.f32 %v246, %v2588
        %2590 = vmatpush2.msra.mxu0 %v2589
        %2591 = vmatprep.subr.mxu0 0.0
        %v2592 = vand.u32 %v245, 4294901760
        %v2593 = vsub.f32 %v245, %v2592
        %2594 = vmatpush2.msra.mxu0 %v2593
        %2595 = vmatprep.subr.mxu0 0.0
        %v2596 = vand.u32 %v244, 4294901760
        %v2597 = vsub.f32 %v244, %v2596
        %2598 = vmatpush2.msra.mxu0 %v2597
        %v2599 = vand.u32 %v2126, 4294901760
        %v2600 = vsub.f32 %v2126, %v2599
        %2601 = vmatprep.mubr.f32.mxu0 %v2600
        %v2602 = vand.u32 %v2119, 4294901760
        %v2603 = vsub.f32 %v2119, %v2602
        %2604 = vmatmul.mubr.f32.gmra.mxu0 %v2603
        %v2605 = vpop.f32.mrf.mxu0
        %v2606 = vadd.f32 %v2468, %v2605
        %v2607 = vpop.f32.mrf.mxu0
        %2608 = vdwg.mxu0
        %2609 = vmatprep.subr.mxu0 0.0
        %v2610 = vand.u32 %v243, 4294901760
        %2611 = vmatpush1.msra.mxu0 %v2610
        %2612 = vmatprep.subr.mxu0 0.0
        %v2613 = vand.u32 %v242, 4294901760
        %2614 = vmatpush1.msra.mxu0 %v2613
        %2615 = vmatprep.subr.mxu0 0.0
        %v2616 = vand.u32 %v241, 4294901760
        %2617 = vmatpush1.msra.mxu0 %v2616
        %2618 = vmatprep.subr.mxu0 0.0
        %v2619 = vand.u32 %v240, 4294901760
        %2620 = vmatpush1.msra.mxu0 %v2619
        %2621 = vmatprep.subr.mxu0 0.0
        %v2622 = vand.u32 %v239, 4294901760
        %2623 = vmatpush1.msra.mxu0 %v2622
        %2624 = vmatprep.subr.mxu0 0.0
        %v2625 = vand.u32 %v238, 4294901760
        %2626 = vmatpush1.msra.mxu0 %v2625
        %2627 = vmatprep.subr.mxu0 0.0
        %v2628 = vand.u32 %v237, 4294901760
        %2629 = vmatpush1.msra.mxu0 %v2628
        %2630 = vmatprep.subr.mxu0 0.0
        %v2631 = vand.u32 %v236, 4294901760
        %2632 = vmatpush1.msra.mxu0 %v2631
        %2633 = vmatprep.subr.mxu0 0.0
        %v2634 = vand.u32 %v235, 4294901760
        %2635 = vmatpush1.msra.mxu0 %v2634
        %2636 = vmatprep.subr.mxu0 0.0
        %v2637 = vand.u32 %v234, 4294901760
        %2638 = vmatpush1.msra.mxu0 %v2637
        %2639 = vmatprep.subr.mxu0 0.0
        %v2640 = vand.u32 %v233, 4294901760
        %2641 = vmatpush1.msra.mxu0 %v2640
        %2642 = vmatprep.subr.mxu0 0.0
        %v2643 = vand.u32 %v232, 4294901760
        %2644 = vmatpush1.msra.mxu0 %v2643
        %2645 = vmatprep.subr.mxu0 0.0
        %v2646 = vand.u32 %v231, 4294901760
        %2647 = vmatpush1.msra.mxu0 %v2646
        %2648 = vmatprep.subr.mxu0 0.0
        %v2649 = vand.u32 %v230, 4294901760
        %2650 = vmatpush1.msra.mxu0 %v2649
        %2651 = vmatprep.subr.mxu0 0.0
        %v2652 = vand.u32 %v229, 4294901760
        %2653 = vmatpush1.msra.mxu0 %v2652
        %2654 = vmatprep.subr.mxu0 0.0
        %v2655 = vand.u32 %v228, 4294901760
        %2656 = vmatpush1.msra.mxu0 %v2655
        %2657 = vmatprep.subr.mxu0 0.0
        %v2658 = vand.u32 %v259, 4294901760
        %2659 = vmatpush2.msra.mxu0 %v2658
        %2660 = vmatprep.subr.mxu0 0.0
        %v2661 = vand.u32 %v258, 4294901760
        %2662 = vmatpush2.msra.mxu0 %v2661
        %2663 = vmatprep.subr.mxu0 0.0
        %v2664 = vand.u32 %v257, 4294901760
        %2665 = vmatpush2.msra.mxu0 %v2664
        %2666 = vmatprep.subr.mxu0 0.0
        %v2667 = vand.u32 %v256, 4294901760
        %2668 = vmatpush2.msra.mxu0 %v2667
        %2669 = vmatprep.subr.mxu0 0.0
        %v2670 = vand.u32 %v255, 4294901760
        %2671 = vmatpush2.msra.mxu0 %v2670
        %2672 = vmatprep.subr.mxu0 0.0
        %v2673 = vand.u32 %v254, 4294901760
        %2674 = vmatpush2.msra.mxu0 %v2673
        %2675 = vmatprep.subr.mxu0 0.0
        %v2676 = vand.u32 %v253, 4294901760
        %2677 = vmatpush2.msra.mxu0 %v2676
        %2678 = vmatprep.subr.mxu0 0.0
        %v2679 = vand.u32 %v252, 4294901760
        %2680 = vmatpush2.msra.mxu0 %v2679
        %2681 = vmatprep.subr.mxu0 0.0
        %v2682 = vand.u32 %v251, 4294901760
        %2683 = vmatpush2.msra.mxu0 %v2682
        %2684 = vmatprep.subr.mxu0 0.0
        %v2685 = vand.u32 %v250, 4294901760
        %2686 = vmatpush2.msra.mxu0 %v2685
        %2687 = vmatprep.subr.mxu0 0.0
        %v2688 = vand.u32 %v249, 4294901760
        %2689 = vmatpush2.msra.mxu0 %v2688
        %2690 = vmatprep.subr.mxu0 0.0
        %v2691 = vand.u32 %v248, 4294901760
        %2692 = vmatpush2.msra.mxu0 %v2691
        %2693 = vmatprep.subr.mxu0 0.0
        %v2694 = vand.u32 %v247, 4294901760
        %2695 = vmatpush2.msra.mxu0 %v2694
        %2696 = vmatprep.subr.mxu0 0.0
        %v2697 = vand.u32 %v246, 4294901760
        %2698 = vmatpush2.msra.mxu0 %v2697
        %2699 = vmatprep.subr.mxu0 0.0
        %v2700 = vand.u32 %v245, 4294901760
        %2701 = vmatpush2.msra.mxu0 %v2700
        %2702 = vmatprep.subr.mxu0 0.0
        %v2703 = vand.u32 %v244, 4294901760
        %2704 = vmatpush2.msra.mxu0 %v2703
        %v2705 = vand.u32 %v2126, 4294901760
        %v2706 = vsub.f32 %v2126, %v2705
        %v2707 = vand.u32 %v2706, 4294901760
        %2708 = vmatprep.mubr.f32.mxu0 %v2707
        %v2709 = vand.u32 %v2119, 4294901760
        %v2710 = vsub.f32 %v2119, %v2709
        %v2711 = vand.u32 %v2710, 4294901760
        %2712 = vmatmul.mubr.f32.gmra.mxu0 %v2711
        %v2713 = vpop.f32.mrf.mxu0
        %v2714 = vadd.f32 %v2606, %v2713
        %v2715 = vpop.f32.mrf.mxu0
        %2716 = vdwg.mxu0
        %2717 = vmatprep.subr.mxu0 0.0
        %v2718 = vand.u32 %v243, 4294901760
        %v2719 = vsub.f32 %v243, %v2718
        %v2720 = vand.u32 %v2719, 4294901760
        %2721 = vmatpush1.msra.mxu0 %v2720
        %2722 = vmatprep.subr.mxu0 0.0
        %v2723 = vand.u32 %v242, 4294901760
        %v2724 = vsub.f32 %v242, %v2723
        %v2725 = vand.u32 %v2724, 4294901760
        %2726 = vmatpush1.msra.mxu0 %v2725
        %2727 = vmatprep.subr.mxu0 0.0
        %v2728 = vand.u32 %v241, 4294901760
        %v2729 = vsub.f32 %v241, %v2728
        %v2730 = vand.u32 %v2729, 4294901760
        %2731 = vmatpush1.msra.mxu0 %v2730
        %2732 = vmatprep.subr.mxu0 0.0
        %v2733 = vand.u32 %v240, 4294901760
        %v2734 = vsub.f32 %v240, %v2733
        %v2735 = vand.u32 %v2734, 4294901760
        %2736 = vmatpush1.msra.mxu0 %v2735
        %2737 = vmatprep.subr.mxu0 0.0
        %v2738 = vand.u32 %v239, 4294901760
        %v2739 = vsub.f32 %v239, %v2738
        %v2740 = vand.u32 %v2739, 4294901760
        %2741 = vmatpush1.msra.mxu0 %v2740
        %2742 = vmatprep.subr.mxu0 0.0
        %v2743 = vand.u32 %v238, 4294901760
        %v2744 = vsub.f32 %v238, %v2743
        %v2745 = vand.u32 %v2744, 4294901760
        %2746 = vmatpush1.msra.mxu0 %v2745
        %2747 = vmatprep.subr.mxu0 0.0
        %v2748 = vand.u32 %v237, 4294901760
        %v2749 = vsub.f32 %v237, %v2748
        %v2750 = vand.u32 %v2749, 4294901760
        %2751 = vmatpush1.msra.mxu0 %v2750
        %2752 = vmatprep.subr.mxu0 0.0
        %v2753 = vand.u32 %v236, 4294901760
        %v2754 = vsub.f32 %v236, %v2753
        %v2755 = vand.u32 %v2754, 4294901760
        %2756 = vmatpush1.msra.mxu0 %v2755
        %2757 = vmatprep.subr.mxu0 0.0
        %v2758 = vand.u32 %v235, 4294901760
        %v2759 = vsub.f32 %v235, %v2758
        %v2760 = vand.u32 %v2759, 4294901760
        %2761 = vmatpush1.msra.mxu0 %v2760
        %2762 = vmatprep.subr.mxu0 0.0
        %v2763 = vand.u32 %v234, 4294901760
        %v2764 = vsub.f32 %v234, %v2763
        %v2765 = vand.u32 %v2764, 4294901760
        %2766 = vmatpush1.msra.mxu0 %v2765
        %2767 = vmatprep.subr.mxu0 0.0
        %v2768 = vand.u32 %v233, 4294901760
        %v2769 = vsub.f32 %v233, %v2768
        %v2770 = vand.u32 %v2769, 4294901760
        %2771 = vmatpush1.msra.mxu0 %v2770
        %2772 = vmatprep.subr.mxu0 0.0
        %v2773 = vand.u32 %v232, 4294901760
        %v2774 = vsub.f32 %v232, %v2773
        %v2775 = vand.u32 %v2774, 4294901760
        %2776 = vmatpush1.msra.mxu0 %v2775
        %2777 = vmatprep.subr.mxu0 0.0
        %v2778 = vand.u32 %v231, 4294901760
        %v2779 = vsub.f32 %v231, %v2778
        %v2780 = vand.u32 %v2779, 4294901760
        %2781 = vmatpush1.msra.mxu0 %v2780
        %2782 = vmatprep.subr.mxu0 0.0
        %v2783 = vand.u32 %v230, 4294901760
        %v2784 = vsub.f32 %v230, %v2783
        %v2785 = vand.u32 %v2784, 4294901760
        %2786 = vmatpush1.msra.mxu0 %v2785
        %2787 = vmatprep.subr.mxu0 0.0
        %v2788 = vand.u32 %v229, 4294901760
        %v2789 = vsub.f32 %v229, %v2788
        %v2790 = vand.u32 %v2789, 4294901760
        %2791 = vmatpush1.msra.mxu0 %v2790
        %2792 = vmatprep.subr.mxu0 0.0
        %v2793 = vand.u32 %v228, 4294901760
        %v2794 = vsub.f32 %v228, %v2793
        %v2795 = vand.u32 %v2794, 4294901760
        %2796 = vmatpush1.msra.mxu0 %v2795
        %2797 = vmatprep.subr.mxu0 0.0
        %v2798 = vand.u32 %v259, 4294901760
        %v2799 = vsub.f32 %v259, %v2798
        %v2800 = vand.u32 %v2799, 4294901760
        %2801 = vmatpush2.msra.mxu0 %v2800
        %2802 = vmatprep.subr.mxu0 0.0
        %v2803 = vand.u32 %v258, 4294901760
        %v2804 = vsub.f32 %v258, %v2803
        %v2805 = vand.u32 %v2804, 4294901760
        %2806 = vmatpush2.msra.mxu0 %v2805
        %2807 = vmatprep.subr.mxu0 0.0
        %v2808 = vand.u32 %v257, 4294901760
        %v2809 = vsub.f32 %v257, %v2808
        %v2810 = vand.u32 %v2809, 4294901760
        %2811 = vmatpush2.msra.mxu0 %v2810
        %2812 = vmatprep.subr.mxu0 0.0
        %v2813 = vand.u32 %v256, 4294901760
        %v2814 = vsub.f32 %v256, %v2813
        %v2815 = vand.u32 %v2814, 4294901760
        %2816 = vmatpush2.msra.mxu0 %v2815
        %2817 = vmatprep.subr.mxu0 0.0
        %v2818 = vand.u32 %v255, 4294901760
        %v2819 = vsub.f32 %v255, %v2818
        %v2820 = vand.u32 %v2819, 4294901760
        %2821 = vmatpush2.msra.mxu0 %v2820
        %2822 = vmatprep.subr.mxu0 0.0
        %v2823 = vand.u32 %v254, 4294901760
        %v2824 = vsub.f32 %v254, %v2823
        %v2825 = vand.u32 %v2824, 4294901760
        %2826 = vmatpush2.msra.mxu0 %v2825
        %2827 = vmatprep.subr.mxu0 0.0
        %v2828 = vand.u32 %v253, 4294901760
        %v2829 = vsub.f32 %v253, %v2828
        %v2830 = vand.u32 %v2829, 4294901760
        %2831 = vmatpush2.msra.mxu0 %v2830
        %2832 = vmatprep.subr.mxu0 0.0
        %v2833 = vand.u32 %v252, 4294901760
        %v2834 = vsub.f32 %v252, %v2833
        %v2835 = vand.u32 %v2834, 4294901760
        %2836 = vmatpush2.msra.mxu0 %v2835
        %2837 = vmatprep.subr.mxu0 0.0
        %v2838 = vand.u32 %v251, 4294901760
        %v2839 = vsub.f32 %v251, %v2838
        %v2840 = vand.u32 %v2839, 4294901760
        %2841 = vmatpush2.msra.mxu0 %v2840
        %2842 = vmatprep.subr.mxu0 0.0
        %v2843 = vand.u32 %v250, 4294901760
        %v2844 = vsub.f32 %v250, %v2843
        %v2845 = vand.u32 %v2844, 4294901760
        %2846 = vmatpush2.msra.mxu0 %v2845
        %2847 = vmatprep.subr.mxu0 0.0
        %v2848 = vand.u32 %v249, 4294901760
        %v2849 = vsub.f32 %v249, %v2848
        %v2850 = vand.u32 %v2849, 4294901760
        %2851 = vmatpush2.msra.mxu0 %v2850
        %2852 = vmatprep.subr.mxu0 0.0
        %v2853 = vand.u32 %v248, 4294901760
        %v2854 = vsub.f32 %v248, %v2853
        %v2855 = vand.u32 %v2854, 4294901760
        %2856 = vmatpush2.msra.mxu0 %v2855
        %2857 = vmatprep.subr.mxu0 0.0
        %v2858 = vand.u32 %v247, 4294901760
        %v2859 = vsub.f32 %v247, %v2858
        %v2860 = vand.u32 %v2859, 4294901760
        %2861 = vmatpush2.msra.mxu0 %v2860
        %2862 = vmatprep.subr.mxu0 0.0
        %v2863 = vand.u32 %v246, 4294901760
        %v2864 = vsub.f32 %v246, %v2863
        %v2865 = vand.u32 %v2864, 4294901760
        %2866 = vmatpush2.msra.mxu0 %v2865
        %2867 = vmatprep.subr.mxu0 0.0
        %v2868 = vand.u32 %v245, 4294901760
        %v2869 = vsub.f32 %v245, %v2868
        %v2870 = vand.u32 %v2869, 4294901760
        %2871 = vmatpush2.msra.mxu0 %v2870
        %2872 = vmatprep.subr.mxu0 0.0
        %v2873 = vand.u32 %v244, 4294901760
        %v2874 = vsub.f32 %v244, %v2873
        %v2875 = vand.u32 %v2874, 4294901760
        %2876 = vmatpush2.msra.mxu0 %v2875
        %v2877 = vand.u32 %v2126, 4294901760
        %2878 = vmatprep.mubr.f32.mxu0 %v2877
        %v2879 = vand.u32 %v2119, 4294901760
        %2880 = vmatmul.mubr.f32.gmra.mxu0 %v2879
        %v2881 = vpop.f32.mrf.mxu0
        %v2882 = vadd.f32 %v2714, %v2881
        %v2883 = vpop.f32.mrf.mxu0
        %2884 = vdwg.mxu0
        %2885 = vmatprep.subr.mxu0 0.0
        %v2886 = vand.u32 %v243, 4294901760
        %2887 = vmatpush1.msra.mxu0 %v2886
        %2888 = vmatprep.subr.mxu0 0.0
        %v2889 = vand.u32 %v242, 4294901760
        %2890 = vmatpush1.msra.mxu0 %v2889
        %2891 = vmatprep.subr.mxu0 0.0
        %v2892 = vand.u32 %v241, 4294901760
        %2893 = vmatpush1.msra.mxu0 %v2892
        %2894 = vmatprep.subr.mxu0 0.0
        %v2895 = vand.u32 %v240, 4294901760
        %2896 = vmatpush1.msra.mxu0 %v2895
        %2897 = vmatprep.subr.mxu0 0.0
        %v2898 = vand.u32 %v239, 4294901760
        %2899 = vmatpush1.msra.mxu0 %v2898
        %2900 = vmatprep.subr.mxu0 0.0
        %v2901 = vand.u32 %v238, 4294901760
        %2902 = vmatpush1.msra.mxu0 %v2901
        %2903 = vmatprep.subr.mxu0 0.0
        %v2904 = vand.u32 %v237, 4294901760
        %2905 = vmatpush1.msra.mxu0 %v2904
        %2906 = vmatprep.subr.mxu0 0.0
        %v2907 = vand.u32 %v236, 4294901760
        %2908 = vmatpush1.msra.mxu0 %v2907
        %2909 = vmatprep.subr.mxu0 0.0
        %v2910 = vand.u32 %v235, 4294901760
        %2911 = vmatpush1.msra.mxu0 %v2910
        %2912 = vmatprep.subr.mxu0 0.0
        %v2913 = vand.u32 %v234, 4294901760
        %2914 = vmatpush1.msra.mxu0 %v2913
        %2915 = vmatprep.subr.mxu0 0.0
        %v2916 = vand.u32 %v233, 4294901760
        %2917 = vmatpush1.msra.mxu0 %v2916
        %2918 = vmatprep.subr.mxu0 0.0
        %v2919 = vand.u32 %v232, 4294901760
        %2920 = vmatpush1.msra.mxu0 %v2919
        %2921 = vmatprep.subr.mxu0 0.0
        %v2922 = vand.u32 %v231, 4294901760
        %2923 = vmatpush1.msra.mxu0 %v2922
        %2924 = vmatprep.subr.mxu0 0.0
        %v2925 = vand.u32 %v230, 4294901760
        %2926 = vmatpush1.msra.mxu0 %v2925
        %2927 = vmatprep.subr.mxu0 0.0
        %v2928 = vand.u32 %v229, 4294901760
        %2929 = vmatpush1.msra.mxu0 %v2928
        %2930 = vmatprep.subr.mxu0 0.0
        %v2931 = vand.u32 %v228, 4294901760
        %2932 = vmatpush1.msra.mxu0 %v2931
        %2933 = vmatprep.subr.mxu0 0.0
        %v2934 = vand.u32 %v259, 4294901760
        %2935 = vmatpush2.msra.mxu0 %v2934
        %2936 = vmatprep.subr.mxu0 0.0
        %v2937 = vand.u32 %v258, 4294901760
        %2938 = vmatpush2.msra.mxu0 %v2937
        %2939 = vmatprep.subr.mxu0 0.0
        %v2940 = vand.u32 %v257, 4294901760
        %2941 = vmatpush2.msra.mxu0 %v2940
        %2942 = vmatprep.subr.mxu0 0.0
        %v2943 = vand.u32 %v256, 4294901760
        %2944 = vmatpush2.msra.mxu0 %v2943
        %2945 = vmatprep.subr.mxu0 0.0
        %v2946 = vand.u32 %v255, 4294901760
        %2947 = vmatpush2.msra.mxu0 %v2946
        %2948 = vmatprep.subr.mxu0 0.0
        %v2949 = vand.u32 %v254, 4294901760
        %2950 = vmatpush2.msra.mxu0 %v2949
        %2951 = vmatprep.subr.mxu0 0.0
        %v2952 = vand.u32 %v253, 4294901760
        %2953 = vmatpush2.msra.mxu0 %v2952
        %2954 = vmatprep.subr.mxu0 0.0
        %v2955 = vand.u32 %v252, 4294901760
        %2956 = vmatpush2.msra.mxu0 %v2955
        %2957 = vmatprep.subr.mxu0 0.0
        %v2958 = vand.u32 %v251, 4294901760
        %2959 = vmatpush2.msra.mxu0 %v2958
        %2960 = vmatprep.subr.mxu0 0.0
        %v2961 = vand.u32 %v250, 4294901760
        %2962 = vmatpush2.msra.mxu0 %v2961
        %2963 = vmatprep.subr.mxu0 0.0
        %v2964 = vand.u32 %v249, 4294901760
        %2965 = vmatpush2.msra.mxu0 %v2964
        %2966 = vmatprep.subr.mxu0 0.0
        %v2967 = vand.u32 %v248, 4294901760
        %2968 = vmatpush2.msra.mxu0 %v2967
        %2969 = vmatprep.subr.mxu0 0.0
        %v2970 = vand.u32 %v247, 4294901760
        %2971 = vmatpush2.msra.mxu0 %v2970
        %2972 = vmatprep.subr.mxu0 0.0
        %v2973 = vand.u32 %v246, 4294901760
        %2974 = vmatpush2.msra.mxu0 %v2973
        %2975 = vmatprep.subr.mxu0 0.0
        %v2976 = vand.u32 %v245, 4294901760
        %2977 = vmatpush2.msra.mxu0 %v2976
        %2978 = vmatprep.subr.mxu0 0.0
        %v2979 = vand.u32 %v244, 4294901760
        %2980 = vmatpush2.msra.mxu0 %v2979
        %v2981 = vand.u32 %v2126, 4294901760
        %2982 = vmatprep.mubr.f32.mxu0 %v2981
        %v2983 = vand.u32 %v2119, 4294901760
        %2984 = vmatmul.mubr.f32.gmra.mxu0 %v2983
        %v2985 = vpop.f32.mrf.mxu0
        %v2986 = vadd.f32 %v2882, %v2985
        %v2987 = vpop.f32.mrf.mxu0
        %2988 = vdwg.mxu0
        %v2989 = vmul.f32 %v2986, 0.015625
        %v2990 = vadd.f32 %v2989, 1e-05
        %v2991 = vrsqrt.pop %v2990
        %v2992 = vmul.f32 %v2990, %v2991
        %vm2993 = vcmp.eq.f32.partialorder %v2990, inf
        %v2994 = vsel %vm2993, %v2990, %v2992
        %vm2995 = vcmp.eq.f32.partialorder %v2990, 0.0
        %v2996 = vand.u32 %v2990, 2147483648
        %v2997 = vsel %vm2995, %v2996, %v2994
        %v2998 = vadd.f32 %v2997, 1e-05
        %v2999 = vrcp.pop %v2998
        %v3000 = vmul.f32 1.0, %v2999
        %v3002 = vsel %vm1141, %v3000, 0
        %3004 = vmatprep.subr.mxu0 0.0
        %v3005 = vand.u32 %v1191, 4294901760
        %3006 = vmatpush1.xpose.msra.mxu0 %v3005
        %3007 = vmatprep.subr.mxu0 0.0
        %v3008 = vand.u32 %v1188, 4294901760
        %3009 = vmatpush1.xpose.msra.mxu0 %v3008
        %3010 = vmatprep.subr.mxu0 0.0
        %v3011 = vand.u32 %v1185, 4294901760
        %3012 = vmatpush1.xpose.msra.mxu0 %v3011
        %3013 = vmatprep.subr.mxu0 0.0
        %v3014 = vand.u32 %v1182, 4294901760
        %3015 = vmatpush1.xpose.msra.mxu0 %v3014
        %3016 = vmatprep.subr.mxu0 0.0
        %v3017 = vand.u32 %v1179, 4294901760
        %3018 = vmatpush1.xpose.msra.mxu0 %v3017
        %3019 = vmatprep.subr.mxu0 0.0
        %v3020 = vand.u32 %v1176, 4294901760
        %3021 = vmatpush1.xpose.msra.mxu0 %v3020
        %3022 = vmatprep.subr.mxu0 0.0
        %v3023 = vand.u32 %v1173, 4294901760
        %3024 = vmatpush1.xpose.msra.mxu0 %v3023
        %3025 = vmatprep.subr.mxu0 0.0
        %v3026 = vand.u32 %v1170, 4294901760
        %3027 = vmatpush1.xpose.msra.mxu0 %v3026
        %3028 = vmatprep.subr.mxu0 0.0
        %v3029 = vand.u32 %v1167, 4294901760
        %3030 = vmatpush1.xpose.msra.mxu0 %v3029
        %3031 = vmatprep.subr.mxu0 0.0
        %v3032 = vand.u32 %v1164, 4294901760
        %3033 = vmatpush1.xpose.msra.mxu0 %v3032
        %3034 = vmatprep.subr.mxu0 0.0
        %v3035 = vand.u32 %v1161, 4294901760
        %3036 = vmatpush1.xpose.msra.mxu0 %v3035
        %3037 = vmatprep.subr.mxu0 0.0
        %v3038 = vand.u32 %v1158, 4294901760
        %3039 = vmatpush1.xpose.msra.mxu0 %v3038
        %3040 = vmatprep.subr.mxu0 0.0
        %v3041 = vand.u32 %v1155, 4294901760
        %3042 = vmatpush1.xpose.msra.mxu0 %v3041
        %3043 = vmatprep.subr.mxu0 0.0
        %v3044 = vand.u32 %v1152, 4294901760
        %3045 = vmatpush1.xpose.msra.mxu0 %v3044
        %3046 = vmatprep.subr.mxu0 0.0
        %v3047 = vand.u32 %v1149, 4294901760
        %3048 = vmatpush1.xpose.msra.mxu0 %v3047
        %3049 = vmatprep.subr.mxu0 0.0
        %v3050 = vand.u32 %v1146, 4294901760
        %3051 = vmatpush1.xpose.msra.mxu0 %v3050
        %3052 = vmatprep.subr.mxu0 0.0
        %v3053 = vand.u32 %v1239, 4294901760
        %3054 = vmatpush2.xpose.msra.mxu0 %v3053
        %3055 = vmatprep.subr.mxu0 0.0
        %v3056 = vand.u32 %v1236, 4294901760
        %3057 = vmatpush2.xpose.msra.mxu0 %v3056
        %3058 = vmatprep.subr.mxu0 0.0
        %v3059 = vand.u32 %v1233, 4294901760
        %3060 = vmatpush2.xpose.msra.mxu0 %v3059
        %3061 = vmatprep.subr.mxu0 0.0
        %v3062 = vand.u32 %v1230, 4294901760
        %3063 = vmatpush2.xpose.msra.mxu0 %v3062
        %3064 = vmatprep.subr.mxu0 0.0
        %v3065 = vand.u32 %v1227, 4294901760
        %3066 = vmatpush2.xpose.msra.mxu0 %v3065
        %3067 = vmatprep.subr.mxu0 0.0
        %v3068 = vand.u32 %v1224, 4294901760
        %3069 = vmatpush2.xpose.msra.mxu0 %v3068
        %3070 = vmatprep.subr.mxu0 0.0
        %v3071 = vand.u32 %v1221, 4294901760
        %3072 = vmatpush2.xpose.msra.mxu0 %v3071
        %3073 = vmatprep.subr.mxu0 0.0
        %v3074 = vand.u32 %v1218, 4294901760
        %3075 = vmatpush2.xpose.msra.mxu0 %v3074
        %3076 = vmatprep.subr.mxu0 0.0
        %v3077 = vand.u32 %v1215, 4294901760
        %3078 = vmatpush2.xpose.msra.mxu0 %v3077
        %3079 = vmatprep.subr.mxu0 0.0
        %v3080 = vand.u32 %v1212, 4294901760
        %3081 = vmatpush2.xpose.msra.mxu0 %v3080
        %3082 = vmatprep.subr.mxu0 0.0
        %v3083 = vand.u32 %v1209, 4294901760
        %3084 = vmatpush2.xpose.msra.mxu0 %v3083
        %3085 = vmatprep.subr.mxu0 0.0
        %v3086 = vand.u32 %v1206, 4294901760
        %3087 = vmatpush2.xpose.msra.mxu0 %v3086
        %3088 = vmatprep.subr.mxu0 0.0
        %v3089 = vand.u32 %v1203, 4294901760
        %3090 = vmatpush2.xpose.msra.mxu0 %v3089
        %3091 = vmatprep.subr.mxu0 0.0
        %v3092 = vand.u32 %v1200, 4294901760
        %3093 = vmatpush2.xpose.msra.mxu0 %v3092
        %3094 = vmatprep.subr.mxu0 0.0
        %v3095 = vand.u32 %v1197, 4294901760
        %3096 = vmatpush2.xpose.msra.mxu0 %v3095
        %3097 = vmatprep.subr.mxu0 0.0
        %v3098 = vand.u32 %v1194, 4294901760
        %3099 = vmatpush2.xpose.msra.mxu0 %v3098
        %3100 = vmatprep.mubr.f32.mxu0 0.0
        %v3101 = vand.u32 %v3002, 4294901760
        %v3102 = vsub.f32 %v3002, %v3101
        %v3103 = vand.u32 %v3102, 4294901760
        %v3104 = vsub.f32 %v3102, %v3103
        %v3105 = vand.u32 %v3104, 4294901760
        %3106 = vmatmul.mubr.f32.gmra.mxu0 %v3105
        %v3107 = vpop.f32.mrf.mxu0
        %v3108 = vadd.f32 0.0, %v3107
        %v3109 = vpop.f32.mrf.mxu0
        %v3110 = vadd.f32 0.0, %v3109
        %3111 = vdwg.mxu0
        %3112 = vmatprep.subr.mxu0 0.0
        %v3113 = vand.u32 %v1191, 4294901760
        %v3114 = vsub.f32 %v1191, %v3113
        %v3115 = vand.u32 %v3114, 4294901760
        %v3116 = vsub.f32 %v3114, %v3115
        %v3117 = vand.u32 %v3116, 4294901760
        %3118 = vmatpush1.xpose.msra.mxu0 %v3117
        %3119 = vmatprep.subr.mxu0 0.0
        %v3120 = vand.u32 %v1188, 4294901760
        %v3121 = vsub.f32 %v1188, %v3120
        %v3122 = vand.u32 %v3121, 4294901760
        %v3123 = vsub.f32 %v3121, %v3122
        %v3124 = vand.u32 %v3123, 4294901760
        %3125 = vmatpush1.xpose.msra.mxu0 %v3124
        %3126 = vmatprep.subr.mxu0 0.0
        %v3127 = vand.u32 %v1185, 4294901760
        %v3128 = vsub.f32 %v1185, %v3127
        %v3129 = vand.u32 %v3128, 4294901760
        %v3130 = vsub.f32 %v3128, %v3129
        %v3131 = vand.u32 %v3130, 4294901760
        %3132 = vmatpush1.xpose.msra.mxu0 %v3131
        %3133 = vmatprep.subr.mxu0 0.0
        %v3134 = vand.u32 %v1182, 4294901760
        %v3135 = vsub.f32 %v1182, %v3134
        %v3136 = vand.u32 %v3135, 4294901760
        %v3137 = vsub.f32 %v3135, %v3136
        %v3138 = vand.u32 %v3137, 4294901760
        %3139 = vmatpush1.xpose.msra.mxu0 %v3138
        %3140 = vmatprep.subr.mxu0 0.0
        %v3141 = vand.u32 %v1179, 4294901760
        %v3142 = vsub.f32 %v1179, %v3141
        %v3143 = vand.u32 %v3142, 4294901760
        %v3144 = vsub.f32 %v3142, %v3143
        %v3145 = vand.u32 %v3144, 4294901760
        %3146 = vmatpush1.xpose.msra.mxu0 %v3145
        %3147 = vmatprep.subr.mxu0 0.0
        %v3148 = vand.u32 %v1176, 4294901760
        %v3149 = vsub.f32 %v1176, %v3148
        %v3150 = vand.u32 %v3149, 4294901760
        %v3151 = vsub.f32 %v3149, %v3150
        %v3152 = vand.u32 %v3151, 4294901760
        %3153 = vmatpush1.xpose.msra.mxu0 %v3152
        %3154 = vmatprep.subr.mxu0 0.0
        %v3155 = vand.u32 %v1173, 4294901760
        %v3156 = vsub.f32 %v1173, %v3155
        %v3157 = vand.u32 %v3156, 4294901760
        %v3158 = vsub.f32 %v3156, %v3157
        %v3159 = vand.u32 %v3158, 4294901760
        %3160 = vmatpush1.xpose.msra.mxu0 %v3159
        %3161 = vmatprep.subr.mxu0 0.0
        %v3162 = vand.u32 %v1170, 4294901760
        %v3163 = vsub.f32 %v1170, %v3162
        %v3164 = vand.u32 %v3163, 4294901760
        %v3165 = vsub.f32 %v3163, %v3164
        %v3166 = vand.u32 %v3165, 4294901760
        %3167 = vmatpush1.xpose.msra.mxu0 %v3166
        %3168 = vmatprep.subr.mxu0 0.0
        %v3169 = vand.u32 %v1167, 4294901760
        %v3170 = vsub.f32 %v1167, %v3169
        %v3171 = vand.u32 %v3170, 4294901760
        %v3172 = vsub.f32 %v3170, %v3171
        %v3173 = vand.u32 %v3172, 4294901760
        %3174 = vmatpush1.xpose.msra.mxu0 %v3173
        %3175 = vmatprep.subr.mxu0 0.0
        %v3176 = vand.u32 %v1164, 4294901760
        %v3177 = vsub.f32 %v1164, %v3176
        %v3178 = vand.u32 %v3177, 4294901760
        %v3179 = vsub.f32 %v3177, %v3178
        %v3180 = vand.u32 %v3179, 4294901760
        %3181 = vmatpush1.xpose.msra.mxu0 %v3180
        %3182 = vmatprep.subr.mxu0 0.0
        %v3183 = vand.u32 %v1161, 4294901760
        %v3184 = vsub.f32 %v1161, %v3183
        %v3185 = vand.u32 %v3184, 4294901760
        %v3186 = vsub.f32 %v3184, %v3185
        %v3187 = vand.u32 %v3186, 4294901760
        %3188 = vmatpush1.xpose.msra.mxu0 %v3187
        %3189 = vmatprep.subr.mxu0 0.0
        %v3190 = vand.u32 %v1158, 4294901760
        %v3191 = vsub.f32 %v1158, %v3190
        %v3192 = vand.u32 %v3191, 4294901760
        %v3193 = vsub.f32 %v3191, %v3192
        %v3194 = vand.u32 %v3193, 4294901760
        %3195 = vmatpush1.xpose.msra.mxu0 %v3194
        %3196 = vmatprep.subr.mxu0 0.0
        %v3197 = vand.u32 %v1155, 4294901760
        %v3198 = vsub.f32 %v1155, %v3197
        %v3199 = vand.u32 %v3198, 4294901760
        %v3200 = vsub.f32 %v3198, %v3199
        %v3201 = vand.u32 %v3200, 4294901760
        %3202 = vmatpush1.xpose.msra.mxu0 %v3201
        %3203 = vmatprep.subr.mxu0 0.0
        %v3204 = vand.u32 %v1152, 4294901760
        %v3205 = vsub.f32 %v1152, %v3204
        %v3206 = vand.u32 %v3205, 4294901760
        %v3207 = vsub.f32 %v3205, %v3206
        %v3208 = vand.u32 %v3207, 4294901760
        %3209 = vmatpush1.xpose.msra.mxu0 %v3208
        %3210 = vmatprep.subr.mxu0 0.0
        %v3211 = vand.u32 %v1149, 4294901760
        %v3212 = vsub.f32 %v1149, %v3211
        %v3213 = vand.u32 %v3212, 4294901760
        %v3214 = vsub.f32 %v3212, %v3213
        %v3215 = vand.u32 %v3214, 4294901760
        %3216 = vmatpush1.xpose.msra.mxu0 %v3215
        %3217 = vmatprep.subr.mxu0 0.0
        %v3218 = vand.u32 %v1146, 4294901760
        %v3219 = vsub.f32 %v1146, %v3218
        %v3220 = vand.u32 %v3219, 4294901760
        %v3221 = vsub.f32 %v3219, %v3220
        %v3222 = vand.u32 %v3221, 4294901760
        %3223 = vmatpush1.xpose.msra.mxu0 %v3222
        %3224 = vmatprep.subr.mxu0 0.0
        %v3225 = vand.u32 %v1239, 4294901760
        %v3226 = vsub.f32 %v1239, %v3225
        %v3227 = vand.u32 %v3226, 4294901760
        %v3228 = vsub.f32 %v3226, %v3227
        %v3229 = vand.u32 %v3228, 4294901760
        %3230 = vmatpush2.xpose.msra.mxu0 %v3229
        %3231 = vmatprep.subr.mxu0 0.0
        %v3232 = vand.u32 %v1236, 4294901760
        %v3233 = vsub.f32 %v1236, %v3232
        %v3234 = vand.u32 %v3233, 4294901760
        %v3235 = vsub.f32 %v3233, %v3234
        %v3236 = vand.u32 %v3235, 4294901760
        %3237 = vmatpush2.xpose.msra.mxu0 %v3236
        %3238 = vmatprep.subr.mxu0 0.0
        %v3239 = vand.u32 %v1233, 4294901760
        %v3240 = vsub.f32 %v1233, %v3239
        %v3241 = vand.u32 %v3240, 4294901760
        %v3242 = vsub.f32 %v3240, %v3241
        %v3243 = vand.u32 %v3242, 4294901760
        %3244 = vmatpush2.xpose.msra.mxu0 %v3243
        %3245 = vmatprep.subr.mxu0 0.0
        %v3246 = vand.u32 %v1230, 4294901760
        %v3247 = vsub.f32 %v1230, %v3246
        %v3248 = vand.u32 %v3247, 4294901760
        %v3249 = vsub.f32 %v3247, %v3248
        %v3250 = vand.u32 %v3249, 4294901760
        %3251 = vmatpush2.xpose.msra.mxu0 %v3250
        %3252 = vmatprep.subr.mxu0 0.0
        %v3253 = vand.u32 %v1227, 4294901760
        %v3254 = vsub.f32 %v1227, %v3253
        %v3255 = vand.u32 %v3254, 4294901760
        %v3256 = vsub.f32 %v3254, %v3255
        %v3257 = vand.u32 %v3256, 4294901760
        %3258 = vmatpush2.xpose.msra.mxu0 %v3257
        %3259 = vmatprep.subr.mxu0 0.0
        %v3260 = vand.u32 %v1224, 4294901760
        %v3261 = vsub.f32 %v1224, %v3260
        %v3262 = vand.u32 %v3261, 4294901760
        %v3263 = vsub.f32 %v3261, %v3262
        %v3264 = vand.u32 %v3263, 4294901760
        %3265 = vmatpush2.xpose.msra.mxu0 %v3264
        %3266 = vmatprep.subr.mxu0 0.0
        %v3267 = vand.u32 %v1221, 4294901760
        %v3268 = vsub.f32 %v1221, %v3267
        %v3269 = vand.u32 %v3268, 4294901760
        %v3270 = vsub.f32 %v3268, %v3269
        %v3271 = vand.u32 %v3270, 4294901760
        %3272 = vmatpush2.xpose.msra.mxu0 %v3271
        %3273 = vmatprep.subr.mxu0 0.0
        %v3274 = vand.u32 %v1218, 4294901760
        %v3275 = vsub.f32 %v1218, %v3274
        %v3276 = vand.u32 %v3275, 4294901760
        %v3277 = vsub.f32 %v3275, %v3276
        %v3278 = vand.u32 %v3277, 4294901760
        %3279 = vmatpush2.xpose.msra.mxu0 %v3278
        %3280 = vmatprep.subr.mxu0 0.0
        %v3281 = vand.u32 %v1215, 4294901760
        %v3282 = vsub.f32 %v1215, %v3281
        %v3283 = vand.u32 %v3282, 4294901760
        %v3284 = vsub.f32 %v3282, %v3283
        %v3285 = vand.u32 %v3284, 4294901760
        %3286 = vmatpush2.xpose.msra.mxu0 %v3285
        %3287 = vmatprep.subr.mxu0 0.0
        %v3288 = vand.u32 %v1212, 4294901760
        %v3289 = vsub.f32 %v1212, %v3288
        %v3290 = vand.u32 %v3289, 4294901760
        %v3291 = vsub.f32 %v3289, %v3290
        %v3292 = vand.u32 %v3291, 4294901760
        %3293 = vmatpush2.xpose.msra.mxu0 %v3292
        %3294 = vmatprep.subr.mxu0 0.0
        %v3295 = vand.u32 %v1209, 4294901760
        %v3296 = vsub.f32 %v1209, %v3295
        %v3297 = vand.u32 %v3296, 4294901760
        %v3298 = vsub.f32 %v3296, %v3297
        %v3299 = vand.u32 %v3298, 4294901760
        %3300 = vmatpush2.xpose.msra.mxu0 %v3299
        %3301 = vmatprep.subr.mxu0 0.0
        %v3302 = vand.u32 %v1206, 4294901760
        %v3303 = vsub.f32 %v1206, %v3302
        %v3304 = vand.u32 %v3303, 4294901760
        %v3305 = vsub.f32 %v3303, %v3304
        %v3306 = vand.u32 %v3305, 4294901760
        %3307 = vmatpush2.xpose.msra.mxu0 %v3306
        %3308 = vmatprep.subr.mxu0 0.0
        %v3309 = vand.u32 %v1203, 4294901760
        %v3310 = vsub.f32 %v1203, %v3309
        %v3311 = vand.u32 %v3310, 4294901760
        %v3312 = vsub.f32 %v3310, %v3311
        %v3313 = vand.u32 %v3312, 4294901760
        %3314 = vmatpush2.xpose.msra.mxu0 %v3313
        %3315 = vmatprep.subr.mxu0 0.0
        %v3316 = vand.u32 %v1200, 4294901760
        %v3317 = vsub.f32 %v1200, %v3316
        %v3318 = vand.u32 %v3317, 4294901760
        %v3319 = vsub.f32 %v3317, %v3318
        %v3320 = vand.u32 %v3319, 4294901760
        %3321 = vmatpush2.xpose.msra.mxu0 %v3320
        %3322 = vmatprep.subr.mxu0 0.0
        %v3323 = vand.u32 %v1197, 4294901760
        %v3324 = vsub.f32 %v1197, %v3323
        %v3325 = vand.u32 %v3324, 4294901760
        %v3326 = vsub.f32 %v3324, %v3325
        %v3327 = vand.u32 %v3326, 4294901760
        %3328 = vmatpush2.xpose.msra.mxu0 %v3327
        %3329 = vmatprep.subr.mxu0 0.0
        %v3330 = vand.u32 %v1194, 4294901760
        %v3331 = vsub.f32 %v1194, %v3330
        %v3332 = vand.u32 %v3331, 4294901760
        %v3333 = vsub.f32 %v3331, %v3332
        %v3334 = vand.u32 %v3333, 4294901760
        %3335 = vmatpush2.xpose.msra.mxu0 %v3334
        %3336 = vmatprep.mubr.f32.mxu0 0.0
        %v3337 = vand.u32 %v3002, 4294901760
        %3338 = vmatmul.mubr.f32.gmra.mxu0 %v3337
        %v3339 = vpop.f32.mrf.mxu0
        %v3340 = vadd.f32 %v3108, %v3339
        %v3341 = vpop.f32.mrf.mxu0
        %v3342 = vadd.f32 %v3110, %v3341
        %3343 = vdwg.mxu0
        %3344 = vmatprep.subr.mxu0 0.0
        %v3345 = vand.u32 %v1191, 4294901760
        %v3346 = vsub.f32 %v1191, %v3345
        %3347 = vmatpush1.xpose.msra.mxu0 %v3346
        %3348 = vmatprep.subr.mxu0 0.0
        %v3349 = vand.u32 %v1188, 4294901760
        %v3350 = vsub.f32 %v1188, %v3349
        %3351 = vmatpush1.xpose.msra.mxu0 %v3350
        %3352 = vmatprep.subr.mxu0 0.0
        %v3353 = vand.u32 %v1185, 4294901760
        %v3354 = vsub.f32 %v1185, %v3353
        %3355 = vmatpush1.xpose.msra.mxu0 %v3354
        %3356 = vmatprep.subr.mxu0 0.0
        %v3357 = vand.u32 %v1182, 4294901760
        %v3358 = vsub.f32 %v1182, %v3357
        %3359 = vmatpush1.xpose.msra.mxu0 %v3358
        %3360 = vmatprep.subr.mxu0 0.0
        %v3361 = vand.u32 %v1179, 4294901760
        %v3362 = vsub.f32 %v1179, %v3361
        %3363 = vmatpush1.xpose.msra.mxu0 %v3362
        %3364 = vmatprep.subr.mxu0 0.0
        %v3365 = vand.u32 %v1176, 4294901760
        %v3366 = vsub.f32 %v1176, %v3365
        %3367 = vmatpush1.xpose.msra.mxu0 %v3366
        %3368 = vmatprep.subr.mxu0 0.0
        %v3369 = vand.u32 %v1173, 4294901760
        %v3370 = vsub.f32 %v1173, %v3369
        %3371 = vmatpush1.xpose.msra.mxu0 %v3370
        %3372 = vmatprep.subr.mxu0 0.0
        %v3373 = vand.u32 %v1170, 4294901760
        %v3374 = vsub.f32 %v1170, %v3373
        %3375 = vmatpush1.xpose.msra.mxu0 %v3374
        %3376 = vmatprep.subr.mxu0 0.0
        %v3377 = vand.u32 %v1167, 4294901760
        %v3378 = vsub.f32 %v1167, %v3377
        %3379 = vmatpush1.xpose.msra.mxu0 %v3378
        %3380 = vmatprep.subr.mxu0 0.0
        %v3381 = vand.u32 %v1164, 4294901760
        %v3382 = vsub.f32 %v1164, %v3381
        %3383 = vmatpush1.xpose.msra.mxu0 %v3382
        %3384 = vmatprep.subr.mxu0 0.0
        %v3385 = vand.u32 %v1161, 4294901760
        %v3386 = vsub.f32 %v1161, %v3385
        %3387 = vmatpush1.xpose.msra.mxu0 %v3386
        %3388 = vmatprep.subr.mxu0 0.0
        %v3389 = vand.u32 %v1158, 4294901760
        %v3390 = vsub.f32 %v1158, %v3389
        %3391 = vmatpush1.xpose.msra.mxu0 %v3390
        %3392 = vmatprep.subr.mxu0 0.0
        %v3393 = vand.u32 %v1155, 4294901760
        %v3394 = vsub.f32 %v1155, %v3393
        %3395 = vmatpush1.xpose.msra.mxu0 %v3394
        %3396 = vmatprep.subr.mxu0 0.0
        %v3397 = vand.u32 %v1152, 4294901760
        %v3398 = vsub.f32 %v1152, %v3397
        %3399 = vmatpush1.xpose.msra.mxu0 %v3398
        %3400 = vmatprep.subr.mxu0 0.0
        %v3401 = vand.u32 %v1149, 4294901760
        %v3402 = vsub.f32 %v1149, %v3401
        %3403 = vmatpush1.xpose.msra.mxu0 %v3402
        %3404 = vmatprep.subr.mxu0 0.0
        %v3405 = vand.u32 %v1146, 4294901760
        %v3406 = vsub.f32 %v1146, %v3405
        %3407 = vmatpush1.xpose.msra.mxu0 %v3406
        %3408 = vmatprep.subr.mxu0 0.0
        %v3409 = vand.u32 %v1239, 4294901760
        %v3410 = vsub.f32 %v1239, %v3409
        %3411 = vmatpush2.xpose.msra.mxu0 %v3410
        %3412 = vmatprep.subr.mxu0 0.0
        %v3413 = vand.u32 %v1236, 4294901760
        %v3414 = vsub.f32 %v1236, %v3413
        %3415 = vmatpush2.xpose.msra.mxu0 %v3414
        %3416 = vmatprep.subr.mxu0 0.0
        %v3417 = vand.u32 %v1233, 4294901760
        %v3418 = vsub.f32 %v1233, %v3417
        %3419 = vmatpush2.xpose.msra.mxu0 %v3418
        %3420 = vmatprep.subr.mxu0 0.0
        %v3421 = vand.u32 %v1230, 4294901760
        %v3422 = vsub.f32 %v1230, %v3421
        %3423 = vmatpush2.xpose.msra.mxu0 %v3422
        %3424 = vmatprep.subr.mxu0 0.0
        %v3425 = vand.u32 %v1227, 4294901760
        %v3426 = vsub.f32 %v1227, %v3425
        %3427 = vmatpush2.xpose.msra.mxu0 %v3426
        %3428 = vmatprep.subr.mxu0 0.0
        %v3429 = vand.u32 %v1224, 4294901760
        %v3430 = vsub.f32 %v1224, %v3429
        %3431 = vmatpush2.xpose.msra.mxu0 %v3430
        %3432 = vmatprep.subr.mxu0 0.0
        %v3433 = vand.u32 %v1221, 4294901760
        %v3434 = vsub.f32 %v1221, %v3433
        %3435 = vmatpush2.xpose.msra.mxu0 %v3434
        %3436 = vmatprep.subr.mxu0 0.0
        %v3437 = vand.u32 %v1218, 4294901760
        %v3438 = vsub.f32 %v1218, %v3437
        %3439 = vmatpush2.xpose.msra.mxu0 %v3438
        %3440 = vmatprep.subr.mxu0 0.0
        %v3441 = vand.u32 %v1215, 4294901760
        %v3442 = vsub.f32 %v1215, %v3441
        %3443 = vmatpush2.xpose.msra.mxu0 %v3442
        %3444 = vmatprep.subr.mxu0 0.0
        %v3445 = vand.u32 %v1212, 4294901760
        %v3446 = vsub.f32 %v1212, %v3445
        %3447 = vmatpush2.xpose.msra.mxu0 %v3446
        %3448 = vmatprep.subr.mxu0 0.0
        %v3449 = vand.u32 %v1209, 4294901760
        %v3450 = vsub.f32 %v1209, %v3449
        %3451 = vmatpush2.xpose.msra.mxu0 %v3450
        %3452 = vmatprep.subr.mxu0 0.0
        %v3453 = vand.u32 %v1206, 4294901760
        %v3454 = vsub.f32 %v1206, %v3453
        %3455 = vmatpush2.xpose.msra.mxu0 %v3454
        %3456 = vmatprep.subr.mxu0 0.0
        %v3457 = vand.u32 %v1203, 4294901760
        %v3458 = vsub.f32 %v1203, %v3457
        %3459 = vmatpush2.xpose.msra.mxu0 %v3458
        %3460 = vmatprep.subr.mxu0 0.0
        %v3461 = vand.u32 %v1200, 4294901760
        %v3462 = vsub.f32 %v1200, %v3461
        %3463 = vmatpush2.xpose.msra.mxu0 %v3462
        %3464 = vmatprep.subr.mxu0 0.0
        %v3465 = vand.u32 %v1197, 4294901760
        %v3466 = vsub.f32 %v1197, %v3465
        %3467 = vmatpush2.xpose.msra.mxu0 %v3466
        %3468 = vmatprep.subr.mxu0 0.0
        %v3469 = vand.u32 %v1194, 4294901760
        %v3470 = vsub.f32 %v1194, %v3469
        %3471 = vmatpush2.xpose.msra.mxu0 %v3470
        %3472 = vmatprep.mubr.f32.mxu0 0.0
        %v3473 = vand.u32 %v3002, 4294901760
        %v3474 = vsub.f32 %v3002, %v3473
        %3475 = vmatmul.mubr.f32.gmra.mxu0 %v3474
        %v3476 = vpop.f32.mrf.mxu0
        %v3477 = vadd.f32 %v3340, %v3476
        %v3478 = vpop.f32.mrf.mxu0
        %v3479 = vadd.f32 %v3342, %v3478
        %3480 = vdwg.mxu0
        %3481 = vmatprep.subr.mxu0 0.0
        %v3482 = vand.u32 %v1191, 4294901760
        %3483 = vmatpush1.xpose.msra.mxu0 %v3482
        %3484 = vmatprep.subr.mxu0 0.0
        %v3485 = vand.u32 %v1188, 4294901760
        %3486 = vmatpush1.xpose.msra.mxu0 %v3485
        %3487 = vmatprep.subr.mxu0 0.0
        %v3488 = vand.u32 %v1185, 4294901760
        %3489 = vmatpush1.xpose.msra.mxu0 %v3488
        %3490 = vmatprep.subr.mxu0 0.0
        %v3491 = vand.u32 %v1182, 4294901760
        %3492 = vmatpush1.xpose.msra.mxu0 %v3491
        %3493 = vmatprep.subr.mxu0 0.0
        %v3494 = vand.u32 %v1179, 4294901760
        %3495 = vmatpush1.xpose.msra.mxu0 %v3494
        %3496 = vmatprep.subr.mxu0 0.0
        %v3497 = vand.u32 %v1176, 4294901760
        %3498 = vmatpush1.xpose.msra.mxu0 %v3497
        %3499 = vmatprep.subr.mxu0 0.0
        %v3500 = vand.u32 %v1173, 4294901760
        %3501 = vmatpush1.xpose.msra.mxu0 %v3500
        %3502 = vmatprep.subr.mxu0 0.0
        %v3503 = vand.u32 %v1170, 4294901760
        %3504 = vmatpush1.xpose.msra.mxu0 %v3503
        %3505 = vmatprep.subr.mxu0 0.0
        %v3506 = vand.u32 %v1167, 4294901760
        %3507 = vmatpush1.xpose.msra.mxu0 %v3506
        %3508 = vmatprep.subr.mxu0 0.0
        %v3509 = vand.u32 %v1164, 4294901760
        %3510 = vmatpush1.xpose.msra.mxu0 %v3509
        %3511 = vmatprep.subr.mxu0 0.0
        %v3512 = vand.u32 %v1161, 4294901760
        %3513 = vmatpush1.xpose.msra.mxu0 %v3512
        %3514 = vmatprep.subr.mxu0 0.0
        %v3515 = vand.u32 %v1158, 4294901760
        %3516 = vmatpush1.xpose.msra.mxu0 %v3515
        %3517 = vmatprep.subr.mxu0 0.0
        %v3518 = vand.u32 %v1155, 4294901760
        %3519 = vmatpush1.xpose.msra.mxu0 %v3518
        %3520 = vmatprep.subr.mxu0 0.0
        %v3521 = vand.u32 %v1152, 4294901760
        %3522 = vmatpush1.xpose.msra.mxu0 %v3521
        %3523 = vmatprep.subr.mxu0 0.0
        %v3524 = vand.u32 %v1149, 4294901760
        %3525 = vmatpush1.xpose.msra.mxu0 %v3524
        %3526 = vmatprep.subr.mxu0 0.0
        %v3527 = vand.u32 %v1146, 4294901760
        %3528 = vmatpush1.xpose.msra.mxu0 %v3527
        %3529 = vmatprep.subr.mxu0 0.0
        %v3530 = vand.u32 %v1239, 4294901760
        %3531 = vmatpush2.xpose.msra.mxu0 %v3530
        %3532 = vmatprep.subr.mxu0 0.0
        %v3533 = vand.u32 %v1236, 4294901760
        %3534 = vmatpush2.xpose.msra.mxu0 %v3533
        %3535 = vmatprep.subr.mxu0 0.0
        %v3536 = vand.u32 %v1233, 4294901760
        %3537 = vmatpush2.xpose.msra.mxu0 %v3536
        %3538 = vmatprep.subr.mxu0 0.0
        %v3539 = vand.u32 %v1230, 4294901760
        %3540 = vmatpush2.xpose.msra.mxu0 %v3539
        %3541 = vmatprep.subr.mxu0 0.0
        %v3542 = vand.u32 %v1227, 4294901760
        %3543 = vmatpush2.xpose.msra.mxu0 %v3542
        %3544 = vmatprep.subr.mxu0 0.0
        %v3545 = vand.u32 %v1224, 4294901760
        %3546 = vmatpush2.xpose.msra.mxu0 %v3545
        %3547 = vmatprep.subr.mxu0 0.0
        %v3548 = vand.u32 %v1221, 4294901760
        %3549 = vmatpush2.xpose.msra.mxu0 %v3548
        %3550 = vmatprep.subr.mxu0 0.0
        %v3551 = vand.u32 %v1218, 4294901760
        %3552 = vmatpush2.xpose.msra.mxu0 %v3551
        %3553 = vmatprep.subr.mxu0 0.0
        %v3554 = vand.u32 %v1215, 4294901760
        %3555 = vmatpush2.xpose.msra.mxu0 %v3554
        %3556 = vmatprep.subr.mxu0 0.0
        %v3557 = vand.u32 %v1212, 4294901760
        %3558 = vmatpush2.xpose.msra.mxu0 %v3557
        %3559 = vmatprep.subr.mxu0 0.0
        %v3560 = vand.u32 %v1209, 4294901760
        %3561 = vmatpush2.xpose.msra.mxu0 %v3560
        %3562 = vmatprep.subr.mxu0 0.0
        %v3563 = vand.u32 %v1206, 4294901760
        %3564 = vmatpush2.xpose.msra.mxu0 %v3563
        %3565 = vmatprep.subr.mxu0 0.0
        %v3566 = vand.u32 %v1203, 4294901760
        %3567 = vmatpush2.xpose.msra.mxu0 %v3566
        %3568 = vmatprep.subr.mxu0 0.0
        %v3569 = vand.u32 %v1200, 4294901760
        %3570 = vmatpush2.xpose.msra.mxu0 %v3569
        %3571 = vmatprep.subr.mxu0 0.0
        %v3572 = vand.u32 %v1197, 4294901760
        %3573 = vmatpush2.xpose.msra.mxu0 %v3572
        %3574 = vmatprep.subr.mxu0 0.0
        %v3575 = vand.u32 %v1194, 4294901760
        %3576 = vmatpush2.xpose.msra.mxu0 %v3575
        %3577 = vmatprep.mubr.f32.mxu0 0.0
        %v3578 = vand.u32 %v3002, 4294901760
        %v3579 = vsub.f32 %v3002, %v3578
        %v3580 = vand.u32 %v3579, 4294901760
        %3581 = vmatmul.mubr.f32.gmra.mxu0 %v3580
        %v3582 = vpop.f32.mrf.mxu0
        %v3583 = vadd.f32 %v3477, %v3582
        %v3584 = vpop.f32.mrf.mxu0
        %v3585 = vadd.f32 %v3479, %v3584
        %3586 = vdwg.mxu0
        %3587 = vmatprep.subr.mxu0 0.0
        %v3588 = vand.u32 %v1191, 4294901760
        %v3589 = vsub.f32 %v1191, %v3588
        %v3590 = vand.u32 %v3589, 4294901760
        %3591 = vmatpush1.xpose.msra.mxu0 %v3590
        %3592 = vmatprep.subr.mxu0 0.0
        %v3593 = vand.u32 %v1188, 4294901760
        %v3594 = vsub.f32 %v1188, %v3593
        %v3595 = vand.u32 %v3594, 4294901760
        %3596 = vmatpush1.xpose.msra.mxu0 %v3595
        %3597 = vmatprep.subr.mxu0 0.0
        %v3598 = vand.u32 %v1185, 4294901760
        %v3599 = vsub.f32 %v1185, %v3598
        %v3600 = vand.u32 %v3599, 4294901760
        %3601 = vmatpush1.xpose.msra.mxu0 %v3600
        %3602 = vmatprep.subr.mxu0 0.0
        %v3603 = vand.u32 %v1182, 4294901760
        %v3604 = vsub.f32 %v1182, %v3603
        %v3605 = vand.u32 %v3604, 4294901760
        %3606 = vmatpush1.xpose.msra.mxu0 %v3605
        %3607 = vmatprep.subr.mxu0 0.0
        %v3608 = vand.u32 %v1179, 4294901760
        %v3609 = vsub.f32 %v1179, %v3608
        %v3610 = vand.u32 %v3609, 4294901760
        %3611 = vmatpush1.xpose.msra.mxu0 %v3610
        %3612 = vmatprep.subr.mxu0 0.0
        %v3613 = vand.u32 %v1176, 4294901760
        %v3614 = vsub.f32 %v1176, %v3613
        %v3615 = vand.u32 %v3614, 4294901760
        %3616 = vmatpush1.xpose.msra.mxu0 %v3615
        %3617 = vmatprep.subr.mxu0 0.0
        %v3618 = vand.u32 %v1173, 4294901760
        %v3619 = vsub.f32 %v1173, %v3618
        %v3620 = vand.u32 %v3619, 4294901760
        %3621 = vmatpush1.xpose.msra.mxu0 %v3620
        %3622 = vmatprep.subr.mxu0 0.0
        %v3623 = vand.u32 %v1170, 4294901760
        %v3624 = vsub.f32 %v1170, %v3623
        %v3625 = vand.u32 %v3624, 4294901760
        %3626 = vmatpush1.xpose.msra.mxu0 %v3625
        %3627 = vmatprep.subr.mxu0 0.0
        %v3628 = vand.u32 %v1167, 4294901760
        %v3629 = vsub.f32 %v1167, %v3628
        %v3630 = vand.u32 %v3629, 4294901760
        %3631 = vmatpush1.xpose.msra.mxu0 %v3630
        %3632 = vmatprep.subr.mxu0 0.0
        %v3633 = vand.u32 %v1164, 4294901760
        %v3634 = vsub.f32 %v1164, %v3633
        %v3635 = vand.u32 %v3634, 4294901760
        %3636 = vmatpush1.xpose.msra.mxu0 %v3635
        %3637 = vmatprep.subr.mxu0 0.0
        %v3638 = vand.u32 %v1161, 4294901760
        %v3639 = vsub.f32 %v1161, %v3638
        %v3640 = vand.u32 %v3639, 4294901760
        %3641 = vmatpush1.xpose.msra.mxu0 %v3640
        %3642 = vmatprep.subr.mxu0 0.0
        %v3643 = vand.u32 %v1158, 4294901760
        %v3644 = vsub.f32 %v1158, %v3643
        %v3645 = vand.u32 %v3644, 4294901760
        %3646 = vmatpush1.xpose.msra.mxu0 %v3645
        %3647 = vmatprep.subr.mxu0 0.0
        %v3648 = vand.u32 %v1155, 4294901760
        %v3649 = vsub.f32 %v1155, %v3648
        %v3650 = vand.u32 %v3649, 4294901760
        %3651 = vmatpush1.xpose.msra.mxu0 %v3650
        %3652 = vmatprep.subr.mxu0 0.0
        %v3653 = vand.u32 %v1152, 4294901760
        %v3654 = vsub.f32 %v1152, %v3653
        %v3655 = vand.u32 %v3654, 4294901760
        %3656 = vmatpush1.xpose.msra.mxu0 %v3655
        %3657 = vmatprep.subr.mxu0 0.0
        %v3658 = vand.u32 %v1149, 4294901760
        %v3659 = vsub.f32 %v1149, %v3658
        %v3660 = vand.u32 %v3659, 4294901760
        %3661 = vmatpush1.xpose.msra.mxu0 %v3660
        %3662 = vmatprep.subr.mxu0 0.0
        %v3663 = vand.u32 %v1146, 4294901760
        %v3664 = vsub.f32 %v1146, %v3663
        %v3665 = vand.u32 %v3664, 4294901760
        %3666 = vmatpush1.xpose.msra.mxu0 %v3665
        %3667 = vmatprep.subr.mxu0 0.0
        %v3668 = vand.u32 %v1239, 4294901760
        %v3669 = vsub.f32 %v1239, %v3668
        %v3670 = vand.u32 %v3669, 4294901760
        %3671 = vmatpush2.xpose.msra.mxu0 %v3670
        %3672 = vmatprep.subr.mxu0 0.0
        %v3673 = vand.u32 %v1236, 4294901760
        %v3674 = vsub.f32 %v1236, %v3673
        %v3675 = vand.u32 %v3674, 4294901760
        %3676 = vmatpush2.xpose.msra.mxu0 %v3675
        %3677 = vmatprep.subr.mxu0 0.0
        %v3678 = vand.u32 %v1233, 4294901760
        %v3679 = vsub.f32 %v1233, %v3678
        %v3680 = vand.u32 %v3679, 4294901760
        %3681 = vmatpush2.xpose.msra.mxu0 %v3680
        %3682 = vmatprep.subr.mxu0 0.0
        %v3683 = vand.u32 %v1230, 4294901760
        %v3684 = vsub.f32 %v1230, %v3683
        %v3685 = vand.u32 %v3684, 4294901760
        %3686 = vmatpush2.xpose.msra.mxu0 %v3685
        %3687 = vmatprep.subr.mxu0 0.0
        %v3688 = vand.u32 %v1227, 4294901760
        %v3689 = vsub.f32 %v1227, %v3688
        %v3690 = vand.u32 %v3689, 4294901760
        %3691 = vmatpush2.xpose.msra.mxu0 %v3690
        %3692 = vmatprep.subr.mxu0 0.0
        %v3693 = vand.u32 %v1224, 4294901760
        %v3694 = vsub.f32 %v1224, %v3693
        %v3695 = vand.u32 %v3694, 4294901760
        %3696 = vmatpush2.xpose.msra.mxu0 %v3695
        %3697 = vmatprep.subr.mxu0 0.0
        %v3698 = vand.u32 %v1221, 4294901760
        %v3699 = vsub.f32 %v1221, %v3698
        %v3700 = vand.u32 %v3699, 4294901760
        %3701 = vmatpush2.xpose.msra.mxu0 %v3700
        %3702 = vmatprep.subr.mxu0 0.0
        %v3703 = vand.u32 %v1218, 4294901760
        %v3704 = vsub.f32 %v1218, %v3703
        %v3705 = vand.u32 %v3704, 4294901760
        %3706 = vmatpush2.xpose.msra.mxu0 %v3705
        %3707 = vmatprep.subr.mxu0 0.0
        %v3708 = vand.u32 %v1215, 4294901760
        %v3709 = vsub.f32 %v1215, %v3708
        %v3710 = vand.u32 %v3709, 4294901760
        %3711 = vmatpush2.xpose.msra.mxu0 %v3710
        %3712 = vmatprep.subr.mxu0 0.0
        %v3713 = vand.u32 %v1212, 4294901760
        %v3714 = vsub.f32 %v1212, %v3713
        %v3715 = vand.u32 %v3714, 4294901760
        %3716 = vmatpush2.xpose.msra.mxu0 %v3715
        %3717 = vmatprep.subr.mxu0 0.0
        %v3718 = vand.u32 %v1209, 4294901760
        %v3719 = vsub.f32 %v1209, %v3718
        %v3720 = vand.u32 %v3719, 4294901760
        %3721 = vmatpush2.xpose.msra.mxu0 %v3720
        %3722 = vmatprep.subr.mxu0 0.0
        %v3723 = vand.u32 %v1206, 4294901760
        %v3724 = vsub.f32 %v1206, %v3723
        %v3725 = vand.u32 %v3724, 4294901760
        %3726 = vmatpush2.xpose.msra.mxu0 %v3725
        %3727 = vmatprep.subr.mxu0 0.0
        %v3728 = vand.u32 %v1203, 4294901760
        %v3729 = vsub.f32 %v1203, %v3728
        %v3730 = vand.u32 %v3729, 4294901760
        %3731 = vmatpush2.xpose.msra.mxu0 %v3730
        %3732 = vmatprep.subr.mxu0 0.0
        %v3733 = vand.u32 %v1200, 4294901760
        %v3734 = vsub.f32 %v1200, %v3733
        %v3735 = vand.u32 %v3734, 4294901760
        %3736 = vmatpush2.xpose.msra.mxu0 %v3735
        %3737 = vmatprep.subr.mxu0 0.0
        %v3738 = vand.u32 %v1197, 4294901760
        %v3739 = vsub.f32 %v1197, %v3738
        %v3740 = vand.u32 %v3739, 4294901760
        %3741 = vmatpush2.xpose.msra.mxu0 %v3740
        %3742 = vmatprep.subr.mxu0 0.0
        %v3743 = vand.u32 %v1194, 4294901760
        %v3744 = vsub.f32 %v1194, %v3743
        %v3745 = vand.u32 %v3744, 4294901760
        %3746 = vmatpush2.xpose.msra.mxu0 %v3745
        %3747 = vmatprep.mubr.f32.mxu0 0.0
        %v3748 = vand.u32 %v3002, 4294901760
        %3749 = vmatmul.mubr.f32.gmra.mxu0 %v3748
        %v3750 = vpop.f32.mrf.mxu0
        %v3751 = vadd.f32 %v3583, %v3750
        %v3752 = vpop.f32.mrf.mxu0
        %v3753 = vadd.f32 %v3585, %v3752
        %3754 = vdwg.mxu0
        %3755 = vmatprep.subr.mxu0 0.0
        %v3756 = vand.u32 %v1191, 4294901760
        %3757 = vmatpush1.xpose.msra.mxu0 %v3756
        %3758 = vmatprep.subr.mxu0 0.0
        %v3759 = vand.u32 %v1188, 4294901760
        %3760 = vmatpush1.xpose.msra.mxu0 %v3759
        %3761 = vmatprep.subr.mxu0 0.0
        %v3762 = vand.u32 %v1185, 4294901760
        %3763 = vmatpush1.xpose.msra.mxu0 %v3762
        %3764 = vmatprep.subr.mxu0 0.0
        %v3765 = vand.u32 %v1182, 4294901760
        %3766 = vmatpush1.xpose.msra.mxu0 %v3765
        %3767 = vmatprep.subr.mxu0 0.0
        %v3768 = vand.u32 %v1179, 4294901760
        %3769 = vmatpush1.xpose.msra.mxu0 %v3768
        %3770 = vmatprep.subr.mxu0 0.0
        %v3771 = vand.u32 %v1176, 4294901760
        %3772 = vmatpush1.xpose.msra.mxu0 %v3771
        %3773 = vmatprep.subr.mxu0 0.0
        %v3774 = vand.u32 %v1173, 4294901760
        %3775 = vmatpush1.xpose.msra.mxu0 %v3774
        %3776 = vmatprep.subr.mxu0 0.0
        %v3777 = vand.u32 %v1170, 4294901760
        %3778 = vmatpush1.xpose.msra.mxu0 %v3777
        %3779 = vmatprep.subr.mxu0 0.0
        %v3780 = vand.u32 %v1167, 4294901760
        %3781 = vmatpush1.xpose.msra.mxu0 %v3780
        %3782 = vmatprep.subr.mxu0 0.0
        %v3783 = vand.u32 %v1164, 4294901760
        %3784 = vmatpush1.xpose.msra.mxu0 %v3783
        %3785 = vmatprep.subr.mxu0 0.0
        %v3786 = vand.u32 %v1161, 4294901760
        %3787 = vmatpush1.xpose.msra.mxu0 %v3786
        %3788 = vmatprep.subr.mxu0 0.0
        %v3789 = vand.u32 %v1158, 4294901760
        %3790 = vmatpush1.xpose.msra.mxu0 %v3789
        %3791 = vmatprep.subr.mxu0 0.0
        %v3792 = vand.u32 %v1155, 4294901760
        %3793 = vmatpush1.xpose.msra.mxu0 %v3792
        %3794 = vmatprep.subr.mxu0 0.0
        %v3795 = vand.u32 %v1152, 4294901760
        %3796 = vmatpush1.xpose.msra.mxu0 %v3795
        %3797 = vmatprep.subr.mxu0 0.0
        %v3798 = vand.u32 %v1149, 4294901760
        %3799 = vmatpush1.xpose.msra.mxu0 %v3798
        %3800 = vmatprep.subr.mxu0 0.0
        %v3801 = vand.u32 %v1146, 4294901760
        %3802 = vmatpush1.xpose.msra.mxu0 %v3801
        %3803 = vmatprep.subr.mxu0 0.0
        %v3804 = vand.u32 %v1239, 4294901760
        %3805 = vmatpush2.xpose.msra.mxu0 %v3804
        %3806 = vmatprep.subr.mxu0 0.0
        %v3807 = vand.u32 %v1236, 4294901760
        %3808 = vmatpush2.xpose.msra.mxu0 %v3807
        %3809 = vmatprep.subr.mxu0 0.0
        %v3810 = vand.u32 %v1233, 4294901760
        %3811 = vmatpush2.xpose.msra.mxu0 %v3810
        %3812 = vmatprep.subr.mxu0 0.0
        %v3813 = vand.u32 %v1230, 4294901760
        %3814 = vmatpush2.xpose.msra.mxu0 %v3813
        %3815 = vmatprep.subr.mxu0 0.0
        %v3816 = vand.u32 %v1227, 4294901760
        %3817 = vmatpush2.xpose.msra.mxu0 %v3816
        %3818 = vmatprep.subr.mxu0 0.0
        %v3819 = vand.u32 %v1224, 4294901760
        %3820 = vmatpush2.xpose.msra.mxu0 %v3819
        %3821 = vmatprep.subr.mxu0 0.0
        %v3822 = vand.u32 %v1221, 4294901760
        %3823 = vmatpush2.xpose.msra.mxu0 %v3822
        %3824 = vmatprep.subr.mxu0 0.0
        %v3825 = vand.u32 %v1218, 4294901760
        %3826 = vmatpush2.xpose.msra.mxu0 %v3825
        %3827 = vmatprep.subr.mxu0 0.0
        %v3828 = vand.u32 %v1215, 4294901760
        %3829 = vmatpush2.xpose.msra.mxu0 %v3828
        %3830 = vmatprep.subr.mxu0 0.0
        %v3831 = vand.u32 %v1212, 4294901760
        %3832 = vmatpush2.xpose.msra.mxu0 %v3831
        %3833 = vmatprep.subr.mxu0 0.0
        %v3834 = vand.u32 %v1209, 4294901760
        %3835 = vmatpush2.xpose.msra.mxu0 %v3834
        %3836 = vmatprep.subr.mxu0 0.0
        %v3837 = vand.u32 %v1206, 4294901760
        %3838 = vmatpush2.xpose.msra.mxu0 %v3837
        %3839 = vmatprep.subr.mxu0 0.0
        %v3840 = vand.u32 %v1203, 4294901760
        %3841 = vmatpush2.xpose.msra.mxu0 %v3840
        %3842 = vmatprep.subr.mxu0 0.0
        %v3843 = vand.u32 %v1200, 4294901760
        %3844 = vmatpush2.xpose.msra.mxu0 %v3843
        %3845 = vmatprep.subr.mxu0 0.0
        %v3846 = vand.u32 %v1197, 4294901760
        %3847 = vmatpush2.xpose.msra.mxu0 %v3846
        %3848 = vmatprep.subr.mxu0 0.0
        %v3849 = vand.u32 %v1194, 4294901760
        %3850 = vmatpush2.xpose.msra.mxu0 %v3849
        %3851 = vmatprep.mubr.f32.mxu0 0.0
        %v3852 = vand.u32 %v3002, 4294901760
        %3853 = vmatmul.mubr.f32.gmra.mxu0 %v3852
        %v3854 = vpop.f32.mrf.mxu0
        %v3855 = vadd.f32 %v3751, %v3854
        %v3856 = vpop.f32.mrf.mxu0
        %v3857 = vadd.f32 %v3753, %v3856
        %3858 = vdwg.mxu0
        %v3859 = vld [vmem:[%s1] sm:$0xff]
        %v3860 = vld [vmem:[%s2] sm:$0xff]
        %v3861 = vlaneseq
        %v3862 = vshrl.u32 %v3861, 7
        %v3863 = vsub.s32 0, %v3862
        %v3864 = vrot.slane %v3855, %v3863
        %v3865 = vlaneseq
        %v3866 = vshrl.u32 %v3865, 7
        %v3867 = vsub.s32 0, %v3866
        %v3868 = vrot.slane %v3857, %v3867
        %v3871 = vcombine.low %v3864, %v3868
        %v3873 = vmul.f32 %v2108, %v3871
        %v3874 = vmul.f32 %v3873, %v3859
        %v3875 = vadd.f32 %v3874, %v3860
        %3876 = vst [vmem:[%s215] sm:$0xff] %v3875
        %s3877 = sand.u32 %s131, 1
        %s3878 = scalar_lea.sflag [#allocation3], %s3877
        %s3879 = sand.u32 %s131, 1
        %s3880 = smul.addr %s3879, 8
        %s3881 = scalar_lea.vmem [#allocation2], %s3880
        // Predicated region
        $region37: #{tpu_custom_call.1} parent=35 // pred_check
          %p3882 = pneg %p141
        $region38: #{tpu_custom_call.1} parent=35 // pred_check_branch
          %3884 = sbr.rel (%p3882) target = $region40
        $region39: #{tpu_custom_call.1} parent=35 // pred_region
          %s3885 = smul.u32 2, %s23
          %s3887 = ssub.s32 128, 128
          %3888 = vsyncadd %s3878, %s3887
          %s3889 = smul.addr %s22, 2
          %s3890 = sadd.s32 %s3885, %s3889
          %s3891 = smul.addr %s3890, 64
          %s3892 = scalar_lea.hbm %s4, %s3891
          %s3894 = sshll.u32 %s3881, 4
          %s3895 = int_to_ptr.vmem [resolvable:$true] %s3894
          %3897 = dma.vmem_to_hbm [thread:$0]  %s3895, 128, %s3892, %s3878
        $region40: #{tpu_custom_call.1} parent=35 // pred_fallthru
          _
      $region36: #{tpu_custom_call.1} parent=5 // pred_fallthru
        _
      %p3898 = scmp.le.s32.totalorder 2, %s13
      // Predicated region
      $region41: #{tpu_custom_call.1} parent=5 // pred_check
        %p3899 = pneg %p3898
      $region42: #{tpu_custom_call.1} parent=5 // pred_check_branch
        %3901 = sbr.rel (%p3899) target = $region44
      $region43: #{tpu_custom_call.1} parent=5 // pred_region
        %s3902 = ssub.s32 %s13, 2
        // Predicated region
        $region45: #{tpu_custom_call.1} parent=43 // pred_check
          %p3903 = pneg %p147
        $region46: #{tpu_custom_call.1} parent=43 // pred_check_branch
          %3905 = sbr.rel (%p3903) target = $region48
        $region47: #{tpu_custom_call.1} parent=43 // pred_region
          %s3906 = sand.u32 %s132, 1
          %s3907 = scalar_lea.sflag [#allocation3], %s3906
          %s3908 = sand.u32 %s132, 1
          %s3909 = smul.addr %s3908, 8
          %s3910 = scalar_lea.vmem [#allocation2], %s3909
          %3911 = dma.done %s3907, 128
        $region48: #{tpu_custom_call.1} parent=43 // pred_fallthru
          _
      $region44: #{tpu_custom_call.1} parent=5 // pred_fallthru
        _
    $region6: #{tpu_custom_call.1} parent=1 // loop_footer
      %s17 = sadd.s32 1, %s13
    $region7: #{tpu_custom_call.1} parent=1 // loop_footer_branch
      %12 = sbr.rel target = $region3
    $region8: #{tpu_custom_call.1} parent=1 // loop_exit
      _
    %3912 = vsyncpa [#allocation3], 1
    %s3913 = scalar_lea.sflag [#allocation3], 1
    %3914 = vsyncpa %s3913, 1

</llo_original>
